<compile_context>
chip_gen: v5e
topology: v5e:2x2
jax: 0.10.0
libtpu: 0.0.40
codegen_flags: <defaults>
</compile_context>

<pallas_src>
import jax
import jax.numpy as jnp
from jax.experimental import pallas as pl
from jax.experimental.pallas import tpu as pltpu

# ---- module hyper-parameters (fixed by the PyTorch module) ----
N_F = 150                   # leading "f" features
N_PATCH = 49                # image patches
IMG_DIM = 2048              # per-patch feature dim (hardcoded by fc_img_feat)
IMG_OUT = 50                # fc_img_feat output dim (hardcoded)
EMBED = 56                  # trailing embedding width -> net_arch[0] = 150 + 50 + 56 = 256
IN_DIM = N_F + IMG_OUT + EMBED
HIDDEN = 32                 # net_arch[1]
OUT = 1                     # net_arch[2] == 1 (asserted in __init__)
IMG_FLAT = N_PATCH * IMG_DIM
D_TOTAL = N_F + IMG_FLAT + EMBED

# total f32 bytes of all resident weights/biases
WEIGHT_BYTES = 4 * (IMG_DIM * IMG_OUT + IMG_OUT
                    + N_F * HIDDEN + IMG_OUT * HIDDEN + EMBED * HIDDEN + HIDDEN
                    + HIDDEN * OUT + OUT)


def qnet_kernel(x_ref, w_img_ref, b_img_ref,
                w1_f_ref, w1_img_ref, w1_emb_ref, b1_ref,
                w2_ref, b2_ref,
                out_ref):
    # Patch-sum over the 49 image chunks.  Every chunk starts at lane offset
    # 150 % 128 == 22 (same phase), so the adds are pure VPU work; any relayout
    # is paid at most once on the final (tile_b, 2048) patch_sum before the MXU.
    # Accumulate in f32 so a bf16 x (producer-side narrow image slab) still
    # yields an f32-accurate mean.
    patch_sum = x_ref[:, N_F:N_F + IMG_DIM].astype(jnp.float32)
    for p in range(1, N_PATCH):
        off = N_F + p * IMG_DIM
        patch_sum = patch_sum + x_ref[:, off:off + IMG_DIM].astype(jnp.float32)

    # fc_img_feat: the 1/49 of the mean is folded onto the small (tile_b, 50)
    # output instead of scaling the (tile_b, 2048) intermediate.
    img_feat = (jnp.dot(patch_sum, w_img_ref[...], preferred_element_type=jnp.float32)
                * (1.0 / N_PATCH)
                + b_img_ref[...])                                          # (tile_b, 50)

    # fc1 over the (implicit) concatenation [f, img_feat, embed] as a split matmul.
    f = x_ref[:, 0:N_F].astype(jnp.float32)                               # (tile_b, 150)
    emb = x_ref[:, N_F + IMG_FLAT:D_TOTAL].astype(jnp.float32)            # (tile_b, 56)
    h = (jnp.dot(f, w1_f_ref[...], preferred_element_type=jnp.float32)
         + jnp.dot(img_feat, w1_img_ref[...], preferred_element_type=jnp.float32)
         + jnp.dot(emb, w1_emb_ref[...], preferred_element_type=jnp.float32)
         + b1_ref[...])                                                    # (tile_b, HIDDEN)
    h = jnp.maximum(h, 0.0)                                                # activation_fn = ReLU

    # fc2
    out_ref[...] = (jnp.dot(h, w2_ref[...], preferred_element_type=jnp.float32)
                    + b2_ref[...])                                         # (tile_b, 1)


def _vmem_capacity_bytes():
    """Physical VMEM per core; conservative fallback if the query is unavailable."""
    try:
        return int(pltpu.get_tpu_info().vmem_capacity_bytes)
    except Exception:
        return 64 << 20   # v7x per-TC floor; always safe on v5e/v6e too


def _choose_tile_b(B, max_tile_b, x_itemsize, vmem_cap):
    """Largest batch tile that (a) divides B, (b) is a multiple of 8 (sublane rule),
    (c) keeps the double-buffered x slab under ~75% of VMEM (minus weights), and
    (d) leaves >= 2 grid steps when the batch allows it (v7x megacore sharding)."""
    budget = int(0.75 * vmem_cap) - 2 * WEIGHT_BYTES - (2 << 20)
    cands = [t for t in range(8, min(B, max_tile_b) + 1, 8) if B % t == 0]
    if not cands:
        return B                      # tiny / irregular batch: one full-batch tile
    multi = [t for t in cands if B // t >= 2]
    if multi:
        cands = multi
    fit = [t for t in cands if 2 * t * D_TOTAL * x_itemsize <= budget]
    return max(fit) if fit else min(cands)


def qnet_forward(x, params, *, max_tile_b=64):
    """x: (B, D_TOTAL) float32 (or bf16) raw concatenated observation.
    params stored (in, out) -- transpose PyTorch nn.Linear weights when loading."""
    B, D = x.shape
    assert D == D_TOTAL
    x_itemsize = jnp.dtype(x.dtype).itemsize
    vmem_cap = _vmem_capacity_bytes()
    tile_b = _choose_tile_b(B, max_tile_b, x_itemsize, vmem_cap)
    assert B % tile_b == 0, "pad the batch to a multiple of 8 (or use a tiny batch)"

    w_img, b_img = params["w_img"], params["b_img"]
    w1, b1 = params["w1"], params["b1"]
    w2, b2 = params["w2"], params["b2"]
    # split fc1 weight rows to match the concat ordering [f, img_feat, embed] (tiny copies)
    w1_f = w1[:N_F]
    w1_img = w1[N_F:N_F + IMG_OUT]
    w1_emb = w1[N_F + IMG_OUT:]

    def const_spec(shape):
        # Whole-array block, same block every grid step (kept resident in VMEM).
        # Single-buffer it: double-buffering a constant block just wastes ~450 KB.
        idx = lambda i: (0, 0)
        try:
            return pl.BlockSpec(shape, idx, pipeline_mode=pl.Buffered(1))
        except TypeError:   # older JAX without pipeline_mode on BlockSpec
            return pl.BlockSpec(shape, idx)

    # VMEM budget: double-buffered x slab + weights (assume worst-case double-buffered)
    # + slack; clamp below physical VMEM for the current generation (fixes the old
    # 100 MiB cap that exceeded v7x's 64 MiB).
    x_slab_bytes = tile_b * D_TOTAL * x_itemsize
    need = 2 * x_slab_bytes + 2 * WEIGHT_BYTES + (2 << 20)
    vmem_limit = int(min(max(need, 16 << 20), int(0.9 * vmem_cap)))

    cost = pl.CostEstimate(
        flops=2 * B * (IMG_DIM * IMG_OUT + N_F * HIDDEN + IMG_OUT * HIDDEN
                       + EMBED * HIDDEN + HIDDEN * OUT) + B * (N_PATCH - 1) * IMG_DIM,
        transcendentals=0,
        bytes_accessed=x_itemsize * B * D_TOTAL + WEIGHT_BYTES + 4 * B * OUT,
    )

    return pl.pallas_call(
        qnet_kernel,
        out_shape=jax.ShapeDtypeStruct((B, OUT), jnp.float32),
        grid=(B // tile_b,),
        in_specs=[
            # x is tiled over batch only; the full row is the block, so no wrapper-side
            # column slicing / extra HBM copy is ever needed.
            pl.BlockSpec((tile_b, D_TOTAL), lambda i: (i, 0)),
            const_spec((IMG_DIM, IMG_OUT)),
            const_spec((1, IMG_OUT)),
            const_spec((N_F, HIDDEN)),
            const_spec((IMG_OUT, HIDDEN)),
            const_spec((EMBED, HIDDEN)),
            const_spec((1, HIDDEN)),
            const_spec((HIDDEN, OUT)),
            const_spec((1, OUT)),
        ],
        out_specs=pl.BlockSpec((tile_b, OUT), lambda i: (i, 0)),
        compiler_params=pltpu.CompilerParams(
            dimension_semantics=("parallel",),
            vmem_limit_bytes=vmem_limit),
        cost_estimate=cost,
    )(x, w_img, b_img.reshape(1, IMG_OUT),
      w1_f, w1_img, w1_emb, b1.reshape(1, HIDDEN),
      w2, b2.reshape(1, OUT))


def qnet_reference(x, params):
    f = x[:, :N_F]
    img = x[:, N_F:N_F + IMG_FLAT].reshape(-1, N_PATCH, IMG_DIM)
    emb = x[:, N_F + IMG_FLAT:]
    img_feat = jnp.mean(img, axis=1) @ params["w_img"] + params["b_img"]
    xx = jnp.concatenate([f, img_feat, emb], axis=1)
    h = jnp.maximum(xx @ params["w1"] + params["b1"], 0.0)
    return h @ params["w2"] + params["b2"]


def init_params(key):
    ks = jax.random.split(key, 6)

    def lin(kw, fan_in, fan_out):
        s = 1.0 / jnp.sqrt(fan_in)
        return jax.random.uniform(kw, (fan_in, fan_out), jnp.float32, -s, s)

    return {
        "w_img": lin(ks[0], IMG_DIM, IMG_OUT),
        "b_img": jax.random.uniform(ks[1], (IMG_OUT,), jnp.float32, -0.02, 0.02),
        "w1":    lin(ks[2], IN_DIM, HIDDEN),
        "b1":    jax.random.uniform(ks[3], (HIDDEN,), jnp.float32, -0.1, 0.1),
        "w2":    lin(ks[4], HIDDEN, OUT),
        "b2":    jax.random.uniform(ks[5], (OUT,), jnp.float32, -0.1, 0.1),
    }


if __name__ == "__main__":
    B = 8
    key = jax.random.PRNGKey(0)
    kx, kp = jax.random.split(key)
    x = jax.random.normal(kx, (B, D_TOTAL), dtype=jnp.float32)
    params = init_params(kp)

    out = jax.block_until_ready(qnet_forward(x, params))
    ref = qnet_reference(x, params)

    assert out.shape == (B, OUT)
    assert jnp.allclose(out, ref, atol=2e-3, rtol=1e-3), (out, ref)
    print("KERNEL_OK")
</pallas_src>

<mosaic_0001>
module attributes {stable_mosaic.version = 11 : i64} {
  func.func @qnet_kernel(%arg0: i32, %arg1: memref<8x100558xf32, #tpu.memory_space<vmem>>, %arg2: memref<2048x50xf32, #tpu.memory_space<vmem>>, %arg3: memref<1x50xf32, #tpu.memory_space<vmem>>, %arg4: memref<150x32xf32, #tpu.memory_space<vmem>>, %arg5: memref<50x32xf32, #tpu.memory_space<vmem>>, %arg6: memref<56x32xf32, #tpu.memory_space<vmem>>, %arg7: memref<1x32xf32, #tpu.memory_space<vmem>>, %arg8: memref<32x1xf32, #tpu.memory_space<vmem>>, %arg9: memref<1x1xf32, #tpu.memory_space<vmem>>, %arg10: memref<8x1xf32, #tpu.memory_space<vmem>>) attributes {dimension_semantics = [#tpu.dimension_semantics<parallel>], iteration_bounds = array<i64: 1>, scalar_prefetch = 0 : i64, scratch_operands = 0 : i64, tpu.core_type = #tpu.core_type<tc>, window_params = [{transform_indices = @transform_0, window_bounds = array<i64: 8, 100558>}, {pipeline_mode = #tpu.pipeline_mode<synchronous>, transform_indices = @transform_1, window_bounds = array<i64: 2048, 50>}, {pipeline_mode = #tpu.pipeline_mode<synchronous>, transform_indices = @transform_2, window_bounds = array<i64: 1, 50>}, {pipeline_mode = #tpu.pipeline_mode<synchronous>, transform_indices = @transform_3, window_bounds = array<i64: 150, 32>}, {pipeline_mode = #tpu.pipeline_mode<synchronous>, transform_indices = @transform_4, window_bounds = array<i64: 50, 32>}, {pipeline_mode = #tpu.pipeline_mode<synchronous>, transform_indices = @transform_5, window_bounds = array<i64: 56, 32>}, {pipeline_mode = #tpu.pipeline_mode<synchronous>, transform_indices = @transform_6, window_bounds = array<i64: 1, 32>}, {pipeline_mode = #tpu.pipeline_mode<synchronous>, transform_indices = @transform_7, window_bounds = array<i64: 32, 1>}, {pipeline_mode = #tpu.pipeline_mode<synchronous>, transform_indices = @transform_8, window_bounds = array<i64: 1, 1>}, {transform_indices = @transform_9, window_bounds = array<i64: 8, 1>}]} {
    %c0 = arith.constant 0 : index
    %c150 = arith.constant 150 : index
    %0 = vector.load %arg1[%c0, %c150] : memref<8x100558xf32, #tpu.memory_space<vmem>>, vector<8x2048xf32>
    %c0_0 = arith.constant 0 : index
    %c2198 = arith.constant 2198 : index
    %1 = vector.load %arg1[%c0_0, %c2198] : memref<8x100558xf32, #tpu.memory_space<vmem>>, vector<8x2048xf32>
    %2 = arith.addf %0, %1 : vector<8x2048xf32>
    %c0_1 = arith.constant 0 : index
    %c4246 = arith.constant 4246 : index
    %3 = vector.load %arg1[%c0_1, %c4246] : memref<8x100558xf32, #tpu.memory_space<vmem>>, vector<8x2048xf32>
    %4 = arith.addf %2, %3 : vector<8x2048xf32>
    %c0_2 = arith.constant 0 : index
    %c6294 = arith.constant 6294 : index
    %5 = vector.load %arg1[%c0_2, %c6294] : memref<8x100558xf32, #tpu.memory_space<vmem>>, vector<8x2048xf32>
    %6 = arith.addf %4, %5 : vector<8x2048xf32>
    %c0_3 = arith.constant 0 : index
    %c8342 = arith.constant 8342 : index
    %7 = vector.load %arg1[%c0_3, %c8342] : memref<8x100558xf32, #tpu.memory_space<vmem>>, vector<8x2048xf32>
    %8 = arith.addf %6, %7 : vector<8x2048xf32>
    %c0_4 = arith.constant 0 : index
    %c10390 = arith.constant 10390 : index
    %9 = vector.load %arg1[%c0_4, %c10390] : memref<8x100558xf32, #tpu.memory_space<vmem>>, vector<8x2048xf32>
    %10 = arith.addf %8, %9 : vector<8x2048xf32>
    %c0_5 = arith.constant 0 : index
    %c12438 = arith.constant 12438 : index
    %11 = vector.load %arg1[%c0_5, %c12438] : memref<8x100558xf32, #tpu.memory_space<vmem>>, vector<8x2048xf32>
    %12 = arith.addf %10, %11 : vector<8x2048xf32>
    %c0_6 = arith.constant 0 : index
    %c14486 = arith.constant 14486 : index
    %13 = vector.load %arg1[%c0_6, %c14486] : memref<8x100558xf32, #tpu.memory_space<vmem>>, vector<8x2048xf32>
    %14 = arith.addf %12, %13 : vector<8x2048xf32>
    %c0_7 = arith.constant 0 : index
    %c16534 = arith.constant 16534 : index
    %15 = vector.load %arg1[%c0_7, %c16534] : memref<8x100558xf32, #tpu.memory_space<vmem>>, vector<8x2048xf32>
    %16 = arith.addf %14, %15 : vector<8x2048xf32>
    %c0_8 = arith.constant 0 : index
    %c18582 = arith.constant 18582 : index
    %17 = vector.load %arg1[%c0_8, %c18582] : memref<8x100558xf32, #tpu.memory_space<vmem>>, vector<8x2048xf32>
    %18 = arith.addf %16, %17 : vector<8x2048xf32>
    %c0_9 = arith.constant 0 : index
    %c20630 = arith.constant 20630 : index
    %19 = vector.load %arg1[%c0_9, %c20630] : memref<8x100558xf32, #tpu.memory_space<vmem>>, vector<8x2048xf32>
    %20 = arith.addf %18, %19 : vector<8x2048xf32>
    %c0_10 = arith.constant 0 : index
    %c22678 = arith.constant 22678 : index
    %21 = vector.load %arg1[%c0_10, %c22678] : memref<8x100558xf32, #tpu.memory_space<vmem>>, vector<8x2048xf32>
    %22 = arith.addf %20, %21 : vector<8x2048xf32>
    %c0_11 = arith.constant 0 : index
    %c24726 = arith.constant 24726 : index
    %23 = vector.load %arg1[%c0_11, %c24726] : memref<8x100558xf32, #tpu.memory_space<vmem>>, vector<8x2048xf32>
    %24 = arith.addf %22, %23 : vector<8x2048xf32>
    %c0_12 = arith.constant 0 : index
    %c26774 = arith.constant 26774 : index
    %25 = vector.load %arg1[%c0_12, %c26774] : memref<8x100558xf32, #tpu.memory_space<vmem>>, vector<8x2048xf32>
    %26 = arith.addf %24, %25 : vector<8x2048xf32>
    %c0_13 = arith.constant 0 : index
    %c28822 = arith.constant 28822 : index
    %27 = vector.load %arg1[%c0_13, %c28822] : memref<8x100558xf32, #tpu.memory_space<vmem>>, vector<8x2048xf32>
    %28 = arith.addf %26, %27 : vector<8x2048xf32>
    %c0_14 = arith.constant 0 : index
    %c30870 = arith.constant 30870 : index
    %29 = vector.load %arg1[%c0_14, %c30870] : memref<8x100558xf32, #tpu.memory_space<vmem>>, vector<8x2048xf32>
    %30 = arith.addf %28, %29 : vector<8x2048xf32>
    %c0_15 = arith.constant 0 : index
    %c32918 = arith.constant 32918 : index
    %31 = vector.load %arg1[%c0_15, %c32918] : memref<8x100558xf32, #tpu.memory_space<vmem>>, vector<8x2048xf32>
    %32 = arith.addf %30, %31 : vector<8x2048xf32>
    %c0_16 = arith.constant 0 : index
    %c34966 = arith.constant 34966 : index
    %33 = vector.load %arg1[%c0_16, %c34966] : memref<8x100558xf32, #tpu.memory_space<vmem>>, vector<8x2048xf32>
    %34 = arith.addf %32, %33 : vector<8x2048xf32>
    %c0_17 = arith.constant 0 : index
    %c37014 = arith.constant 37014 : index
    %35 = vector.load %arg1[%c0_17, %c37014] : memref<8x100558xf32, #tpu.memory_space<vmem>>, vector<8x2048xf32>
    %36 = arith.addf %34, %35 : vector<8x2048xf32>
    %c0_18 = arith.constant 0 : index
    %c39062 = arith.constant 39062 : index
    %37 = vector.load %arg1[%c0_18, %c39062] : memref<8x100558xf32, #tpu.memory_space<vmem>>, vector<8x2048xf32>
    %38 = arith.addf %36, %37 : vector<8x2048xf32>
    %c0_19 = arith.constant 0 : index
    %c41110 = arith.constant 41110 : index
    %39 = vector.load %arg1[%c0_19, %c41110] : memref<8x100558xf32, #tpu.memory_space<vmem>>, vector<8x2048xf32>
    %40 = arith.addf %38, %39 : vector<8x2048xf32>
    %c0_20 = arith.constant 0 : index
    %c43158 = arith.constant 43158 : index
    %41 = vector.load %arg1[%c0_20, %c43158] : memref<8x100558xf32, #tpu.memory_space<vmem>>, vector<8x2048xf32>
    %42 = arith.addf %40, %41 : vector<8x2048xf32>
    %c0_21 = arith.constant 0 : index
    %c45206 = arith.constant 45206 : index
    %43 = vector.load %arg1[%c0_21, %c45206] : memref<8x100558xf32, #tpu.memory_space<vmem>>, vector<8x2048xf32>
    %44 = arith.addf %42, %43 : vector<8x2048xf32>
    %c0_22 = arith.constant 0 : index
    %c47254 = arith.constant 47254 : index
    %45 = vector.load %arg1[%c0_22, %c47254] : memref<8x100558xf32, #tpu.memory_space<vmem>>, vector<8x2048xf32>
    %46 = arith.addf %44, %45 : vector<8x2048xf32>
    %c0_23 = arith.constant 0 : index
    %c49302 = arith.constant 49302 : index
    %47 = vector.load %arg1[%c0_23, %c49302] : memref<8x100558xf32, #tpu.memory_space<vmem>>, vector<8x2048xf32>
    %48 = arith.addf %46, %47 : vector<8x2048xf32>
    %c0_24 = arith.constant 0 : index
    %c51350 = arith.constant 51350 : index
    %49 = vector.load %arg1[%c0_24, %c51350] : memref<8x100558xf32, #tpu.memory_space<vmem>>, vector<8x2048xf32>
    %50 = arith.addf %48, %49 : vector<8x2048xf32>
    %c0_25 = arith.constant 0 : index
    %c53398 = arith.constant 53398 : index
    %51 = vector.load %arg1[%c0_25, %c53398] : memref<8x100558xf32, #tpu.memory_space<vmem>>, vector<8x2048xf32>
    %52 = arith.addf %50, %51 : vector<8x2048xf32>
    %c0_26 = arith.constant 0 : index
    %c55446 = arith.constant 55446 : index
    %53 = vector.load %arg1[%c0_26, %c55446] : memref<8x100558xf32, #tpu.memory_space<vmem>>, vector<8x2048xf32>
    %54 = arith.addf %52, %53 : vector<8x2048xf32>
    %c0_27 = arith.constant 0 : index
    %c57494 = arith.constant 57494 : index
    %55 = vector.load %arg1[%c0_27, %c57494] : memref<8x100558xf32, #tpu.memory_space<vmem>>, vector<8x2048xf32>
    %56 = arith.addf %54, %55 : vector<8x2048xf32>
    %c0_28 = arith.constant 0 : index
    %c59542 = arith.constant 59542 : index
    %57 = vector.load %arg1[%c0_28, %c59542] : memref<8x100558xf32, #tpu.memory_space<vmem>>, vector<8x2048xf32>
    %58 = arith.addf %56, %57 : vector<8x2048xf32>
    %c0_29 = arith.constant 0 : index
    %c61590 = arith.constant 61590 : index
    %59 = vector.load %arg1[%c0_29, %c61590] : memref<8x100558xf32, #tpu.memory_space<vmem>>, vector<8x2048xf32>
    %60 = arith.addf %58, %59 : vector<8x2048xf32>
    %c0_30 = arith.constant 0 : index
    %c63638 = arith.constant 63638 : index
    %61 = vector.load %arg1[%c0_30, %c63638] : memref<8x100558xf32, #tpu.memory_space<vmem>>, vector<8x2048xf32>
    %62 = arith.addf %60, %61 : vector<8x2048xf32>
    %c0_31 = arith.constant 0 : index
    %c65686 = arith.constant 65686 : index
    %63 = vector.load %arg1[%c0_31, %c65686] : memref<8x100558xf32, #tpu.memory_space<vmem>>, vector<8x2048xf32>
    %64 = arith.addf %62, %63 : vector<8x2048xf32>
    %c0_32 = arith.constant 0 : index
    %c67734 = arith.constant 67734 : index
    %65 = vector.load %arg1[%c0_32, %c67734] : memref<8x100558xf32, #tpu.memory_space<vmem>>, vector<8x2048xf32>
    %66 = arith.addf %64, %65 : vector<8x2048xf32>
    %c0_33 = arith.constant 0 : index
    %c69782 = arith.constant 69782 : index
    %67 = vector.load %arg1[%c0_33, %c69782] : memref<8x100558xf32, #tpu.memory_space<vmem>>, vector<8x2048xf32>
    %68 = arith.addf %66, %67 : vector<8x2048xf32>
    %c0_34 = arith.constant 0 : index
    %c71830 = arith.constant 71830 : index
    %69 = vector.load %arg1[%c0_34, %c71830] : memref<8x100558xf32, #tpu.memory_space<vmem>>, vector<8x2048xf32>
    %70 = arith.addf %68, %69 : vector<8x2048xf32>
    %c0_35 = arith.constant 0 : index
    %c73878 = arith.constant 73878 : index
    %71 = vector.load %arg1[%c0_35, %c73878] : memref<8x100558xf32, #tpu.memory_space<vmem>>, vector<8x2048xf32>
    %72 = arith.addf %70, %71 : vector<8x2048xf32>
    %c0_36 = arith.constant 0 : index
    %c75926 = arith.constant 75926 : index
    %73 = vector.load %arg1[%c0_36, %c75926] : memref<8x100558xf32, #tpu.memory_space<vmem>>, vector<8x2048xf32>
    %74 = arith.addf %72, %73 : vector<8x2048xf32>
    %c0_37 = arith.constant 0 : index
    %c77974 = arith.constant 77974 : index
    %75 = vector.load %arg1[%c0_37, %c77974] : memref<8x100558xf32, #tpu.memory_space<vmem>>, vector<8x2048xf32>
    %76 = arith.addf %74, %75 : vector<8x2048xf32>
    %c0_38 = arith.constant 0 : index
    %c80022 = arith.constant 80022 : index
    %77 = vector.load %arg1[%c0_38, %c80022] : memref<8x100558xf32, #tpu.memory_space<vmem>>, vector<8x2048xf32>
    %78 = arith.addf %76, %77 : vector<8x2048xf32>
    %c0_39 = arith.constant 0 : index
    %c82070 = arith.constant 82070 : index
    %79 = vector.load %arg1[%c0_39, %c82070] : memref<8x100558xf32, #tpu.memory_space<vmem>>, vector<8x2048xf32>
    %80 = arith.addf %78, %79 : vector<8x2048xf32>
    %c0_40 = arith.constant 0 : index
    %c84118 = arith.constant 84118 : index
    %81 = vector.load %arg1[%c0_40, %c84118] : memref<8x100558xf32, #tpu.memory_space<vmem>>, vector<8x2048xf32>
    %82 = arith.addf %80, %81 : vector<8x2048xf32>
    %c0_41 = arith.constant 0 : index
    %c86166 = arith.constant 86166 : index
    %83 = vector.load %arg1[%c0_41, %c86166] : memref<8x100558xf32, #tpu.memory_space<vmem>>, vector<8x2048xf32>
    %84 = arith.addf %82, %83 : vector<8x2048xf32>
    %c0_42 = arith.constant 0 : index
    %c88214 = arith.constant 88214 : index
    %85 = vector.load %arg1[%c0_42, %c88214] : memref<8x100558xf32, #tpu.memory_space<vmem>>, vector<8x2048xf32>
    %86 = arith.addf %84, %85 : vector<8x2048xf32>
    %c0_43 = arith.constant 0 : index
    %c90262 = arith.constant 90262 : index
    %87 = vector.load %arg1[%c0_43, %c90262] : memref<8x100558xf32, #tpu.memory_space<vmem>>, vector<8x2048xf32>
    %88 = arith.addf %86, %87 : vector<8x2048xf32>
    %c0_44 = arith.constant 0 : index
    %c92310 = arith.constant 92310 : index
    %89 = vector.load %arg1[%c0_44, %c92310] : memref<8x100558xf32, #tpu.memory_space<vmem>>, vector<8x2048xf32>
    %90 = arith.addf %88, %89 : vector<8x2048xf32>
    %c0_45 = arith.constant 0 : index
    %c94358 = arith.constant 94358 : index
    %91 = vector.load %arg1[%c0_45, %c94358] : memref<8x100558xf32, #tpu.memory_space<vmem>>, vector<8x2048xf32>
    %92 = arith.addf %90, %91 : vector<8x2048xf32>
    %c0_46 = arith.constant 0 : index
    %c96406 = arith.constant 96406 : index
    %93 = vector.load %arg1[%c0_46, %c96406] : memref<8x100558xf32, #tpu.memory_space<vmem>>, vector<8x2048xf32>
    %94 = arith.addf %92, %93 : vector<8x2048xf32>
    %c0_47 = arith.constant 0 : index
    %c98454 = arith.constant 98454 : index
    %95 = vector.load %arg1[%c0_47, %c98454] : memref<8x100558xf32, #tpu.memory_space<vmem>>, vector<8x2048xf32>
    %96 = arith.addf %94, %95 : vector<8x2048xf32>
    %c0_48 = arith.constant 0 : index
    %c0_49 = arith.constant 0 : index
    %97 = vector.load %arg2[%c0_48, %c0_49] : memref<2048x50xf32, #tpu.memory_space<vmem>>, vector<2048x50xf32>
    %cst = arith.constant dense<0.000000e+00> : vector<8x50xf32>
    %98 = tpu.matmul %96, %97, %cst {dimension_numbers = #tpu.dot_dimension_numbers<[1], [0], [0], [1], [0, 0, 1, 1], [], []>} : vector<8x2048xf32>, vector<2048x50xf32>, vector<8x50xf32> -> vector<8x50xf32>
    %cst_50 = arith.constant 0.0204081628 : f32
    %99 = vector.broadcast %cst_50 : f32 to vector<8x50xf32>
    %100 = arith.mulf %98, %99 : vector<8x50xf32>
    %c0_51 = arith.constant 0 : index
    %c0_52 = arith.constant 0 : index
    %101 = vector.load %arg3[%c0_51, %c0_52] : memref<1x50xf32, #tpu.memory_space<vmem>>, vector<1x50xf32>
    %102 = vector.broadcast %101 : vector<1x50xf32> to vector<8x50xf32>
    %103 = arith.addf %100, %102 : vector<8x50xf32>
    %c0_53 = arith.constant 0 : index
    %c0_54 = arith.constant 0 : index
    %104 = vector.load %arg1[%c0_53, %c0_54] : memref<8x100558xf32, #tpu.memory_space<vmem>>, vector<8x150xf32>
    %c0_55 = arith.constant 0 : index
    %c100502 = arith.constant 100502 : index
    %105 = vector.load %arg1[%c0_55, %c100502] : memref<8x100558xf32, #tpu.memory_space<vmem>>, vector<8x56xf32>
    %c0_56 = arith.constant 0 : index
    %c0_57 = arith.constant 0 : index
    %106 = vector.load %arg4[%c0_56, %c0_57] : memref<150x32xf32, #tpu.memory_space<vmem>>, vector<150x32xf32>
    %cst_58 = arith.constant dense<0.000000e+00> : vector<8x32xf32>
    %107 = tpu.matmul %104, %106, %cst_58 {dimension_numbers = #tpu.dot_dimension_numbers<[1], [0], [0], [1], [0, 0, 1, 1], [], []>} : vector<8x150xf32>, vector<150x32xf32>, vector<8x32xf32> -> vector<8x32xf32>
    %c0_59 = arith.constant 0 : index
    %c0_60 = arith.constant 0 : index
    %108 = vector.load %arg5[%c0_59, %c0_60] : memref<50x32xf32, #tpu.memory_space<vmem>>, vector<50x32xf32>
    %cst_61 = arith.constant dense<0.000000e+00> : vector<8x32xf32>
    %109 = tpu.matmul %103, %108, %cst_61 {dimension_numbers = #tpu.dot_dimension_numbers<[1], [0], [0], [1], [0, 0, 1, 1], [], []>} : vector<8x50xf32>, vector<50x32xf32>, vector<8x32xf32> -> vector<8x32xf32>
    %110 = arith.addf %107, %109 : vector<8x32xf32>
    %c0_62 = arith.constant 0 : index
    %c0_63 = arith.constant 0 : index
    %111 = vector.load %arg6[%c0_62, %c0_63] : memref<56x32xf32, #tpu.memory_space<vmem>>, vector<56x32xf32>
    %cst_64 = arith.constant dense<0.000000e+00> : vector<8x32xf32>
    %112 = tpu.matmul %105, %111, %cst_64 {dimension_numbers = #tpu.dot_dimension_numbers<[1], [0], [0], [1], [0, 0, 1, 1], [], []>} : vector<8x56xf32>, vector<56x32xf32>, vector<8x32xf32> -> vector<8x32xf32>
    %113 = arith.addf %110, %112 : vector<8x32xf32>
    %c0_65 = arith.constant 0 : index
    %c0_66 = arith.constant 0 : index
    %114 = vector.load %arg7[%c0_65, %c0_66] : memref<1x32xf32, #tpu.memory_space<vmem>>, vector<1x32xf32>
    %115 = vector.broadcast %114 : vector<1x32xf32> to vector<8x32xf32>
    %116 = arith.addf %113, %115 : vector<8x32xf32>
    %cst_67 = arith.constant 0.000000e+00 : f32
    %117 = vector.broadcast %cst_67 : f32 to vector<8x32xf32>
    %118 = arith.maximumf %116, %117 : vector<8x32xf32>
    %c0_68 = arith.constant 0 : index
    %c0_69 = arith.constant 0 : index
    %119 = vector.load %arg8[%c0_68, %c0_69] : memref<32x1xf32, #tpu.memory_space<vmem>>, vector<32x1xf32>
    %cst_70 = arith.constant dense<0.000000e+00> : vector<8x1xf32>
    %120 = tpu.matmul %118, %119, %cst_70 {dimension_numbers = #tpu.dot_dimension_numbers<[1], [0], [0], [1], [0, 0, 1, 1], [], []>} : vector<8x32xf32>, vector<32x1xf32>, vector<8x1xf32> -> vector<8x1xf32>
    %c0_71 = arith.constant 0 : index
    %c0_72 = arith.constant 0 : index
    %121 = vector.load %arg9[%c0_71, %c0_72] : memref<1x1xf32, #tpu.memory_space<vmem>>, vector<1x1xf32>
    %122 = vector.broadcast %121 : vector<1x1xf32> to vector<8x1xf32>
    %123 = arith.addf %120, %122 : vector<8x1xf32>
    %c0_73 = arith.constant 0 : index
    %c0_74 = arith.constant 0 : index
    %124 = vector.load %arg10[%c0_73, %c0_74] : memref<8x1xf32, #tpu.memory_space<vmem>>, vector<8x1xf32>
    tpu.vector_store %arg10[%c0_73, %c0_74], %123 {strides = array<i32>} : memref<8x1xf32, #tpu.memory_space<vmem>>, vector<8x1xf32>,
    return
  }
  func.func @transform_0(%arg0: i32) -> (i32, i32) {
    %c0_i32 = arith.constant 0 : i32
    %c0_i32_0 = arith.constant 0 : i32
    return %arg0, %c0_i32 : i32, i32
  }
  func.func @transform_1(%arg0: i32) -> (i32, i32) {
    %c0_i32 = arith.constant 0 : i32
    %c0_i32_0 = arith.constant 0 : i32
    %c0_i32_1 = arith.constant 0 : i32
    return %c0_i32, %c0_i32_0 : i32, i32
  }
  func.func @transform_2(%arg0: i32) -> (i32, i32) {
    %c0_i32 = arith.constant 0 : i32
    %c0_i32_0 = arith.constant 0 : i32
    %c0_i32_1 = arith.constant 0 : i32
    return %c0_i32, %c0_i32_0 : i32, i32
  }
  func.func @transform_3(%arg0: i32) -> (i32, i32) {
    %c0_i32 = arith.constant 0 : i32
    %c0_i32_0 = arith.constant 0 : i32
    %c0_i32_1 = arith.constant 0 : i32
    return %c0_i32, %c0_i32_0 : i32, i32
  }
  func.func @transform_4(%arg0: i32) -> (i32, i32) {
    %c0_i32 = arith.constant 0 : i32
    %c0_i32_0 = arith.constant 0 : i32
    %c0_i32_1 = arith.constant 0 : i32
    return %c0_i32, %c0_i32_0 : i32, i32
  }
  func.func @transform_5(%arg0: i32) -> (i32, i32) {
    %c0_i32 = arith.constant 0 : i32
    %c0_i32_0 = arith.constant 0 : i32
    %c0_i32_1 = arith.constant 0 : i32
    return %c0_i32, %c0_i32_0 : i32, i32
  }
  func.func @transform_6(%arg0: i32) -> (i32, i32) {
    %c0_i32 = arith.constant 0 : i32
    %c0_i32_0 = arith.constant 0 : i32
    %c0_i32_1 = arith.constant 0 : i32
    return %c0_i32, %c0_i32_0 : i32, i32
  }
  func.func @transform_7(%arg0: i32) -> (i32, i32) {
    %c0_i32 = arith.constant 0 : i32
    %c0_i32_0 = arith.constant 0 : i32
    %c0_i32_1 = arith.constant 0 : i32
    return %c0_i32, %c0_i32_0 : i32, i32
  }
  func.func @transform_8(%arg0: i32) -> (i32, i32) {
    %c0_i32 = arith.constant 0 : i32
    %c0_i32_0 = arith.constant 0 : i32
    %c0_i32_1 = arith.constant 0 : i32
    return %c0_i32, %c0_i32_0 : i32, i32
  }
  func.func @transform_9(%arg0: i32) -> (i32, i32) {
    %c0_i32 = arith.constant 0 : i32
    %c0_i32_0 = arith.constant 0 : i32
    return %arg0, %c0_i32 : i32, i32
  }
}

</mosaic_0001>

<llo_original>
// kernel: tpu_custom_call.1
$region0: #{tpu_custom_call.1}
  #allocation0 [shape = 'u32[]', space=smem, size = 0x4, offset = 0x4, fixed_abs, tag = 'smem constant byte address 0x4 - core index']
  #allocation1 [shape = 'u32[72,128]{1,0:T(1,128)}', space=vmem, size = 0x9000, scoped, tag = 'internal scratch']
  #allocation2 [shape = 'f32[1,1]{1,0:T(1,128)S(1)}', space=vmem, size = 0x200, scoped, tag = 'scoped memory for tpu_custom_call.1']
  %s0 = inlined_call_operand.hbm [shape: f32[8,100558], index: 0, kind: input, shape index: {}]
  %s1 = inlined_call_operand.vmem [shape: f32[2048,50], index: 1, kind: input, shape index: {}]
  %s2 = inlined_call_operand.hbm [shape: f32[1,50], index: 2, kind: input, shape index: {}]
  %s3 = inlined_call_operand.vmem [shape: f32[150,32], index: 3, kind: input, shape index: {}]
  %s4 = inlined_call_operand.vmem [shape: f32[50,32], index: 4, kind: input, shape index: {}]
  %s5 = inlined_call_operand.vmem [shape: f32[56,32], index: 5, kind: input, shape index: {}]
  %s6 = inlined_call_operand.hbm [shape: f32[1,32], index: 6, kind: input, shape index: {}]
  %s7 = inlined_call_operand.vmem [shape: f32[32,1], index: 7, kind: input, shape index: {}]
  %s8 = inlined_call_operand.<no memory space> [shape: f32[1,1], index: 8, kind: input, shape index: {}]
  %s9 = inlined_call_operand.vmem [shape: f32[8,1], index: 9, kind: output, shape index: {}]
  %s10 = sld [smem:[#allocation0]]
  $region58: #{tpu_custom_call.1} parent=0
    _
  %s12 = ssub.s32 1, %s10
  %s13 = scalar_select 0, %s12, %s10
  %v14 = vstv %s8
  %15 = vst [vmem:[#allocation2] sm:$0x1] %v14
  $region1: #{tpu_custom_call.1} parent=0
    #allocation3 [shape = 'u8[3219456]{0}', space=vmem, size = 0x312000, scoped, tag = 'input window, operand 0, single buffered']
    #allocation4 [shape = 's32[1]{0}', space=sflag, size = 0x4, scoped, tag = 'scoped memory for tpu_custom_call.1']
    #allocation5 [shape = 'u8[512]{0}', space=vmem, size = 0x400, scoped, tag = 'input window, operand 2, single buffered']
    #allocation6 [shape = 's32[1]{0}', space=sflag, size = 0x4, scoped, tag = 'scoped memory for tpu_custom_call.1']
    #allocation7 [shape = 'u8[512]{0}', space=vmem, size = 0x400, scoped, tag = 'input window, operand 6, single buffered']
    %16 = vsyncpa [#allocation4], 0
    %17 = vsyncpa [#allocation6], 0
    // Predicated region
    $region2: #{tpu_custom_call.1} parent=1 // pred_check
      _
    $region3: #{tpu_custom_call.1} parent=1 // pred_check_branch
      %19 = sbr.rel (0) target = $region5
    $region4: #{tpu_custom_call.1} parent=1 // pred_region
      %21 = vsyncadd [#allocation4], 0
      %s23 = sshll.u32 %s0, 4
      %s24 = int_to_ptr.hbm [resolvable:$true] %s23
      %s25 = sshll.u32 [#allocation3], 4
      %s26 = int_to_ptr.vmem [resolvable:$true] %s25
      %28 = dma.hbm_to_vmem [thread:$0]  %s24, 100608, %s26, [#allocation4]
    $region5: #{tpu_custom_call.1} parent=1 // pred_fallthru
      _
    // Predicated region
    $region6: #{tpu_custom_call.1} parent=1 // pred_check
      _
    $region7: #{tpu_custom_call.1} parent=1 // pred_check_branch
      %30 = sbr.rel (0) target = $region9
    $region8: #{tpu_custom_call.1} parent=1 // pred_region
      _
    $region9: #{tpu_custom_call.1} parent=1 // pred_fallthru
      _
    // Predicated region
    $region10: #{tpu_custom_call.1} parent=1 // pred_check
      _
    $region11: #{tpu_custom_call.1} parent=1 // pred_check_branch
      %32 = sbr.rel (0) target = $region13
    $region12: #{tpu_custom_call.1} parent=1 // pred_region
      %34 = vsyncadd [#allocation6], 0
      %s36 = sshll.u32 %s2, 4
      %s37 = int_to_ptr.hbm [resolvable:$true] %s36
      %s38 = sshll.u32 [#allocation5], 4
      %s39 = int_to_ptr.vmem [resolvable:$true] %s38
      %41 = dma.hbm_to_vmem [thread:$0]  %s37, 16, %s39, [#allocation6]
    $region13: #{tpu_custom_call.1} parent=1 // pred_fallthru
      _
    // Predicated region
    $region14: #{tpu_custom_call.1} parent=1 // pred_check
      _
    $region15: #{tpu_custom_call.1} parent=1 // pred_check_branch
      %43 = sbr.rel (0) target = $region17
    $region16: #{tpu_custom_call.1} parent=1 // pred_region
      _
    $region17: #{tpu_custom_call.1} parent=1 // pred_fallthru
      _
    // Predicated region
    $region18: #{tpu_custom_call.1} parent=1 // pred_check
      _
    $region19: #{tpu_custom_call.1} parent=1 // pred_check_branch
      %45 = sbr.rel (0) target = $region21
    $region20: #{tpu_custom_call.1} parent=1 // pred_region
      _
    $region21: #{tpu_custom_call.1} parent=1 // pred_fallthru
      _
    // Predicated region
    $region22: #{tpu_custom_call.1} parent=1 // pred_check
      _
    $region23: #{tpu_custom_call.1} parent=1 // pred_check_branch
      %47 = sbr.rel (0) target = $region25
    $region24: #{tpu_custom_call.1} parent=1 // pred_region
      _
    $region25: #{tpu_custom_call.1} parent=1 // pred_fallthru
      _
    // Predicated region
    $region26: #{tpu_custom_call.1} parent=1 // pred_check
      _
    $region27: #{tpu_custom_call.1} parent=1 // pred_check_branch
      %49 = sbr.rel (0) target = $region29
    $region28: #{tpu_custom_call.1} parent=1 // pred_region
      %51 = vsyncadd [#allocation6], 0
      %s53 = sshll.u32 %s6, 4
      %s54 = int_to_ptr.hbm [resolvable:$true] %s53
      %s55 = sshll.u32 [#allocation7], 4
      %s56 = int_to_ptr.vmem [resolvable:$true] %s55
      %58 = dma.hbm_to_vmem [thread:$0]  %s54, 16, %s56, [#allocation6]
    $region29: #{tpu_custom_call.1} parent=1 // pred_fallthru
      _
    // Predicated region
    $region30: #{tpu_custom_call.1} parent=1 // pred_check
      _
    $region31: #{tpu_custom_call.1} parent=1 // pred_check_branch
      %60 = sbr.rel (0) target = $region33
    $region32: #{tpu_custom_call.1} parent=1 // pred_region
      _
    $region33: #{tpu_custom_call.1} parent=1 // pred_fallthru
      _
    // Predicated region
    $region34: #{tpu_custom_call.1} parent=1 // pred_check
      _
    $region35: #{tpu_custom_call.1} parent=1 // pred_check_branch
      %62 = sbr.rel (0) target = $region37
    $region36: #{tpu_custom_call.1} parent=1 // pred_region
      _
    $region37: #{tpu_custom_call.1} parent=1 // pred_fallthru
      _
    // Predicated region
    $region38: #{tpu_custom_call.1} parent=1 // pred_check
      _
    $region39: #{tpu_custom_call.1} parent=1 // pred_check_branch
      %64 = sbr.rel (0) target = $region41
    $region40: #{tpu_custom_call.1} parent=1 // pred_region
      %66 = dma.done [#allocation4], 100608
    $region41: #{tpu_custom_call.1} parent=1 // pred_fallthru
      _
    // Predicated region
    $region42: #{tpu_custom_call.1} parent=1 // pred_check
      _
    $region43: #{tpu_custom_call.1} parent=1 // pred_check_branch
      %68 = sbr.rel (0) target = $region45
    $region44: #{tpu_custom_call.1} parent=1 // pred_region
      %70 = dma.done [#allocation6], 16
    $region45: #{tpu_custom_call.1} parent=1 // pred_fallthru
      _
    // Predicated region
    $region46: #{tpu_custom_call.1} parent=1 // pred_check
      _
    $region47: #{tpu_custom_call.1} parent=1 // pred_check_branch
      %72 = sbr.rel (0) target = $region49
    $region48: #{tpu_custom_call.1} parent=1 // pred_region
      %74 = dma.done [#allocation6], 16
    $region49: #{tpu_custom_call.1} parent=1 // pred_fallthru
      _
    %v75 = vld [vmem:[#allocation3 + $0x8] sm:$0xff]
    %v76 = vld [vmem:[#allocation3 + $0x10] sm:$0xff]
    %v77 = vld [vmem:[#allocation3 + $0x18] sm:$0xff]
    %v78 = vld [vmem:[#allocation3 + $0x20] sm:$0xff]
    %v79 = vld [vmem:[#allocation3 + $0x28] sm:$0xff]
    %v80 = vld [vmem:[#allocation3 + $0x30] sm:$0xff]
    %v81 = vld [vmem:[#allocation3 + $0x38] sm:$0xff]
    %v82 = vld [vmem:[#allocation3 + $0x40] sm:$0xff]
    %v83 = vld [vmem:[#allocation3 + $0x48] sm:$0xff]
    %v84 = vld [vmem:[#allocation3 + $0x50] sm:$0xff]
    %v85 = vld [vmem:[#allocation3 + $0x58] sm:$0xff]
    %v86 = vld [vmem:[#allocation3 + $0x60] sm:$0xff]
    %v87 = vld [vmem:[#allocation3 + $0x68] sm:$0xff]
    %v88 = vld [vmem:[#allocation3 + $0x70] sm:$0xff]
    %v89 = vld [vmem:[#allocation3 + $0x78] sm:$0xff]
    %v90 = vld [vmem:[#allocation3 + $0x80] sm:$0xff]
    %v91 = vld [vmem:[#allocation3 + $0x88] sm:$0xff]
    %v92 = vld [vmem:[#allocation3 + $0x90] sm:$0xff]
    %v93 = vld [vmem:[#allocation3 + $0x98] sm:$0xff]
    %v94 = vld [vmem:[#allocation3 + $0xa0] sm:$0xff]
    %v95 = vld [vmem:[#allocation3 + $0xa8] sm:$0xff]
    %v96 = vld [vmem:[#allocation3 + $0xb0] sm:$0xff]
    %v97 = vld [vmem:[#allocation3 + $0xb8] sm:$0xff]
    %v98 = vld [vmem:[#allocation3 + $0xc0] sm:$0xff]
    %v99 = vld [vmem:[#allocation3 + $0xc8] sm:$0xff]
    %v100 = vld [vmem:[#allocation3 + $0xd0] sm:$0xff]
    %v101 = vld [vmem:[#allocation3 + $0xd8] sm:$0xff]
    %v102 = vld [vmem:[#allocation3 + $0xe0] sm:$0xff]
    %v103 = vld [vmem:[#allocation3 + $0xe8] sm:$0xff]
    %v104 = vld [vmem:[#allocation3 + $0xf0] sm:$0xff]
    %v105 = vld [vmem:[#allocation3 + $0xf8] sm:$0xff]
    %v106 = vld [vmem:[#allocation3 + $0x100] sm:$0xff]
    %v107 = vld [vmem:[#allocation3 + $0x108] sm:$0xff]
    %v108 = vadd.f32 %v75, %v91
    %v109 = vadd.f32 %v76, %v92
    %v110 = vadd.f32 %v77, %v93
    %v111 = vadd.f32 %v78, %v94
    %v112 = vadd.f32 %v79, %v95
    %v113 = vadd.f32 %v80, %v96
    %v114 = vadd.f32 %v81, %v97
    %v115 = vadd.f32 %v82, %v98
    %v116 = vadd.f32 %v83, %v99
    %v117 = vadd.f32 %v84, %v100
    %v118 = vadd.f32 %v85, %v101
    %v119 = vadd.f32 %v86, %v102
    %v120 = vadd.f32 %v87, %v103
    %v121 = vadd.f32 %v88, %v104
    %v122 = vadd.f32 %v89, %v105
    %v123 = vadd.f32 %v90, %v106
    %v124 = vadd.f32 %v91, %v107
    %v125 = vld [vmem:[#allocation3 + $0x110] sm:$0xff]
    %v126 = vld [vmem:[#allocation3 + $0x118] sm:$0xff]
    %v127 = vld [vmem:[#allocation3 + $0x120] sm:$0xff]
    %v128 = vld [vmem:[#allocation3 + $0x128] sm:$0xff]
    %v129 = vld [vmem:[#allocation3 + $0x130] sm:$0xff]
    %v130 = vld [vmem:[#allocation3 + $0x138] sm:$0xff]
    %v131 = vld [vmem:[#allocation3 + $0x140] sm:$0xff]
    %v132 = vld [vmem:[#allocation3 + $0x148] sm:$0xff]
    %v133 = vld [vmem:[#allocation3 + $0x150] sm:$0xff]
    %v134 = vld [vmem:[#allocation3 + $0x158] sm:$0xff]
    %v135 = vld [vmem:[#allocation3 + $0x160] sm:$0xff]
    %v136 = vld [vmem:[#allocation3 + $0x168] sm:$0xff]
    %v137 = vld [vmem:[#allocation3 + $0x170] sm:$0xff]
    %v138 = vld [vmem:[#allocation3 + $0x178] sm:$0xff]
    %v139 = vld [vmem:[#allocation3 + $0x180] sm:$0xff]
    %v140 = vld [vmem:[#allocation3 + $0x188] sm:$0xff]
    %v141 = vadd.f32 %v108, %v107
    %v142 = vadd.f32 %v109, %v125
    %v143 = vadd.f32 %v110, %v126
    %v144 = vadd.f32 %v111, %v127
    %v145 = vadd.f32 %v112, %v128
    %v146 = vadd.f32 %v113, %v129
    %v147 = vadd.f32 %v114, %v130
    %v148 = vadd.f32 %v115, %v131
    %v149 = vadd.f32 %v116, %v132
    %v150 = vadd.f32 %v117, %v133
    %v151 = vadd.f32 %v118, %v134
    %v152 = vadd.f32 %v119, %v135
    %v153 = vadd.f32 %v120, %v136
    %v154 = vadd.f32 %v121, %v137
    %v155 = vadd.f32 %v122, %v138
    %v156 = vadd.f32 %v123, %v139
    %v157 = vadd.f32 %v124, %v140
    %v158 = vld [vmem:[#allocation3 + $0x190] sm:$0xff]
    %v159 = vld [vmem:[#allocation3 + $0x198] sm:$0xff]
    %v160 = vld [vmem:[#allocation3 + $0x1a0] sm:$0xff]
    %v161 = vld [vmem:[#allocation3 + $0x1a8] sm:$0xff]
    %v162 = vld [vmem:[#allocation3 + $0x1b0] sm:$0xff]
    %v163 = vld [vmem:[#allocation3 + $0x1b8] sm:$0xff]
    %v164 = vld [vmem:[#allocation3 + $0x1c0] sm:$0xff]
    %v165 = vld [vmem:[#allocation3 + $0x1c8] sm:$0xff]
    %v166 = vld [vmem:[#allocation3 + $0x1d0] sm:$0xff]
    %v167 = vld [vmem:[#allocation3 + $0x1d8] sm:$0xff]
    %v168 = vld [vmem:[#allocation3 + $0x1e0] sm:$0xff]
    %v169 = vld [vmem:[#allocation3 + $0x1e8] sm:$0xff]
    %v170 = vld [vmem:[#allocation3 + $0x1f0] sm:$0xff]
    %v171 = vld [vmem:[#allocation3 + $0x1f8] sm:$0xff]
    %v172 = vld [vmem:[#allocation3 + $0x200] sm:$0xff]
    %v173 = vld [vmem:[#allocation3 + $0x208] sm:$0xff]
    %v174 = vadd.f32 %v141, %v140
    %v175 = vadd.f32 %v142, %v158
    %v176 = vadd.f32 %v143, %v159
    %v177 = vadd.f32 %v144, %v160
    %v178 = vadd.f32 %v145, %v161
    %v179 = vadd.f32 %v146, %v162
    %v180 = vadd.f32 %v147, %v163
    %v181 = vadd.f32 %v148, %v164
    %v182 = vadd.f32 %v149, %v165
    %v183 = vadd.f32 %v150, %v166
    %v184 = vadd.f32 %v151, %v167
    %v185 = vadd.f32 %v152, %v168
    %v186 = vadd.f32 %v153, %v169
    %v187 = vadd.f32 %v154, %v170
    %v188 = vadd.f32 %v155, %v171
    %v189 = vadd.f32 %v156, %v172
    %v190 = vadd.f32 %v157, %v173
    %v191 = vld [vmem:[#allocation3 + $0x210] sm:$0xff]
    %v192 = vld [vmem:[#allocation3 + $0x218] sm:$0xff]
    %v193 = vld [vmem:[#allocation3 + $0x220] sm:$0xff]
    %v194 = vld [vmem:[#allocation3 + $0x228] sm:$0xff]
    %v195 = vld [vmem:[#allocation3 + $0x230] sm:$0xff]
    %v196 = vld [vmem:[#allocation3 + $0x238] sm:$0xff]
    %v197 = vld [vmem:[#allocation3 + $0x240] sm:$0xff]
    %v198 = vld [vmem:[#allocation3 + $0x248] sm:$0xff]
    %v199 = vld [vmem:[#allocation3 + $0x250] sm:$0xff]
    %v200 = vld [vmem:[#allocation3 + $0x258] sm:$0xff]
    %v201 = vld [vmem:[#allocation3 + $0x260] sm:$0xff]
    %v202 = vld [vmem:[#allocation3 + $0x268] sm:$0xff]
    %v203 = vld [vmem:[#allocation3 + $0x270] sm:$0xff]
    %v204 = vld [vmem:[#allocation3 + $0x278] sm:$0xff]
    %v205 = vld [vmem:[#allocation3 + $0x280] sm:$0xff]
    %v206 = vld [vmem:[#allocation3 + $0x288] sm:$0xff]
    %v207 = vadd.f32 %v174, %v173
    %v208 = vadd.f32 %v175, %v191
    %v209 = vadd.f32 %v176, %v192
    %v210 = vadd.f32 %v177, %v193
    %v211 = vadd.f32 %v178, %v194
    %v212 = vadd.f32 %v179, %v195
    %v213 = vadd.f32 %v180, %v196
    %v214 = vadd.f32 %v181, %v197
    %v215 = vadd.f32 %v182, %v198
    %v216 = vadd.f32 %v183, %v199
    %v217 = vadd.f32 %v184, %v200
    %v218 = vadd.f32 %v185, %v201
    %v219 = vadd.f32 %v186, %v202
    %v220 = vadd.f32 %v187, %v203
    %v221 = vadd.f32 %v188, %v204
    %v222 = vadd.f32 %v189, %v205
    %v223 = vadd.f32 %v190, %v206
    %v224 = vld [vmem:[#allocation3 + $0x290] sm:$0xff]
    %v225 = vld [vmem:[#allocation3 + $0x298] sm:$0xff]
    %v226 = vld [vmem:[#allocation3 + $0x2a0] sm:$0xff]
    %v227 = vld [vmem:[#allocation3 + $0x2a8] sm:$0xff]
    %v228 = vld [vmem:[#allocation3 + $0x2b0] sm:$0xff]
    %v229 = vld [vmem:[#allocation3 + $0x2b8] sm:$0xff]
    %v230 = vld [vmem:[#allocation3 + $0x2c0] sm:$0xff]
    %v231 = vld [vmem:[#allocation3 + $0x2c8] sm:$0xff]
    %v232 = vld [vmem:[#allocation3 + $0x2d0] sm:$0xff]
    %v233 = vld [vmem:[#allocation3 + $0x2d8] sm:$0xff]
    %v234 = vld [vmem:[#allocation3 + $0x2e0] sm:$0xff]
    %v235 = vld [vmem:[#allocation3 + $0x2e8] sm:$0xff]
    %v236 = vld [vmem:[#allocation3 + $0x2f0] sm:$0xff]
    %v237 = vld [vmem:[#allocation3 + $0x2f8] sm:$0xff]
    %v238 = vld [vmem:[#allocation3 + $0x300] sm:$0xff]
    %v239 = vld [vmem:[#allocation3 + $0x308] sm:$0xff]
    %v240 = vadd.f32 %v207, %v206
    %v241 = vadd.f32 %v208, %v224
    %v242 = vadd.f32 %v209, %v225
    %v243 = vadd.f32 %v210, %v226
    %v244 = vadd.f32 %v211, %v227
    %v245 = vadd.f32 %v212, %v228
    %v246 = vadd.f32 %v213, %v229
    %v247 = vadd.f32 %v214, %v230
    %v248 = vadd.f32 %v215, %v231
    %v249 = vadd.f32 %v216, %v232
    %v250 = vadd.f32 %v217, %v233
    %v251 = vadd.f32 %v218, %v234
    %v252 = vadd.f32 %v219, %v235
    %v253 = vadd.f32 %v220, %v236
    %v254 = vadd.f32 %v221, %v237
    %v255 = vadd.f32 %v222, %v238
    %v256 = vadd.f32 %v223, %v239
    %v257 = vld [vmem:[#allocation3 + $0x310] sm:$0xff]
    %v258 = vld [vmem:[#allocation3 + $0x318] sm:$0xff]
    %v259 = vld [vmem:[#allocation3 + $0x320] sm:$0xff]
    %v260 = vld [vmem:[#allocation3 + $0x328] sm:$0xff]
    %v261 = vld [vmem:[#allocation3 + $0x330] sm:$0xff]
    %v262 = vld [vmem:[#allocation3 + $0x338] sm:$0xff]
    %v263 = vld [vmem:[#allocation3 + $0x340] sm:$0xff]
    %v264 = vld [vmem:[#allocation3 + $0x348] sm:$0xff]
    %v265 = vld [vmem:[#allocation3 + $0x350] sm:$0xff]
    %v266 = vld [vmem:[#allocation3 + $0x358] sm:$0xff]
    %v267 = vld [vmem:[#allocation3 + $0x360] sm:$0xff]
    %v268 = vld [vmem:[#allocation3 + $0x368] sm:$0xff]
    %v269 = vld [vmem:[#allocation3 + $0x370] sm:$0xff]
    %v270 = vld [vmem:[#allocation3 + $0x378] sm:$0xff]
    %v271 = vld [vmem:[#allocation3 + $0x380] sm:$0xff]
    %v272 = vld [vmem:[#allocation3 + $0x388] sm:$0xff]
    %v273 = vadd.f32 %v240, %v239
    %v274 = vadd.f32 %v241, %v257
    %v275 = vadd.f32 %v242, %v258
    %v276 = vadd.f32 %v243, %v259
    %v277 = vadd.f32 %v244, %v260
    %v278 = vadd.f32 %v245, %v261
    %v279 = vadd.f32 %v246, %v262
    %v280 = vadd.f32 %v247, %v263
    %v281 = vadd.f32 %v248, %v264
    %v282 = vadd.f32 %v249, %v265
    %v283 = vadd.f32 %v250, %v266
    %v284 = vadd.f32 %v251, %v267
    %v285 = vadd.f32 %v252, %v268
    %v286 = vadd.f32 %v253, %v269
    %v287 = vadd.f32 %v254, %v270
    %v288 = vadd.f32 %v255, %v271
    %v289 = vadd.f32 %v256, %v272
    %v290 = vld [vmem:[#allocation3 + $0x390] sm:$0xff]
    %v291 = vld [vmem:[#allocation3 + $0x398] sm:$0xff]
    %v292 = vld [vmem:[#allocation3 + $0x3a0] sm:$0xff]
    %v293 = vld [vmem:[#allocation3 + $0x3a8] sm:$0xff]
    %v294 = vld [vmem:[#allocation3 + $0x3b0] sm:$0xff]
    %v295 = vld [vmem:[#allocation3 + $0x3b8] sm:$0xff]
    %v296 = vld [vmem:[#allocation3 + $0x3c0] sm:$0xff]
    %v297 = vld [vmem:[#allocation3 + $0x3c8] sm:$0xff]
    %v298 = vld [vmem:[#allocation3 + $0x3d0] sm:$0xff]
    %v299 = vld [vmem:[#allocation3 + $0x3d8] sm:$0xff]
    %v300 = vld [vmem:[#allocation3 + $0x3e0] sm:$0xff]
    %v301 = vld [vmem:[#allocation3 + $0x3e8] sm:$0xff]
    %v302 = vld [vmem:[#allocation3 + $0x3f0] sm:$0xff]
    %v303 = vld [vmem:[#allocation3 + $0x3f8] sm:$0xff]
    %v304 = vld [vmem:[#allocation3 + $0x400] sm:$0xff]
    %v305 = vld [vmem:[#allocation3 + $0x408] sm:$0xff]
    %v306 = vadd.f32 %v273, %v272
    %v307 = vadd.f32 %v274, %v290
    %v308 = vadd.f32 %v275, %v291
    %v309 = vadd.f32 %v276, %v292
    %v310 = vadd.f32 %v277, %v293
    %v311 = vadd.f32 %v278, %v294
    %v312 = vadd.f32 %v279, %v295
    %v313 = vadd.f32 %v280, %v296
    %v314 = vadd.f32 %v281, %v297
    %v315 = vadd.f32 %v282, %v298
    %v316 = vadd.f32 %v283, %v299
    %v317 = vadd.f32 %v284, %v300
    %v318 = vadd.f32 %v285, %v301
    %v319 = vadd.f32 %v286, %v302
    %v320 = vadd.f32 %v287, %v303
    %v321 = vadd.f32 %v288, %v304
    %v322 = vadd.f32 %v289, %v305
    %v323 = vld [vmem:[#allocation3 + $0x410] sm:$0xff]
    %v324 = vld [vmem:[#allocation3 + $0x418] sm:$0xff]
    %v325 = vld [vmem:[#allocation3 + $0x420] sm:$0xff]
    %v326 = vld [vmem:[#allocation3 + $0x428] sm:$0xff]
    %v327 = vld [vmem:[#allocation3 + $0x430] sm:$0xff]
    %v328 = vld [vmem:[#allocation3 + $0x438] sm:$0xff]
    %v329 = vld [vmem:[#allocation3 + $0x440] sm:$0xff]
    %v330 = vld [vmem:[#allocation3 + $0x448] sm:$0xff]
    %v331 = vld [vmem:[#allocation3 + $0x450] sm:$0xff]
    %v332 = vld [vmem:[#allocation3 + $0x458] sm:$0xff]
    %v333 = vld [vmem:[#allocation3 + $0x460] sm:$0xff]
    %v334 = vld [vmem:[#allocation3 + $0x468] sm:$0xff]
    %v335 = vld [vmem:[#allocation3 + $0x470] sm:$0xff]
    %v336 = vld [vmem:[#allocation3 + $0x478] sm:$0xff]
    %v337 = vld [vmem:[#allocation3 + $0x480] sm:$0xff]
    %v338 = vld [vmem:[#allocation3 + $0x488] sm:$0xff]
    %v339 = vadd.f32 %v306, %v305
    %v340 = vadd.f32 %v307, %v323
    %v341 = vadd.f32 %v308, %v324
    %v342 = vadd.f32 %v309, %v325
    %v343 = vadd.f32 %v310, %v326
    %v344 = vadd.f32 %v311, %v327
    %v345 = vadd.f32 %v312, %v328
    %v346 = vadd.f32 %v313, %v329
    %v347 = vadd.f32 %v314, %v330
    %v348 = vadd.f32 %v315, %v331
    %v349 = vadd.f32 %v316, %v332
    %v350 = vadd.f32 %v317, %v333
    %v351 = vadd.f32 %v318, %v334
    %v352 = vadd.f32 %v319, %v335
    %v353 = vadd.f32 %v320, %v336
    %v354 = vadd.f32 %v321, %v337
    %v355 = vadd.f32 %v322, %v338
    %v356 = vld [vmem:[#allocation3 + $0x490] sm:$0xff]
    %v357 = vld [vmem:[#allocation3 + $0x498] sm:$0xff]
    %v358 = vld [vmem:[#allocation3 + $0x4a0] sm:$0xff]
    %v359 = vld [vmem:[#allocation3 + $0x4a8] sm:$0xff]
    %v360 = vld [vmem:[#allocation3 + $0x4b0] sm:$0xff]
    %v361 = vld [vmem:[#allocation3 + $0x4b8] sm:$0xff]
    %v362 = vld [vmem:[#allocation3 + $0x4c0] sm:$0xff]
    %v363 = vld [vmem:[#allocation3 + $0x4c8] sm:$0xff]
    %v364 = vld [vmem:[#allocation3 + $0x4d0] sm:$0xff]
    %v365 = vld [vmem:[#allocation3 + $0x4d8] sm:$0xff]
    %v366 = vld [vmem:[#allocation3 + $0x4e0] sm:$0xff]
    %v367 = vld [vmem:[#allocation3 + $0x4e8] sm:$0xff]
    %v368 = vld [vmem:[#allocation3 + $0x4f0] sm:$0xff]
    %v369 = vld [vmem:[#allocation3 + $0x4f8] sm:$0xff]
    %v370 = vld [vmem:[#allocation3 + $0x500] sm:$0xff]
    %v371 = vld [vmem:[#allocation3 + $0x508] sm:$0xff]
    %v372 = vadd.f32 %v339, %v338
    %v373 = vadd.f32 %v340, %v356
    %v374 = vadd.f32 %v341, %v357
    %v375 = vadd.f32 %v342, %v358
    %v376 = vadd.f32 %v343, %v359
    %v377 = vadd.f32 %v344, %v360
    %v378 = vadd.f32 %v345, %v361
    %v379 = vadd.f32 %v346, %v362
    %v380 = vadd.f32 %v347, %v363
    %v381 = vadd.f32 %v348, %v364
    %v382 = vadd.f32 %v349, %v365
    %v383 = vadd.f32 %v350, %v366
    %v384 = vadd.f32 %v351, %v367
    %v385 = vadd.f32 %v352, %v368
    %v386 = vadd.f32 %v353, %v369
    %v387 = vadd.f32 %v354, %v370
    %v388 = vadd.f32 %v355, %v371
    %v389 = vld [vmem:[#allocation3 + $0x510] sm:$0xff]
    %v390 = vld [vmem:[#allocation3 + $0x518] sm:$0xff]
    %v391 = vld [vmem:[#allocation3 + $0x520] sm:$0xff]
    %v392 = vld [vmem:[#allocation3 + $0x528] sm:$0xff]
    %v393 = vld [vmem:[#allocation3 + $0x530] sm:$0xff]
    %v394 = vld [vmem:[#allocation3 + $0x538] sm:$0xff]
    %v395 = vld [vmem:[#allocation3 + $0x540] sm:$0xff]
    %v396 = vld [vmem:[#allocation3 + $0x548] sm:$0xff]
    %v397 = vld [vmem:[#allocation3 + $0x550] sm:$0xff]
    %v398 = vld [vmem:[#allocation3 + $0x558] sm:$0xff]
    %v399 = vld [vmem:[#allocation3 + $0x560] sm:$0xff]
    %v400 = vld [vmem:[#allocation3 + $0x568] sm:$0xff]
    %v401 = vld [vmem:[#allocation3 + $0x570] sm:$0xff]
    %v402 = vld [vmem:[#allocation3 + $0x578] sm:$0xff]
    %v403 = vld [vmem:[#allocation3 + $0x580] sm:$0xff]
    %v404 = vld [vmem:[#allocation3 + $0x588] sm:$0xff]
    %v405 = vadd.f32 %v372, %v371
    %v406 = vadd.f32 %v373, %v389
    %v407 = vadd.f32 %v374, %v390
    %v408 = vadd.f32 %v375, %v391
    %v409 = vadd.f32 %v376, %v392
    %v410 = vadd.f32 %v377, %v393
    %v411 = vadd.f32 %v378, %v394
    %v412 = vadd.f32 %v379, %v395
    %v413 = vadd.f32 %v380, %v396
    %v414 = vadd.f32 %v381, %v397
    %v415 = vadd.f32 %v382, %v398
    %v416 = vadd.f32 %v383, %v399
    %v417 = vadd.f32 %v384, %v400
    %v418 = vadd.f32 %v385, %v401
    %v419 = vadd.f32 %v386, %v402
    %v420 = vadd.f32 %v387, %v403
    %v421 = vadd.f32 %v388, %v404
    %v422 = vld [vmem:[#allocation3 + $0x590] sm:$0xff]
    %v423 = vld [vmem:[#allocation3 + $0x598] sm:$0xff]
    %v424 = vld [vmem:[#allocation3 + $0x5a0] sm:$0xff]
    %v425 = vld [vmem:[#allocation3 + $0x5a8] sm:$0xff]
    %v426 = vld [vmem:[#allocation3 + $0x5b0] sm:$0xff]
    %v427 = vld [vmem:[#allocation3 + $0x5b8] sm:$0xff]
    %v428 = vld [vmem:[#allocation3 + $0x5c0] sm:$0xff]
    %v429 = vld [vmem:[#allocation3 + $0x5c8] sm:$0xff]
    %v430 = vld [vmem:[#allocation3 + $0x5d0] sm:$0xff]
    %v431 = vld [vmem:[#allocation3 + $0x5d8] sm:$0xff]
    %v432 = vld [vmem:[#allocation3 + $0x5e0] sm:$0xff]
    %v433 = vld [vmem:[#allocation3 + $0x5e8] sm:$0xff]
    %v434 = vld [vmem:[#allocation3 + $0x5f0] sm:$0xff]
    %v435 = vld [vmem:[#allocation3 + $0x5f8] sm:$0xff]
    %v436 = vld [vmem:[#allocation3 + $0x600] sm:$0xff]
    %v437 = vld [vmem:[#allocation3 + $0x608] sm:$0xff]
    %v438 = vadd.f32 %v405, %v404
    %v439 = vadd.f32 %v406, %v422
    %v440 = vadd.f32 %v407, %v423
    %v441 = vadd.f32 %v408, %v424
    %v442 = vadd.f32 %v409, %v425
    %v443 = vadd.f32 %v410, %v426
    %v444 = vadd.f32 %v411, %v427
    %v445 = vadd.f32 %v412, %v428
    %v446 = vadd.f32 %v413, %v429
    %v447 = vadd.f32 %v414, %v430
    %v448 = vadd.f32 %v415, %v431
    %v449 = vadd.f32 %v416, %v432
    %v450 = vadd.f32 %v417, %v433
    %v451 = vadd.f32 %v418, %v434
    %v452 = vadd.f32 %v419, %v435
    %v453 = vadd.f32 %v420, %v436
    %v454 = vadd.f32 %v421, %v437
    %v455 = vld [vmem:[#allocation3 + $0x610] sm:$0xff]
    %v456 = vld [vmem:[#allocation3 + $0x618] sm:$0xff]
    %v457 = vld [vmem:[#allocation3 + $0x620] sm:$0xff]
    %v458 = vld [vmem:[#allocation3 + $0x628] sm:$0xff]
    %v459 = vld [vmem:[#allocation3 + $0x630] sm:$0xff]
    %v460 = vld [vmem:[#allocation3 + $0x638] sm:$0xff]
    %v461 = vld [vmem:[#allocation3 + $0x640] sm:$0xff]
    %v462 = vld [vmem:[#allocation3 + $0x648] sm:$0xff]
    %v463 = vld [vmem:[#allocation3 + $0x650] sm:$0xff]
    %v464 = vld [vmem:[#allocation3 + $0x658] sm:$0xff]
    %v465 = vld [vmem:[#allocation3 + $0x660] sm:$0xff]
    %v466 = vld [vmem:[#allocation3 + $0x668] sm:$0xff]
    %v467 = vld [vmem:[#allocation3 + $0x670] sm:$0xff]
    %v468 = vld [vmem:[#allocation3 + $0x678] sm:$0xff]
    %v469 = vld [vmem:[#allocation3 + $0x680] sm:$0xff]
    %v470 = vld [vmem:[#allocation3 + $0x688] sm:$0xff]
    %v471 = vadd.f32 %v438, %v437
    %v472 = vadd.f32 %v439, %v455
    %v473 = vadd.f32 %v440, %v456
    %v474 = vadd.f32 %v441, %v457
    %v475 = vadd.f32 %v442, %v458
    %v476 = vadd.f32 %v443, %v459
    %v477 = vadd.f32 %v444, %v460
    %v478 = vadd.f32 %v445, %v461
    %v479 = vadd.f32 %v446, %v462
    %v480 = vadd.f32 %v447, %v463
    %v481 = vadd.f32 %v448, %v464
    %v482 = vadd.f32 %v449, %v465
    %v483 = vadd.f32 %v450, %v466
    %v484 = vadd.f32 %v451, %v467
    %v485 = vadd.f32 %v452, %v468
    %v486 = vadd.f32 %v453, %v469
    %v487 = vadd.f32 %v454, %v470
    %v488 = vld [vmem:[#allocation3 + $0x690] sm:$0xff]
    %v489 = vld [vmem:[#allocation3 + $0x698] sm:$0xff]
    %v490 = vld [vmem:[#allocation3 + $0x6a0] sm:$0xff]
    %v491 = vld [vmem:[#allocation3 + $0x6a8] sm:$0xff]
    %v492 = vld [vmem:[#allocation3 + $0x6b0] sm:$0xff]
    %v493 = vld [vmem:[#allocation3 + $0x6b8] sm:$0xff]
    %v494 = vld [vmem:[#allocation3 + $0x6c0] sm:$0xff]
    %v495 = vld [vmem:[#allocation3 + $0x6c8] sm:$0xff]
    %v496 = vld [vmem:[#allocation3 + $0x6d0] sm:$0xff]
    %v497 = vld [vmem:[#allocation3 + $0x6d8] sm:$0xff]
    %v498 = vld [vmem:[#allocation3 + $0x6e0] sm:$0xff]
    %v499 = vld [vmem:[#allocation3 + $0x6e8] sm:$0xff]
    %v500 = vld [vmem:[#allocation3 + $0x6f0] sm:$0xff]
    %v501 = vld [vmem:[#allocation3 + $0x6f8] sm:$0xff]
    %v502 = vld [vmem:[#allocation3 + $0x700] sm:$0xff]
    %v503 = vld [vmem:[#allocation3 + $0x708] sm:$0xff]
    %v504 = vadd.f32 %v471, %v470
    %v505 = vadd.f32 %v472, %v488
    %v506 = vadd.f32 %v473, %v489
    %v507 = vadd.f32 %v474, %v490
    %v508 = vadd.f32 %v475, %v491
    %v509 = vadd.f32 %v476, %v492
    %v510 = vadd.f32 %v477, %v493
    %v511 = vadd.f32 %v478, %v494
    %v512 = vadd.f32 %v479, %v495
    %v513 = vadd.f32 %v480, %v496
    %v514 = vadd.f32 %v481, %v497
    %v515 = vadd.f32 %v482, %v498
    %v516 = vadd.f32 %v483, %v499
    %v517 = vadd.f32 %v484, %v500
    %v518 = vadd.f32 %v485, %v501
    %v519 = vadd.f32 %v486, %v502
    %v520 = vadd.f32 %v487, %v503
    %v521 = vld [vmem:[#allocation3 + $0x710] sm:$0xff]
    %v522 = vld [vmem:[#allocation3 + $0x718] sm:$0xff]
    %v523 = vld [vmem:[#allocation3 + $0x720] sm:$0xff]
    %v524 = vld [vmem:[#allocation3 + $0x728] sm:$0xff]
    %v525 = vld [vmem:[#allocation3 + $0x730] sm:$0xff]
    %v526 = vld [vmem:[#allocation3 + $0x738] sm:$0xff]
    %v527 = vld [vmem:[#allocation3 + $0x740] sm:$0xff]
    %v528 = vld [vmem:[#allocation3 + $0x748] sm:$0xff]
    %v529 = vld [vmem:[#allocation3 + $0x750] sm:$0xff]
    %v530 = vld [vmem:[#allocation3 + $0x758] sm:$0xff]
    %v531 = vld [vmem:[#allocation3 + $0x760] sm:$0xff]
    %v532 = vld [vmem:[#allocation3 + $0x768] sm:$0xff]
    %v533 = vld [vmem:[#allocation3 + $0x770] sm:$0xff]
    %v534 = vld [vmem:[#allocation3 + $0x778] sm:$0xff]
    %v535 = vld [vmem:[#allocation3 + $0x780] sm:$0xff]
    %v536 = vld [vmem:[#allocation3 + $0x788] sm:$0xff]
    %v537 = vadd.f32 %v504, %v503
    %v538 = vadd.f32 %v505, %v521
    %v539 = vadd.f32 %v506, %v522
    %v540 = vadd.f32 %v507, %v523
    %v541 = vadd.f32 %v508, %v524
    %v542 = vadd.f32 %v509, %v525
    %v543 = vadd.f32 %v510, %v526
    %v544 = vadd.f32 %v511, %v527
    %v545 = vadd.f32 %v512, %v528
    %v546 = vadd.f32 %v513, %v529
    %v547 = vadd.f32 %v514, %v530
    %v548 = vadd.f32 %v515, %v531
    %v549 = vadd.f32 %v516, %v532
    %v550 = vadd.f32 %v517, %v533
    %v551 = vadd.f32 %v518, %v534
    %v552 = vadd.f32 %v519, %v535
    %v553 = vadd.f32 %v520, %v536
    %v554 = vld [vmem:[#allocation3 + $0x790] sm:$0xff]
    %v555 = vld [vmem:[#allocation3 + $0x798] sm:$0xff]
    %v556 = vld [vmem:[#allocation3 + $0x7a0] sm:$0xff]
    %v557 = vld [vmem:[#allocation3 + $0x7a8] sm:$0xff]
    %v558 = vld [vmem:[#allocation3 + $0x7b0] sm:$0xff]
    %v559 = vld [vmem:[#allocation3 + $0x7b8] sm:$0xff]
    %v560 = vld [vmem:[#allocation3 + $0x7c0] sm:$0xff]
    %v561 = vld [vmem:[#allocation3 + $0x7c8] sm:$0xff]
    %v562 = vld [vmem:[#allocation3 + $0x7d0] sm:$0xff]
    %v563 = vld [vmem:[#allocation3 + $0x7d8] sm:$0xff]
    %v564 = vld [vmem:[#allocation3 + $0x7e0] sm:$0xff]
    %v565 = vld [vmem:[#allocation3 + $0x7e8] sm:$0xff]
    %v566 = vld [vmem:[#allocation3 + $0x7f0] sm:$0xff]
    %v567 = vld [vmem:[#allocation3 + $0x7f8] sm:$0xff]
    %v568 = vld [vmem:[#allocation3 + $0x800] sm:$0xff]
    %v569 = vld [vmem:[#allocation3 + $0x808] sm:$0xff]
    %v570 = vadd.f32 %v537, %v536
    %v571 = vadd.f32 %v538, %v554
    %v572 = vadd.f32 %v539, %v555
    %v573 = vadd.f32 %v540, %v556
    %v574 = vadd.f32 %v541, %v557
    %v575 = vadd.f32 %v542, %v558
    %v576 = vadd.f32 %v543, %v559
    %v577 = vadd.f32 %v544, %v560
    %v578 = vadd.f32 %v545, %v561
    %v579 = vadd.f32 %v546, %v562
    %v580 = vadd.f32 %v547, %v563
    %v581 = vadd.f32 %v548, %v564
    %v582 = vadd.f32 %v549, %v565
    %v583 = vadd.f32 %v550, %v566
    %v584 = vadd.f32 %v551, %v567
    %v585 = vadd.f32 %v552, %v568
    %v586 = vadd.f32 %v553, %v569
    %v587 = vld [vmem:[#allocation3 + $0x810] sm:$0xff]
    %v588 = vld [vmem:[#allocation3 + $0x818] sm:$0xff]
    %v589 = vld [vmem:[#allocation3 + $0x820] sm:$0xff]
    %v590 = vld [vmem:[#allocation3 + $0x828] sm:$0xff]
    %v591 = vld [vmem:[#allocation3 + $0x830] sm:$0xff]
    %v592 = vld [vmem:[#allocation3 + $0x838] sm:$0xff]
    %v593 = vld [vmem:[#allocation3 + $0x840] sm:$0xff]
    %v594 = vld [vmem:[#allocation3 + $0x848] sm:$0xff]
    %v595 = vld [vmem:[#allocation3 + $0x850] sm:$0xff]
    %v596 = vld [vmem:[#allocation3 + $0x858] sm:$0xff]
    %v597 = vld [vmem:[#allocation3 + $0x860] sm:$0xff]
    %v598 = vld [vmem:[#allocation3 + $0x868] sm:$0xff]
    %v599 = vld [vmem:[#allocation3 + $0x870] sm:$0xff]
    %v600 = vld [vmem:[#allocation3 + $0x878] sm:$0xff]
    %v601 = vld [vmem:[#allocation3 + $0x880] sm:$0xff]
    %v602 = vld [vmem:[#allocation3 + $0x888] sm:$0xff]
    %v603 = vadd.f32 %v570, %v569
    %v604 = vadd.f32 %v571, %v587
    %v605 = vadd.f32 %v572, %v588
    %v606 = vadd.f32 %v573, %v589
    %v607 = vadd.f32 %v574, %v590
    %v608 = vadd.f32 %v575, %v591
    %v609 = vadd.f32 %v576, %v592
    %v610 = vadd.f32 %v577, %v593
    %v611 = vadd.f32 %v578, %v594
    %v612 = vadd.f32 %v579, %v595
    %v613 = vadd.f32 %v580, %v596
    %v614 = vadd.f32 %v581, %v597
    %v615 = vadd.f32 %v582, %v598
    %v616 = vadd.f32 %v583, %v599
    %v617 = vadd.f32 %v584, %v600
    %v618 = vadd.f32 %v585, %v601
    %v619 = vadd.f32 %v586, %v602
    %v620 = vld [vmem:[#allocation3 + $0x890] sm:$0xff]
    %v621 = vld [vmem:[#allocation3 + $0x898] sm:$0xff]
    %v622 = vld [vmem:[#allocation3 + $0x8a0] sm:$0xff]
    %v623 = vld [vmem:[#allocation3 + $0x8a8] sm:$0xff]
    %v624 = vld [vmem:[#allocation3 + $0x8b0] sm:$0xff]
    %v625 = vld [vmem:[#allocation3 + $0x8b8] sm:$0xff]
    %v626 = vld [vmem:[#allocation3 + $0x8c0] sm:$0xff]
    %v627 = vld [vmem:[#allocation3 + $0x8c8] sm:$0xff]
    %v628 = vld [vmem:[#allocation3 + $0x8d0] sm:$0xff]
    %v629 = vld [vmem:[#allocation3 + $0x8d8] sm:$0xff]
    %v630 = vld [vmem:[#allocation3 + $0x8e0] sm:$0xff]
    %v631 = vld [vmem:[#allocation3 + $0x8e8] sm:$0xff]
    %v632 = vld [vmem:[#allocation3 + $0x8f0] sm:$0xff]
    %v633 = vld [vmem:[#allocation3 + $0x8f8] sm:$0xff]
    %v634 = vld [vmem:[#allocation3 + $0x900] sm:$0xff]
    %v635 = vld [vmem:[#allocation3 + $0x908] sm:$0xff]
    %v636 = vadd.f32 %v603, %v602
    %v637 = vadd.f32 %v604, %v620
    %v638 = vadd.f32 %v605, %v621
    %v639 = vadd.f32 %v606, %v622
    %v640 = vadd.f32 %v607, %v623
    %v641 = vadd.f32 %v608, %v624
    %v642 = vadd.f32 %v609, %v625
    %v643 = vadd.f32 %v610, %v626
    %v644 = vadd.f32 %v611, %v627
    %v645 = vadd.f32 %v612, %v628
    %v646 = vadd.f32 %v613, %v629
    %v647 = vadd.f32 %v614, %v630
    %v648 = vadd.f32 %v615, %v631
    %v649 = vadd.f32 %v616, %v632
    %v650 = vadd.f32 %v617, %v633
    %v651 = vadd.f32 %v618, %v634
    %v652 = vadd.f32 %v619, %v635
    %v653 = vld [vmem:[#allocation3 + $0x910] sm:$0xff]
    %v654 = vld [vmem:[#allocation3 + $0x918] sm:$0xff]
    %v655 = vld [vmem:[#allocation3 + $0x920] sm:$0xff]
    %v656 = vld [vmem:[#allocation3 + $0x928] sm:$0xff]
    %v657 = vld [vmem:[#allocation3 + $0x930] sm:$0xff]
    %v658 = vld [vmem:[#allocation3 + $0x938] sm:$0xff]
    %v659 = vld [vmem:[#allocation3 + $0x940] sm:$0xff]
    %v660 = vld [vmem:[#allocation3 + $0x948] sm:$0xff]
    %v661 = vld [vmem:[#allocation3 + $0x950] sm:$0xff]
    %v662 = vld [vmem:[#allocation3 + $0x958] sm:$0xff]
    %v663 = vld [vmem:[#allocation3 + $0x960] sm:$0xff]
    %v664 = vld [vmem:[#allocation3 + $0x968] sm:$0xff]
    %v665 = vld [vmem:[#allocation3 + $0x970] sm:$0xff]
    %v666 = vld [vmem:[#allocation3 + $0x978] sm:$0xff]
    %v667 = vld [vmem:[#allocation3 + $0x980] sm:$0xff]
    %v668 = vld [vmem:[#allocation3 + $0x988] sm:$0xff]
    %v669 = vadd.f32 %v636, %v635
    %v670 = vadd.f32 %v637, %v653
    %v671 = vadd.f32 %v638, %v654
    %v672 = vadd.f32 %v639, %v655
    %v673 = vadd.f32 %v640, %v656
    %v674 = vadd.f32 %v641, %v657
    %v675 = vadd.f32 %v642, %v658
    %v676 = vadd.f32 %v643, %v659
    %v677 = vadd.f32 %v644, %v660
    %v678 = vadd.f32 %v645, %v661
    %v679 = vadd.f32 %v646, %v662
    %v680 = vadd.f32 %v647, %v663
    %v681 = vadd.f32 %v648, %v664
    %v682 = vadd.f32 %v649, %v665
    %v683 = vadd.f32 %v650, %v666
    %v684 = vadd.f32 %v651, %v667
    %v685 = vadd.f32 %v652, %v668
    %v686 = vld [vmem:[#allocation3 + $0x990] sm:$0xff]
    %v687 = vld [vmem:[#allocation3 + $0x998] sm:$0xff]
    %v688 = vld [vmem:[#allocation3 + $0x9a0] sm:$0xff]
    %v689 = vld [vmem:[#allocation3 + $0x9a8] sm:$0xff]
    %v690 = vld [vmem:[#allocation3 + $0x9b0] sm:$0xff]
    %v691 = vld [vmem:[#allocation3 + $0x9b8] sm:$0xff]
    %v692 = vld [vmem:[#allocation3 + $0x9c0] sm:$0xff]
    %v693 = vld [vmem:[#allocation3 + $0x9c8] sm:$0xff]
    %v694 = vld [vmem:[#allocation3 + $0x9d0] sm:$0xff]
    %v695 = vld [vmem:[#allocation3 + $0x9d8] sm:$0xff]
    %v696 = vld [vmem:[#allocation3 + $0x9e0] sm:$0xff]
    %v697 = vld [vmem:[#allocation3 + $0x9e8] sm:$0xff]
    %v698 = vld [vmem:[#allocation3 + $0x9f0] sm:$0xff]
    %v699 = vld [vmem:[#allocation3 + $0x9f8] sm:$0xff]
    %v700 = vld [vmem:[#allocation3 + $0xa00] sm:$0xff]
    %v701 = vld [vmem:[#allocation3 + $0xa08] sm:$0xff]
    %v702 = vadd.f32 %v669, %v668
    %v703 = vadd.f32 %v670, %v686
    %v704 = vadd.f32 %v671, %v687
    %v705 = vadd.f32 %v672, %v688
    %v706 = vadd.f32 %v673, %v689
    %v707 = vadd.f32 %v674, %v690
    %v708 = vadd.f32 %v675, %v691
    %v709 = vadd.f32 %v676, %v692
    %v710 = vadd.f32 %v677, %v693
    %v711 = vadd.f32 %v678, %v694
    %v712 = vadd.f32 %v679, %v695
    %v713 = vadd.f32 %v680, %v696
    %v714 = vadd.f32 %v681, %v697
    %v715 = vadd.f32 %v682, %v698
    %v716 = vadd.f32 %v683, %v699
    %v717 = vadd.f32 %v684, %v700
    %v718 = vadd.f32 %v685, %v701
    %v719 = vld [vmem:[#allocation3 + $0xa10] sm:$0xff]
    %v720 = vld [vmem:[#allocation3 + $0xa18] sm:$0xff]
    %v721 = vld [vmem:[#allocation3 + $0xa20] sm:$0xff]
    %v722 = vld [vmem:[#allocation3 + $0xa28] sm:$0xff]
    %v723 = vld [vmem:[#allocation3 + $0xa30] sm:$0xff]
    %v724 = vld [vmem:[#allocation3 + $0xa38] sm:$0xff]
    %v725 = vld [vmem:[#allocation3 + $0xa40] sm:$0xff]
    %v726 = vld [vmem:[#allocation3 + $0xa48] sm:$0xff]
    %v727 = vld [vmem:[#allocation3 + $0xa50] sm:$0xff]
    %v728 = vld [vmem:[#allocation3 + $0xa58] sm:$0xff]
    %v729 = vld [vmem:[#allocation3 + $0xa60] sm:$0xff]
    %v730 = vld [vmem:[#allocation3 + $0xa68] sm:$0xff]
    %v731 = vld [vmem:[#allocation3 + $0xa70] sm:$0xff]
    %v732 = vld [vmem:[#allocation3 + $0xa78] sm:$0xff]
    %v733 = vld [vmem:[#allocation3 + $0xa80] sm:$0xff]
    %v734 = vld [vmem:[#allocation3 + $0xa88] sm:$0xff]
    %v735 = vadd.f32 %v702, %v701
    %v736 = vadd.f32 %v703, %v719
    %v737 = vadd.f32 %v704, %v720
    %v738 = vadd.f32 %v705, %v721
    %v739 = vadd.f32 %v706, %v722
    %v740 = vadd.f32 %v707, %v723
    %v741 = vadd.f32 %v708, %v724
    %v742 = vadd.f32 %v709, %v725
    %v743 = vadd.f32 %v710, %v726
    %v744 = vadd.f32 %v711, %v727
    %v745 = vadd.f32 %v712, %v728
    %v746 = vadd.f32 %v713, %v729
    %v747 = vadd.f32 %v714, %v730
    %v748 = vadd.f32 %v715, %v731
    %v749 = vadd.f32 %v716, %v732
    %v750 = vadd.f32 %v717, %v733
    %v751 = vadd.f32 %v718, %v734
    %v752 = vld [vmem:[#allocation3 + $0xa90] sm:$0xff]
    %v753 = vld [vmem:[#allocation3 + $0xa98] sm:$0xff]
    %v754 = vld [vmem:[#allocation3 + $0xaa0] sm:$0xff]
    %v755 = vld [vmem:[#allocation3 + $0xaa8] sm:$0xff]
    %v756 = vld [vmem:[#allocation3 + $0xab0] sm:$0xff]
    %v757 = vld [vmem:[#allocation3 + $0xab8] sm:$0xff]
    %v758 = vld [vmem:[#allocation3 + $0xac0] sm:$0xff]
    %v759 = vld [vmem:[#allocation3 + $0xac8] sm:$0xff]
    %v760 = vld [vmem:[#allocation3 + $0xad0] sm:$0xff]
    %v761 = vld [vmem:[#allocation3 + $0xad8] sm:$0xff]
    %v762 = vld [vmem:[#allocation3 + $0xae0] sm:$0xff]
    %v763 = vld [vmem:[#allocation3 + $0xae8] sm:$0xff]
    %v764 = vld [vmem:[#allocation3 + $0xaf0] sm:$0xff]
    %v765 = vld [vmem:[#allocation3 + $0xaf8] sm:$0xff]
    %v766 = vld [vmem:[#allocation3 + $0xb00] sm:$0xff]
    %v767 = vld [vmem:[#allocation3 + $0xb08] sm:$0xff]
    %v768 = vadd.f32 %v735, %v734
    %v769 = vadd.f32 %v736, %v752
    %v770 = vadd.f32 %v737, %v753
    %v771 = vadd.f32 %v738, %v754
    %v772 = vadd.f32 %v739, %v755
    %v773 = vadd.f32 %v740, %v756
    %v774 = vadd.f32 %v741, %v757
    %v775 = vadd.f32 %v742, %v758
    %v776 = vadd.f32 %v743, %v759
    %v777 = vadd.f32 %v744, %v760
    %v778 = vadd.f32 %v745, %v761
    %v779 = vadd.f32 %v746, %v762
    %v780 = vadd.f32 %v747, %v763
    %v781 = vadd.f32 %v748, %v764
    %v782 = vadd.f32 %v749, %v765
    %v783 = vadd.f32 %v750, %v766
    %v784 = vadd.f32 %v751, %v767
    %v785 = vld [vmem:[#allocation3 + $0xb10] sm:$0xff]
    %v786 = vld [vmem:[#allocation3 + $0xb18] sm:$0xff]
    %v787 = vld [vmem:[#allocation3 + $0xb20] sm:$0xff]
    %v788 = vld [vmem:[#allocation3 + $0xb28] sm:$0xff]
    %v789 = vld [vmem:[#allocation3 + $0xb30] sm:$0xff]
    %v790 = vld [vmem:[#allocation3 + $0xb38] sm:$0xff]
    %v791 = vld [vmem:[#allocation3 + $0xb40] sm:$0xff]
    %v792 = vld [vmem:[#allocation3 + $0xb48] sm:$0xff]
    %v793 = vld [vmem:[#allocation3 + $0xb50] sm:$0xff]
    %v794 = vld [vmem:[#allocation3 + $0xb58] sm:$0xff]
    %v795 = vld [vmem:[#allocation3 + $0xb60] sm:$0xff]
    %v796 = vld [vmem:[#allocation3 + $0xb68] sm:$0xff]
    %v797 = vld [vmem:[#allocation3 + $0xb70] sm:$0xff]
    %v798 = vld [vmem:[#allocation3 + $0xb78] sm:$0xff]
    %v799 = vld [vmem:[#allocation3 + $0xb80] sm:$0xff]
    %v800 = vld [vmem:[#allocation3 + $0xb88] sm:$0xff]
    %v801 = vadd.f32 %v768, %v767
    %v802 = vadd.f32 %v769, %v785
    %v803 = vadd.f32 %v770, %v786
    %v804 = vadd.f32 %v771, %v787
    %v805 = vadd.f32 %v772, %v788
    %v806 = vadd.f32 %v773, %v789
    %v807 = vadd.f32 %v774, %v790
    %v808 = vadd.f32 %v775, %v791
    %v809 = vadd.f32 %v776, %v792
    %v810 = vadd.f32 %v777, %v793
    %v811 = vadd.f32 %v778, %v794
    %v812 = vadd.f32 %v779, %v795
    %v813 = vadd.f32 %v780, %v796
    %v814 = vadd.f32 %v781, %v797
    %v815 = vadd.f32 %v782, %v798
    %v816 = vadd.f32 %v783, %v799
    %v817 = vadd.f32 %v784, %v800
    %v818 = vld [vmem:[#allocation3 + $0xb90] sm:$0xff]
    %v819 = vld [vmem:[#allocation3 + $0xb98] sm:$0xff]
    %v820 = vld [vmem:[#allocation3 + $0xba0] sm:$0xff]
    %v821 = vld [vmem:[#allocation3 + $0xba8] sm:$0xff]
    %v822 = vld [vmem:[#allocation3 + $0xbb0] sm:$0xff]
    %v823 = vld [vmem:[#allocation3 + $0xbb8] sm:$0xff]
    %v824 = vld [vmem:[#allocation3 + $0xbc0] sm:$0xff]
    %v825 = vld [vmem:[#allocation3 + $0xbc8] sm:$0xff]
    %v826 = vld [vmem:[#allocation3 + $0xbd0] sm:$0xff]
    %v827 = vld [vmem:[#allocation3 + $0xbd8] sm:$0xff]
    %v828 = vld [vmem:[#allocation3 + $0xbe0] sm:$0xff]
    %v829 = vld [vmem:[#allocation3 + $0xbe8] sm:$0xff]
    %v830 = vld [vmem:[#allocation3 + $0xbf0] sm:$0xff]
    %v831 = vld [vmem:[#allocation3 + $0xbf8] sm:$0xff]
    %v832 = vld [vmem:[#allocation3 + $0xc00] sm:$0xff]
    %v833 = vld [vmem:[#allocation3 + $0xc08] sm:$0xff]
    %v834 = vadd.f32 %v801, %v800
    %v835 = vadd.f32 %v802, %v818
    %v836 = vadd.f32 %v803, %v819
    %v837 = vadd.f32 %v804, %v820
    %v838 = vadd.f32 %v805, %v821
    %v839 = vadd.f32 %v806, %v822
    %v840 = vadd.f32 %v807, %v823
    %v841 = vadd.f32 %v808, %v824
    %v842 = vadd.f32 %v809, %v825
    %v843 = vadd.f32 %v810, %v826
    %v844 = vadd.f32 %v811, %v827
    %v845 = vadd.f32 %v812, %v828
    %v846 = vadd.f32 %v813, %v829
    %v847 = vadd.f32 %v814, %v830
    %v848 = vadd.f32 %v815, %v831
    %v849 = vadd.f32 %v816, %v832
    %v850 = vadd.f32 %v817, %v833
    %v851 = vld [vmem:[#allocation3 + $0xc10] sm:$0xff]
    %v852 = vld [vmem:[#allocation3 + $0xc18] sm:$0xff]
    %v853 = vld [vmem:[#allocation3 + $0xc20] sm:$0xff]
    %v854 = vld [vmem:[#allocation3 + $0xc28] sm:$0xff]
    %v855 = vld [vmem:[#allocation3 + $0xc30] sm:$0xff]
    %v856 = vld [vmem:[#allocation3 + $0xc38] sm:$0xff]
    %v857 = vld [vmem:[#allocation3 + $0xc40] sm:$0xff]
    %v858 = vld [vmem:[#allocation3 + $0xc48] sm:$0xff]
    %v859 = vld [vmem:[#allocation3 + $0xc50] sm:$0xff]
    %v860 = vld [vmem:[#allocation3 + $0xc58] sm:$0xff]
    %v861 = vld [vmem:[#allocation3 + $0xc60] sm:$0xff]
    %v862 = vld [vmem:[#allocation3 + $0xc68] sm:$0xff]
    %v863 = vld [vmem:[#allocation3 + $0xc70] sm:$0xff]
    %v864 = vld [vmem:[#allocation3 + $0xc78] sm:$0xff]
    %v865 = vld [vmem:[#allocation3 + $0xc80] sm:$0xff]
    %v866 = vld [vmem:[#allocation3 + $0xc88] sm:$0xff]
    %v867 = vadd.f32 %v834, %v833
    %v868 = vadd.f32 %v835, %v851
    %v869 = vadd.f32 %v836, %v852
    %v870 = vadd.f32 %v837, %v853
    %v871 = vadd.f32 %v838, %v854
    %v872 = vadd.f32 %v839, %v855
    %v873 = vadd.f32 %v840, %v856
    %v874 = vadd.f32 %v841, %v857
    %v875 = vadd.f32 %v842, %v858
    %v876 = vadd.f32 %v843, %v859
    %v877 = vadd.f32 %v844, %v860
    %v878 = vadd.f32 %v845, %v861
    %v879 = vadd.f32 %v846, %v862
    %v880 = vadd.f32 %v847, %v863
    %v881 = vadd.f32 %v848, %v864
    %v882 = vadd.f32 %v849, %v865
    %v883 = vadd.f32 %v850, %v866
    %v884 = vld [vmem:[#allocation3 + $0xc90] sm:$0xff]
    %v885 = vld [vmem:[#allocation3 + $0xc98] sm:$0xff]
    %v886 = vld [vmem:[#allocation3 + $0xca0] sm:$0xff]
    %v887 = vld [vmem:[#allocation3 + $0xca8] sm:$0xff]
    %v888 = vld [vmem:[#allocation3 + $0xcb0] sm:$0xff]
    %v889 = vld [vmem:[#allocation3 + $0xcb8] sm:$0xff]
    %v890 = vld [vmem:[#allocation3 + $0xcc0] sm:$0xff]
    %v891 = vld [vmem:[#allocation3 + $0xcc8] sm:$0xff]
    %v892 = vld [vmem:[#allocation3 + $0xcd0] sm:$0xff]
    %v893 = vld [vmem:[#allocation3 + $0xcd8] sm:$0xff]
    %v894 = vld [vmem:[#allocation3 + $0xce0] sm:$0xff]
    %v895 = vld [vmem:[#allocation3 + $0xce8] sm:$0xff]
    %v896 = vld [vmem:[#allocation3 + $0xcf0] sm:$0xff]
    %v897 = vld [vmem:[#allocation3 + $0xcf8] sm:$0xff]
    %v898 = vld [vmem:[#allocation3 + $0xd00] sm:$0xff]
    %v899 = vld [vmem:[#allocation3 + $0xd08] sm:$0xff]
    %v900 = vadd.f32 %v867, %v866
    %v901 = vadd.f32 %v868, %v884
    %v902 = vadd.f32 %v869, %v885
    %v903 = vadd.f32 %v870, %v886
    %v904 = vadd.f32 %v871, %v887
    %v905 = vadd.f32 %v872, %v888
    %v906 = vadd.f32 %v873, %v889
    %v907 = vadd.f32 %v874, %v890
    %v908 = vadd.f32 %v875, %v891
    %v909 = vadd.f32 %v876, %v892
    %v910 = vadd.f32 %v877, %v893
    %v911 = vadd.f32 %v878, %v894
    %v912 = vadd.f32 %v879, %v895
    %v913 = vadd.f32 %v880, %v896
    %v914 = vadd.f32 %v881, %v897
    %v915 = vadd.f32 %v882, %v898
    %v916 = vadd.f32 %v883, %v899
    %v917 = vld [vmem:[#allocation3 + $0xd10] sm:$0xff]
    %v918 = vld [vmem:[#allocation3 + $0xd18] sm:$0xff]
    %v919 = vld [vmem:[#allocation3 + $0xd20] sm:$0xff]
    %v920 = vld [vmem:[#allocation3 + $0xd28] sm:$0xff]
    %v921 = vld [vmem:[#allocation3 + $0xd30] sm:$0xff]
    %v922 = vld [vmem:[#allocation3 + $0xd38] sm:$0xff]
    %v923 = vld [vmem:[#allocation3 + $0xd40] sm:$0xff]
    %v924 = vld [vmem:[#allocation3 + $0xd48] sm:$0xff]
    %v925 = vld [vmem:[#allocation3 + $0xd50] sm:$0xff]
    %v926 = vld [vmem:[#allocation3 + $0xd58] sm:$0xff]
    %v927 = vld [vmem:[#allocation3 + $0xd60] sm:$0xff]
    %v928 = vld [vmem:[#allocation3 + $0xd68] sm:$0xff]
    %v929 = vld [vmem:[#allocation3 + $0xd70] sm:$0xff]
    %v930 = vld [vmem:[#allocation3 + $0xd78] sm:$0xff]
    %v931 = vld [vmem:[#allocation3 + $0xd80] sm:$0xff]
    %v932 = vld [vmem:[#allocation3 + $0xd88] sm:$0xff]
    %v933 = vadd.f32 %v900, %v899
    %v934 = vadd.f32 %v901, %v917
    %v935 = vadd.f32 %v902, %v918
    %v936 = vadd.f32 %v903, %v919
    %v937 = vadd.f32 %v904, %v920
    %v938 = vadd.f32 %v905, %v921
    %v939 = vadd.f32 %v906, %v922
    %v940 = vadd.f32 %v907, %v923
    %v941 = vadd.f32 %v908, %v924
    %v942 = vadd.f32 %v909, %v925
    %v943 = vadd.f32 %v910, %v926
    %v944 = vadd.f32 %v911, %v927
    %v945 = vadd.f32 %v912, %v928
    %v946 = vadd.f32 %v913, %v929
    %v947 = vadd.f32 %v914, %v930
    %v948 = vadd.f32 %v915, %v931
    %v949 = vadd.f32 %v916, %v932
    %v950 = vld [vmem:[#allocation3 + $0xd90] sm:$0xff]
    %v951 = vld [vmem:[#allocation3 + $0xd98] sm:$0xff]
    %v952 = vld [vmem:[#allocation3 + $0xda0] sm:$0xff]
    %v953 = vld [vmem:[#allocation3 + $0xda8] sm:$0xff]
    %v954 = vld [vmem:[#allocation3 + $0xdb0] sm:$0xff]
    %v955 = vld [vmem:[#allocation3 + $0xdb8] sm:$0xff]
    %v956 = vld [vmem:[#allocation3 + $0xdc0] sm:$0xff]
    %v957 = vld [vmem:[#allocation3 + $0xdc8] sm:$0xff]
    %v958 = vld [vmem:[#allocation3 + $0xdd0] sm:$0xff]
    %v959 = vld [vmem:[#allocation3 + $0xdd8] sm:$0xff]
    %v960 = vld [vmem:[#allocation3 + $0xde0] sm:$0xff]
    %v961 = vld [vmem:[#allocation3 + $0xde8] sm:$0xff]
    %v962 = vld [vmem:[#allocation3 + $0xdf0] sm:$0xff]
    %v963 = vld [vmem:[#allocation3 + $0xdf8] sm:$0xff]
    %v964 = vld [vmem:[#allocation3 + $0xe00] sm:$0xff]
    %v965 = vld [vmem:[#allocation3 + $0xe08] sm:$0xff]
    %v966 = vadd.f32 %v933, %v932
    %v967 = vadd.f32 %v934, %v950
    %v968 = vadd.f32 %v935, %v951
    %v969 = vadd.f32 %v936, %v952
    %v970 = vadd.f32 %v937, %v953
    %v971 = vadd.f32 %v938, %v954
    %v972 = vadd.f32 %v939, %v955
    %v973 = vadd.f32 %v940, %v956
    %v974 = vadd.f32 %v941, %v957
    %v975 = vadd.f32 %v942, %v958
    %v976 = vadd.f32 %v943, %v959
    %v977 = vadd.f32 %v944, %v960
    %v978 = vadd.f32 %v945, %v961
    %v979 = vadd.f32 %v946, %v962
    %v980 = vadd.f32 %v947, %v963
    %v981 = vadd.f32 %v948, %v964
    %v982 = vadd.f32 %v949, %v965
    %v983 = vld [vmem:[#allocation3 + $0xe10] sm:$0xff]
    %v984 = vld [vmem:[#allocation3 + $0xe18] sm:$0xff]
    %v985 = vld [vmem:[#allocation3 + $0xe20] sm:$0xff]
    %v986 = vld [vmem:[#allocation3 + $0xe28] sm:$0xff]
    %v987 = vld [vmem:[#allocation3 + $0xe30] sm:$0xff]
    %v988 = vld [vmem:[#allocation3 + $0xe38] sm:$0xff]
    %v989 = vld [vmem:[#allocation3 + $0xe40] sm:$0xff]
    %v990 = vld [vmem:[#allocation3 + $0xe48] sm:$0xff]
    %v991 = vld [vmem:[#allocation3 + $0xe50] sm:$0xff]
    %v992 = vld [vmem:[#allocation3 + $0xe58] sm:$0xff]
    %v993 = vld [vmem:[#allocation3 + $0xe60] sm:$0xff]
    %v994 = vld [vmem:[#allocation3 + $0xe68] sm:$0xff]
    %v995 = vld [vmem:[#allocation3 + $0xe70] sm:$0xff]
    %v996 = vld [vmem:[#allocation3 + $0xe78] sm:$0xff]
    %v997 = vld [vmem:[#allocation3 + $0xe80] sm:$0xff]
    %v998 = vld [vmem:[#allocation3 + $0xe88] sm:$0xff]
    %v999 = vadd.f32 %v966, %v965
    %v1000 = vadd.f32 %v967, %v983
    %v1001 = vadd.f32 %v968, %v984
    %v1002 = vadd.f32 %v969, %v985
    %v1003 = vadd.f32 %v970, %v986
    %v1004 = vadd.f32 %v971, %v987
    %v1005 = vadd.f32 %v972, %v988
    %v1006 = vadd.f32 %v973, %v989
    %v1007 = vadd.f32 %v974, %v990
    %v1008 = vadd.f32 %v975, %v991
    %v1009 = vadd.f32 %v976, %v992
    %v1010 = vadd.f32 %v977, %v993
    %v1011 = vadd.f32 %v978, %v994
    %v1012 = vadd.f32 %v979, %v995
    %v1013 = vadd.f32 %v980, %v996
    %v1014 = vadd.f32 %v981, %v997
    %v1015 = vadd.f32 %v982, %v998
    %v1016 = vld [vmem:[#allocation3 + $0xe90] sm:$0xff]
    %v1017 = vld [vmem:[#allocation3 + $0xe98] sm:$0xff]
    %v1018 = vld [vmem:[#allocation3 + $0xea0] sm:$0xff]
    %v1019 = vld [vmem:[#allocation3 + $0xea8] sm:$0xff]
    %v1020 = vld [vmem:[#allocation3 + $0xeb0] sm:$0xff]
    %v1021 = vld [vmem:[#allocation3 + $0xeb8] sm:$0xff]
    %v1022 = vld [vmem:[#allocation3 + $0xec0] sm:$0xff]
    %v1023 = vld [vmem:[#allocation3 + $0xec8] sm:$0xff]
    %v1024 = vld [vmem:[#allocation3 + $0xed0] sm:$0xff]
    %v1025 = vld [vmem:[#allocation3 + $0xed8] sm:$0xff]
    %v1026 = vld [vmem:[#allocation3 + $0xee0] sm:$0xff]
    %v1027 = vld [vmem:[#allocation3 + $0xee8] sm:$0xff]
    %v1028 = vld [vmem:[#allocation3 + $0xef0] sm:$0xff]
    %v1029 = vld [vmem:[#allocation3 + $0xef8] sm:$0xff]
    %v1030 = vld [vmem:[#allocation3 + $0xf00] sm:$0xff]
    %v1031 = vld [vmem:[#allocation3 + $0xf08] sm:$0xff]
    %v1032 = vadd.f32 %v999, %v998
    %v1033 = vadd.f32 %v1000, %v1016
    %v1034 = vadd.f32 %v1001, %v1017
    %v1035 = vadd.f32 %v1002, %v1018
    %v1036 = vadd.f32 %v1003, %v1019
    %v1037 = vadd.f32 %v1004, %v1020
    %v1038 = vadd.f32 %v1005, %v1021
    %v1039 = vadd.f32 %v1006, %v1022
    %v1040 = vadd.f32 %v1007, %v1023
    %v1041 = vadd.f32 %v1008, %v1024
    %v1042 = vadd.f32 %v1009, %v1025
    %v1043 = vadd.f32 %v1010, %v1026
    %v1044 = vadd.f32 %v1011, %v1027
    %v1045 = vadd.f32 %v1012, %v1028
    %v1046 = vadd.f32 %v1013, %v1029
    %v1047 = vadd.f32 %v1014, %v1030
    %v1048 = vadd.f32 %v1015, %v1031
    %v1049 = vld [vmem:[#allocation3 + $0xf10] sm:$0xff]
    %v1050 = vld [vmem:[#allocation3 + $0xf18] sm:$0xff]
    %v1051 = vld [vmem:[#allocation3 + $0xf20] sm:$0xff]
    %v1052 = vld [vmem:[#allocation3 + $0xf28] sm:$0xff]
    %v1053 = vld [vmem:[#allocation3 + $0xf30] sm:$0xff]
    %v1054 = vld [vmem:[#allocation3 + $0xf38] sm:$0xff]
    %v1055 = vld [vmem:[#allocation3 + $0xf40] sm:$0xff]
    %v1056 = vld [vmem:[#allocation3 + $0xf48] sm:$0xff]
    %v1057 = vld [vmem:[#allocation3 + $0xf50] sm:$0xff]
    %v1058 = vld [vmem:[#allocation3 + $0xf58] sm:$0xff]
    %v1059 = vld [vmem:[#allocation3 + $0xf60] sm:$0xff]
    %v1060 = vld [vmem:[#allocation3 + $0xf68] sm:$0xff]
    %v1061 = vld [vmem:[#allocation3 + $0xf70] sm:$0xff]
    %v1062 = vld [vmem:[#allocation3 + $0xf78] sm:$0xff]
    %v1063 = vld [vmem:[#allocation3 + $0xf80] sm:$0xff]
    %v1064 = vld [vmem:[#allocation3 + $0xf88] sm:$0xff]
    %v1065 = vadd.f32 %v1032, %v1031
    %v1066 = vadd.f32 %v1033, %v1049
    %v1067 = vadd.f32 %v1034, %v1050
    %v1068 = vadd.f32 %v1035, %v1051
    %v1069 = vadd.f32 %v1036, %v1052
    %v1070 = vadd.f32 %v1037, %v1053
    %v1071 = vadd.f32 %v1038, %v1054
    %v1072 = vadd.f32 %v1039, %v1055
    %v1073 = vadd.f32 %v1040, %v1056
    %v1074 = vadd.f32 %v1041, %v1057
    %v1075 = vadd.f32 %v1042, %v1058
    %v1076 = vadd.f32 %v1043, %v1059
    %v1077 = vadd.f32 %v1044, %v1060
    %v1078 = vadd.f32 %v1045, %v1061
    %v1079 = vadd.f32 %v1046, %v1062
    %v1080 = vadd.f32 %v1047, %v1063
    %v1081 = vadd.f32 %v1048, %v1064
    %v1082 = vld [vmem:[#allocation3 + $0xf90] sm:$0xff]
    %v1083 = vld [vmem:[#allocation3 + $0xf98] sm:$0xff]
    %v1084 = vld [vmem:[#allocation3 + $0xfa0] sm:$0xff]
    %v1085 = vld [vmem:[#allocation3 + $0xfa8] sm:$0xff]
    %v1086 = vld [vmem:[#allocation3 + $0xfb0] sm:$0xff]
    %v1087 = vld [vmem:[#allocation3 + $0xfb8] sm:$0xff]
    %v1088 = vld [vmem:[#allocation3 + $0xfc0] sm:$0xff]
    %v1089 = vld [vmem:[#allocation3 + $0xfc8] sm:$0xff]
    %v1090 = vld [vmem:[#allocation3 + $0xfd0] sm:$0xff]
    %v1091 = vld [vmem:[#allocation3 + $0xfd8] sm:$0xff]
    %v1092 = vld [vmem:[#allocation3 + $0xfe0] sm:$0xff]
    %v1093 = vld [vmem:[#allocation3 + $0xfe8] sm:$0xff]
    %v1094 = vld [vmem:[#allocation3 + $0xff0] sm:$0xff]
    %v1095 = vld [vmem:[#allocation3 + $0xff8] sm:$0xff]
    %v1096 = vld [vmem:[#allocation3 + $0x1000] sm:$0xff]
    %v1097 = vld [vmem:[#allocation3 + $0x1008] sm:$0xff]
    %v1098 = vadd.f32 %v1065, %v1064
    %v1099 = vadd.f32 %v1066, %v1082
    %v1100 = vadd.f32 %v1067, %v1083
    %v1101 = vadd.f32 %v1068, %v1084
    %v1102 = vadd.f32 %v1069, %v1085
    %v1103 = vadd.f32 %v1070, %v1086
    %v1104 = vadd.f32 %v1071, %v1087
    %v1105 = vadd.f32 %v1072, %v1088
    %v1106 = vadd.f32 %v1073, %v1089
    %v1107 = vadd.f32 %v1074, %v1090
    %v1108 = vadd.f32 %v1075, %v1091
    %v1109 = vadd.f32 %v1076, %v1092
    %v1110 = vadd.f32 %v1077, %v1093
    %v1111 = vadd.f32 %v1078, %v1094
    %v1112 = vadd.f32 %v1079, %v1095
    %v1113 = vadd.f32 %v1080, %v1096
    %v1114 = vadd.f32 %v1081, %v1097
    %v1115 = vld [vmem:[#allocation3 + $0x1010] sm:$0xff]
    %v1116 = vld [vmem:[#allocation3 + $0x1018] sm:$0xff]
    %v1117 = vld [vmem:[#allocation3 + $0x1020] sm:$0xff]
    %v1118 = vld [vmem:[#allocation3 + $0x1028] sm:$0xff]
    %v1119 = vld [vmem:[#allocation3 + $0x1030] sm:$0xff]
    %v1120 = vld [vmem:[#allocation3 + $0x1038] sm:$0xff]
    %v1121 = vld [vmem:[#allocation3 + $0x1040] sm:$0xff]
    %v1122 = vld [vmem:[#allocation3 + $0x1048] sm:$0xff]
    %v1123 = vld [vmem:[#allocation3 + $0x1050] sm:$0xff]
    %v1124 = vld [vmem:[#allocation3 + $0x1058] sm:$0xff]
    %v1125 = vld [vmem:[#allocation3 + $0x1060] sm:$0xff]
    %v1126 = vld [vmem:[#allocation3 + $0x1068] sm:$0xff]
    %v1127 = vld [vmem:[#allocation3 + $0x1070] sm:$0xff]
    %v1128 = vld [vmem:[#allocation3 + $0x1078] sm:$0xff]
    %v1129 = vld [vmem:[#allocation3 + $0x1080] sm:$0xff]
    %v1130 = vld [vmem:[#allocation3 + $0x1088] sm:$0xff]
    %v1131 = vadd.f32 %v1098, %v1097
    %v1132 = vadd.f32 %v1099, %v1115
    %v1133 = vadd.f32 %v1100, %v1116
    %v1134 = vadd.f32 %v1101, %v1117
    %v1135 = vadd.f32 %v1102, %v1118
    %v1136 = vadd.f32 %v1103, %v1119
    %v1137 = vadd.f32 %v1104, %v1120
    %v1138 = vadd.f32 %v1105, %v1121
    %v1139 = vadd.f32 %v1106, %v1122
    %v1140 = vadd.f32 %v1107, %v1123
    %v1141 = vadd.f32 %v1108, %v1124
    %v1142 = vadd.f32 %v1109, %v1125
    %v1143 = vadd.f32 %v1110, %v1126
    %v1144 = vadd.f32 %v1111, %v1127
    %v1145 = vadd.f32 %v1112, %v1128
    %v1146 = vadd.f32 %v1113, %v1129
    %v1147 = vadd.f32 %v1114, %v1130
    %v1148 = vld [vmem:[#allocation3 + $0x1090] sm:$0xff]
    %v1149 = vld [vmem:[#allocation3 + $0x1098] sm:$0xff]
    %v1150 = vld [vmem:[#allocation3 + $0x10a0] sm:$0xff]
    %v1151 = vld [vmem:[#allocation3 + $0x10a8] sm:$0xff]
    %v1152 = vld [vmem:[#allocation3 + $0x10b0] sm:$0xff]
    %v1153 = vld [vmem:[#allocation3 + $0x10b8] sm:$0xff]
    %v1154 = vld [vmem:[#allocation3 + $0x10c0] sm:$0xff]
    %v1155 = vld [vmem:[#allocation3 + $0x10c8] sm:$0xff]
    %v1156 = vld [vmem:[#allocation3 + $0x10d0] sm:$0xff]
    %v1157 = vld [vmem:[#allocation3 + $0x10d8] sm:$0xff]
    %v1158 = vld [vmem:[#allocation3 + $0x10e0] sm:$0xff]
    %v1159 = vld [vmem:[#allocation3 + $0x10e8] sm:$0xff]
    %v1160 = vld [vmem:[#allocation3 + $0x10f0] sm:$0xff]
    %v1161 = vld [vmem:[#allocation3 + $0x10f8] sm:$0xff]
    %v1162 = vld [vmem:[#allocation3 + $0x1100] sm:$0xff]
    %v1163 = vld [vmem:[#allocation3 + $0x1108] sm:$0xff]
    %v1164 = vadd.f32 %v1131, %v1130
    %v1165 = vadd.f32 %v1132, %v1148
    %v1166 = vadd.f32 %v1133, %v1149
    %v1167 = vadd.f32 %v1134, %v1150
    %v1168 = vadd.f32 %v1135, %v1151
    %v1169 = vadd.f32 %v1136, %v1152
    %v1170 = vadd.f32 %v1137, %v1153
    %v1171 = vadd.f32 %v1138, %v1154
    %v1172 = vadd.f32 %v1139, %v1155
    %v1173 = vadd.f32 %v1140, %v1156
    %v1174 = vadd.f32 %v1141, %v1157
    %v1175 = vadd.f32 %v1142, %v1158
    %v1176 = vadd.f32 %v1143, %v1159
    %v1177 = vadd.f32 %v1144, %v1160
    %v1178 = vadd.f32 %v1145, %v1161
    %v1179 = vadd.f32 %v1146, %v1162
    %v1180 = vadd.f32 %v1147, %v1163
    %v1181 = vld [vmem:[#allocation3 + $0x1110] sm:$0xff]
    %v1182 = vld [vmem:[#allocation3 + $0x1118] sm:$0xff]
    %v1183 = vld [vmem:[#allocation3 + $0x1120] sm:$0xff]
    %v1184 = vld [vmem:[#allocation3 + $0x1128] sm:$0xff]
    %v1185 = vld [vmem:[#allocation3 + $0x1130] sm:$0xff]
    %v1186 = vld [vmem:[#allocation3 + $0x1138] sm:$0xff]
    %v1187 = vld [vmem:[#allocation3 + $0x1140] sm:$0xff]
    %v1188 = vld [vmem:[#allocation3 + $0x1148] sm:$0xff]
    %v1189 = vld [vmem:[#allocation3 + $0x1150] sm:$0xff]
    %v1190 = vld [vmem:[#allocation3 + $0x1158] sm:$0xff]
    %v1191 = vld [vmem:[#allocation3 + $0x1160] sm:$0xff]
    %v1192 = vld [vmem:[#allocation3 + $0x1168] sm:$0xff]
    %v1193 = vld [vmem:[#allocation3 + $0x1170] sm:$0xff]
    %v1194 = vld [vmem:[#allocation3 + $0x1178] sm:$0xff]
    %v1195 = vld [vmem:[#allocation3 + $0x1180] sm:$0xff]
    %v1196 = vld [vmem:[#allocation3 + $0x1188] sm:$0xff]
    %v1197 = vadd.f32 %v1164, %v1163
    %v1198 = vadd.f32 %v1165, %v1181
    %v1199 = vadd.f32 %v1166, %v1182
    %v1200 = vadd.f32 %v1167, %v1183
    %v1201 = vadd.f32 %v1168, %v1184
    %v1202 = vadd.f32 %v1169, %v1185
    %v1203 = vadd.f32 %v1170, %v1186
    %v1204 = vadd.f32 %v1171, %v1187
    %v1205 = vadd.f32 %v1172, %v1188
    %v1206 = vadd.f32 %v1173, %v1189
    %v1207 = vadd.f32 %v1174, %v1190
    %v1208 = vadd.f32 %v1175, %v1191
    %v1209 = vadd.f32 %v1176, %v1192
    %v1210 = vadd.f32 %v1177, %v1193
    %v1211 = vadd.f32 %v1178, %v1194
    %v1212 = vadd.f32 %v1179, %v1195
    %v1213 = vadd.f32 %v1180, %v1196
    %v1214 = vld [vmem:[#allocation3 + $0x1190] sm:$0xff]
    %v1215 = vld [vmem:[#allocation3 + $0x1198] sm:$0xff]
    %v1216 = vld [vmem:[#allocation3 + $0x11a0] sm:$0xff]
    %v1217 = vld [vmem:[#allocation3 + $0x11a8] sm:$0xff]
    %v1218 = vld [vmem:[#allocation3 + $0x11b0] sm:$0xff]
    %v1219 = vld [vmem:[#allocation3 + $0x11b8] sm:$0xff]
    %v1220 = vld [vmem:[#allocation3 + $0x11c0] sm:$0xff]
    %v1221 = vld [vmem:[#allocation3 + $0x11c8] sm:$0xff]
    %v1222 = vld [vmem:[#allocation3 + $0x11d0] sm:$0xff]
    %v1223 = vld [vmem:[#allocation3 + $0x11d8] sm:$0xff]
    %v1224 = vld [vmem:[#allocation3 + $0x11e0] sm:$0xff]
    %v1225 = vld [vmem:[#allocation3 + $0x11e8] sm:$0xff]
    %v1226 = vld [vmem:[#allocation3 + $0x11f0] sm:$0xff]
    %v1227 = vld [vmem:[#allocation3 + $0x11f8] sm:$0xff]
    %v1228 = vld [vmem:[#allocation3 + $0x1200] sm:$0xff]
    %v1229 = vld [vmem:[#allocation3 + $0x1208] sm:$0xff]
    %v1230 = vadd.f32 %v1197, %v1196
    %v1231 = vadd.f32 %v1198, %v1214
    %v1232 = vadd.f32 %v1199, %v1215
    %v1233 = vadd.f32 %v1200, %v1216
    %v1234 = vadd.f32 %v1201, %v1217
    %v1235 = vadd.f32 %v1202, %v1218
    %v1236 = vadd.f32 %v1203, %v1219
    %v1237 = vadd.f32 %v1204, %v1220
    %v1238 = vadd.f32 %v1205, %v1221
    %v1239 = vadd.f32 %v1206, %v1222
    %v1240 = vadd.f32 %v1207, %v1223
    %v1241 = vadd.f32 %v1208, %v1224
    %v1242 = vadd.f32 %v1209, %v1225
    %v1243 = vadd.f32 %v1210, %v1226
    %v1244 = vadd.f32 %v1211, %v1227
    %v1245 = vadd.f32 %v1212, %v1228
    %v1246 = vadd.f32 %v1213, %v1229
    %v1247 = vld [vmem:[#allocation3 + $0x1210] sm:$0xff]
    %v1248 = vld [vmem:[#allocation3 + $0x1218] sm:$0xff]
    %v1249 = vld [vmem:[#allocation3 + $0x1220] sm:$0xff]
    %v1250 = vld [vmem:[#allocation3 + $0x1228] sm:$0xff]
    %v1251 = vld [vmem:[#allocation3 + $0x1230] sm:$0xff]
    %v1252 = vld [vmem:[#allocation3 + $0x1238] sm:$0xff]
    %v1253 = vld [vmem:[#allocation3 + $0x1240] sm:$0xff]
    %v1254 = vld [vmem:[#allocation3 + $0x1248] sm:$0xff]
    %v1255 = vld [vmem:[#allocation3 + $0x1250] sm:$0xff]
    %v1256 = vld [vmem:[#allocation3 + $0x1258] sm:$0xff]
    %v1257 = vld [vmem:[#allocation3 + $0x1260] sm:$0xff]
    %v1258 = vld [vmem:[#allocation3 + $0x1268] sm:$0xff]
    %v1259 = vld [vmem:[#allocation3 + $0x1270] sm:$0xff]
    %v1260 = vld [vmem:[#allocation3 + $0x1278] sm:$0xff]
    %v1261 = vld [vmem:[#allocation3 + $0x1280] sm:$0xff]
    %v1262 = vld [vmem:[#allocation3 + $0x1288] sm:$0xff]
    %v1263 = vadd.f32 %v1230, %v1229
    %v1264 = vadd.f32 %v1231, %v1247
    %v1265 = vadd.f32 %v1232, %v1248
    %v1266 = vadd.f32 %v1233, %v1249
    %v1267 = vadd.f32 %v1234, %v1250
    %v1268 = vadd.f32 %v1235, %v1251
    %v1269 = vadd.f32 %v1236, %v1252
    %v1270 = vadd.f32 %v1237, %v1253
    %v1271 = vadd.f32 %v1238, %v1254
    %v1272 = vadd.f32 %v1239, %v1255
    %v1273 = vadd.f32 %v1240, %v1256
    %v1274 = vadd.f32 %v1241, %v1257
    %v1275 = vadd.f32 %v1242, %v1258
    %v1276 = vadd.f32 %v1243, %v1259
    %v1277 = vadd.f32 %v1244, %v1260
    %v1278 = vadd.f32 %v1245, %v1261
    %v1279 = vadd.f32 %v1246, %v1262
    %v1280 = vld [vmem:[#allocation3 + $0x1290] sm:$0xff]
    %v1281 = vld [vmem:[#allocation3 + $0x1298] sm:$0xff]
    %v1282 = vld [vmem:[#allocation3 + $0x12a0] sm:$0xff]
    %v1283 = vld [vmem:[#allocation3 + $0x12a8] sm:$0xff]
    %v1284 = vld [vmem:[#allocation3 + $0x12b0] sm:$0xff]
    %v1285 = vld [vmem:[#allocation3 + $0x12b8] sm:$0xff]
    %v1286 = vld [vmem:[#allocation3 + $0x12c0] sm:$0xff]
    %v1287 = vld [vmem:[#allocation3 + $0x12c8] sm:$0xff]
    %v1288 = vld [vmem:[#allocation3 + $0x12d0] sm:$0xff]
    %v1289 = vld [vmem:[#allocation3 + $0x12d8] sm:$0xff]
    %v1290 = vld [vmem:[#allocation3 + $0x12e0] sm:$0xff]
    %v1291 = vld [vmem:[#allocation3 + $0x12e8] sm:$0xff]
    %v1292 = vld [vmem:[#allocation3 + $0x12f0] sm:$0xff]
    %v1293 = vld [vmem:[#allocation3 + $0x12f8] sm:$0xff]
    %v1294 = vld [vmem:[#allocation3 + $0x1300] sm:$0xff]
    %v1295 = vld [vmem:[#allocation3 + $0x1308] sm:$0xff]
    %v1296 = vadd.f32 %v1263, %v1262
    %v1297 = vadd.f32 %v1264, %v1280
    %v1298 = vadd.f32 %v1265, %v1281
    %v1299 = vadd.f32 %v1266, %v1282
    %v1300 = vadd.f32 %v1267, %v1283
    %v1301 = vadd.f32 %v1268, %v1284
    %v1302 = vadd.f32 %v1269, %v1285
    %v1303 = vadd.f32 %v1270, %v1286
    %v1304 = vadd.f32 %v1271, %v1287
    %v1305 = vadd.f32 %v1272, %v1288
    %v1306 = vadd.f32 %v1273, %v1289
    %v1307 = vadd.f32 %v1274, %v1290
    %v1308 = vadd.f32 %v1275, %v1291
    %v1309 = vadd.f32 %v1276, %v1292
    %v1310 = vadd.f32 %v1277, %v1293
    %v1311 = vadd.f32 %v1278, %v1294
    %v1312 = vadd.f32 %v1279, %v1295
    %v1313 = vld [vmem:[#allocation3 + $0x1310] sm:$0xff]
    %v1314 = vld [vmem:[#allocation3 + $0x1318] sm:$0xff]
    %v1315 = vld [vmem:[#allocation3 + $0x1320] sm:$0xff]
    %v1316 = vld [vmem:[#allocation3 + $0x1328] sm:$0xff]
    %v1317 = vld [vmem:[#allocation3 + $0x1330] sm:$0xff]
    %v1318 = vld [vmem:[#allocation3 + $0x1338] sm:$0xff]
    %v1319 = vld [vmem:[#allocation3 + $0x1340] sm:$0xff]
    %v1320 = vld [vmem:[#allocation3 + $0x1348] sm:$0xff]
    %v1321 = vld [vmem:[#allocation3 + $0x1350] sm:$0xff]
    %v1322 = vld [vmem:[#allocation3 + $0x1358] sm:$0xff]
    %v1323 = vld [vmem:[#allocation3 + $0x1360] sm:$0xff]
    %v1324 = vld [vmem:[#allocation3 + $0x1368] sm:$0xff]
    %v1325 = vld [vmem:[#allocation3 + $0x1370] sm:$0xff]
    %v1326 = vld [vmem:[#allocation3 + $0x1378] sm:$0xff]
    %v1327 = vld [vmem:[#allocation3 + $0x1380] sm:$0xff]
    %v1328 = vld [vmem:[#allocation3 + $0x1388] sm:$0xff]
    %v1329 = vadd.f32 %v1296, %v1295
    %v1330 = vadd.f32 %v1297, %v1313
    %v1331 = vadd.f32 %v1298, %v1314
    %v1332 = vadd.f32 %v1299, %v1315
    %v1333 = vadd.f32 %v1300, %v1316
    %v1334 = vadd.f32 %v1301, %v1317
    %v1335 = vadd.f32 %v1302, %v1318
    %v1336 = vadd.f32 %v1303, %v1319
    %v1337 = vadd.f32 %v1304, %v1320
    %v1338 = vadd.f32 %v1305, %v1321
    %v1339 = vadd.f32 %v1306, %v1322
    %v1340 = vadd.f32 %v1307, %v1323
    %v1341 = vadd.f32 %v1308, %v1324
    %v1342 = vadd.f32 %v1309, %v1325
    %v1343 = vadd.f32 %v1310, %v1326
    %v1344 = vadd.f32 %v1311, %v1327
    %v1345 = vadd.f32 %v1312, %v1328
    %v1346 = vld [vmem:[#allocation3 + $0x1390] sm:$0xff]
    %v1347 = vld [vmem:[#allocation3 + $0x1398] sm:$0xff]
    %v1348 = vld [vmem:[#allocation3 + $0x13a0] sm:$0xff]
    %v1349 = vld [vmem:[#allocation3 + $0x13a8] sm:$0xff]
    %v1350 = vld [vmem:[#allocation3 + $0x13b0] sm:$0xff]
    %v1351 = vld [vmem:[#allocation3 + $0x13b8] sm:$0xff]
    %v1352 = vld [vmem:[#allocation3 + $0x13c0] sm:$0xff]
    %v1353 = vld [vmem:[#allocation3 + $0x13c8] sm:$0xff]
    %v1354 = vld [vmem:[#allocation3 + $0x13d0] sm:$0xff]
    %v1355 = vld [vmem:[#allocation3 + $0x13d8] sm:$0xff]
    %v1356 = vld [vmem:[#allocation3 + $0x13e0] sm:$0xff]
    %v1357 = vld [vmem:[#allocation3 + $0x13e8] sm:$0xff]
    %v1358 = vld [vmem:[#allocation3 + $0x13f0] sm:$0xff]
    %v1359 = vld [vmem:[#allocation3 + $0x13f8] sm:$0xff]
    %v1360 = vld [vmem:[#allocation3 + $0x1400] sm:$0xff]
    %v1361 = vld [vmem:[#allocation3 + $0x1408] sm:$0xff]
    %v1362 = vadd.f32 %v1329, %v1328
    %v1363 = vadd.f32 %v1330, %v1346
    %v1364 = vadd.f32 %v1331, %v1347
    %v1365 = vadd.f32 %v1332, %v1348
    %v1366 = vadd.f32 %v1333, %v1349
    %v1367 = vadd.f32 %v1334, %v1350
    %v1368 = vadd.f32 %v1335, %v1351
    %v1369 = vadd.f32 %v1336, %v1352
    %v1370 = vadd.f32 %v1337, %v1353
    %v1371 = vadd.f32 %v1338, %v1354
    %v1372 = vadd.f32 %v1339, %v1355
    %v1373 = vadd.f32 %v1340, %v1356
    %v1374 = vadd.f32 %v1341, %v1357
    %v1375 = vadd.f32 %v1342, %v1358
    %v1376 = vadd.f32 %v1343, %v1359
    %v1377 = vadd.f32 %v1344, %v1360
    %v1378 = vadd.f32 %v1345, %v1361
    %v1379 = vld [vmem:[#allocation3 + $0x1410] sm:$0xff]
    %v1380 = vld [vmem:[#allocation3 + $0x1418] sm:$0xff]
    %v1381 = vld [vmem:[#allocation3 + $0x1420] sm:$0xff]
    %v1382 = vld [vmem:[#allocation3 + $0x1428] sm:$0xff]
    %v1383 = vld [vmem:[#allocation3 + $0x1430] sm:$0xff]
    %v1384 = vld [vmem:[#allocation3 + $0x1438] sm:$0xff]
    %v1385 = vld [vmem:[#allocation3 + $0x1440] sm:$0xff]
    %v1386 = vld [vmem:[#allocation3 + $0x1448] sm:$0xff]
    %v1387 = vld [vmem:[#allocation3 + $0x1450] sm:$0xff]
    %v1388 = vld [vmem:[#allocation3 + $0x1458] sm:$0xff]
    %v1389 = vld [vmem:[#allocation3 + $0x1460] sm:$0xff]
    %v1390 = vld [vmem:[#allocation3 + $0x1468] sm:$0xff]
    %v1391 = vld [vmem:[#allocation3 + $0x1470] sm:$0xff]
    %v1392 = vld [vmem:[#allocation3 + $0x1478] sm:$0xff]
    %v1393 = vld [vmem:[#allocation3 + $0x1480] sm:$0xff]
    %v1394 = vld [vmem:[#allocation3 + $0x1488] sm:$0xff]
    %v1395 = vadd.f32 %v1362, %v1361
    %v1396 = vadd.f32 %v1363, %v1379
    %v1397 = vadd.f32 %v1364, %v1380
    %v1398 = vadd.f32 %v1365, %v1381
    %v1399 = vadd.f32 %v1366, %v1382
    %v1400 = vadd.f32 %v1367, %v1383
    %v1401 = vadd.f32 %v1368, %v1384
    %v1402 = vadd.f32 %v1369, %v1385
    %v1403 = vadd.f32 %v1370, %v1386
    %v1404 = vadd.f32 %v1371, %v1387
    %v1405 = vadd.f32 %v1372, %v1388
    %v1406 = vadd.f32 %v1373, %v1389
    %v1407 = vadd.f32 %v1374, %v1390
    %v1408 = vadd.f32 %v1375, %v1391
    %v1409 = vadd.f32 %v1376, %v1392
    %v1410 = vadd.f32 %v1377, %v1393
    %v1411 = vadd.f32 %v1378, %v1394
    %v1412 = vld [vmem:[#allocation3 + $0x1490] sm:$0xff]
    %v1413 = vld [vmem:[#allocation3 + $0x1498] sm:$0xff]
    %v1414 = vld [vmem:[#allocation3 + $0x14a0] sm:$0xff]
    %v1415 = vld [vmem:[#allocation3 + $0x14a8] sm:$0xff]
    %v1416 = vld [vmem:[#allocation3 + $0x14b0] sm:$0xff]
    %v1417 = vld [vmem:[#allocation3 + $0x14b8] sm:$0xff]
    %v1418 = vld [vmem:[#allocation3 + $0x14c0] sm:$0xff]
    %v1419 = vld [vmem:[#allocation3 + $0x14c8] sm:$0xff]
    %v1420 = vld [vmem:[#allocation3 + $0x14d0] sm:$0xff]
    %v1421 = vld [vmem:[#allocation3 + $0x14d8] sm:$0xff]
    %v1422 = vld [vmem:[#allocation3 + $0x14e0] sm:$0xff]
    %v1423 = vld [vmem:[#allocation3 + $0x14e8] sm:$0xff]
    %v1424 = vld [vmem:[#allocation3 + $0x14f0] sm:$0xff]
    %v1425 = vld [vmem:[#allocation3 + $0x14f8] sm:$0xff]
    %v1426 = vld [vmem:[#allocation3 + $0x1500] sm:$0xff]
    %v1427 = vld [vmem:[#allocation3 + $0x1508] sm:$0xff]
    %v1428 = vadd.f32 %v1395, %v1394
    %v1429 = vadd.f32 %v1396, %v1412
    %v1430 = vadd.f32 %v1397, %v1413
    %v1431 = vadd.f32 %v1398, %v1414
    %v1432 = vadd.f32 %v1399, %v1415
    %v1433 = vadd.f32 %v1400, %v1416
    %v1434 = vadd.f32 %v1401, %v1417
    %v1435 = vadd.f32 %v1402, %v1418
    %v1436 = vadd.f32 %v1403, %v1419
    %v1437 = vadd.f32 %v1404, %v1420
    %v1438 = vadd.f32 %v1405, %v1421
    %v1439 = vadd.f32 %v1406, %v1422
    %v1440 = vadd.f32 %v1407, %v1423
    %v1441 = vadd.f32 %v1408, %v1424
    %v1442 = vadd.f32 %v1409, %v1425
    %v1443 = vadd.f32 %v1410, %v1426
    %v1444 = vadd.f32 %v1411, %v1427
    %v1445 = vld [vmem:[#allocation3 + $0x1510] sm:$0xff]
    %v1446 = vld [vmem:[#allocation3 + $0x1518] sm:$0xff]
    %v1447 = vld [vmem:[#allocation3 + $0x1520] sm:$0xff]
    %v1448 = vld [vmem:[#allocation3 + $0x1528] sm:$0xff]
    %v1449 = vld [vmem:[#allocation3 + $0x1530] sm:$0xff]
    %v1450 = vld [vmem:[#allocation3 + $0x1538] sm:$0xff]
    %v1451 = vld [vmem:[#allocation3 + $0x1540] sm:$0xff]
    %v1452 = vld [vmem:[#allocation3 + $0x1548] sm:$0xff]
    %v1453 = vld [vmem:[#allocation3 + $0x1550] sm:$0xff]
    %v1454 = vld [vmem:[#allocation3 + $0x1558] sm:$0xff]
    %v1455 = vld [vmem:[#allocation3 + $0x1560] sm:$0xff]
    %v1456 = vld [vmem:[#allocation3 + $0x1568] sm:$0xff]
    %v1457 = vld [vmem:[#allocation3 + $0x1570] sm:$0xff]
    %v1458 = vld [vmem:[#allocation3 + $0x1578] sm:$0xff]
    %v1459 = vld [vmem:[#allocation3 + $0x1580] sm:$0xff]
    %v1460 = vld [vmem:[#allocation3 + $0x1588] sm:$0xff]
    %v1461 = vadd.f32 %v1428, %v1427
    %v1462 = vadd.f32 %v1429, %v1445
    %v1463 = vadd.f32 %v1430, %v1446
    %v1464 = vadd.f32 %v1431, %v1447
    %v1465 = vadd.f32 %v1432, %v1448
    %v1466 = vadd.f32 %v1433, %v1449
    %v1467 = vadd.f32 %v1434, %v1450
    %v1468 = vadd.f32 %v1435, %v1451
    %v1469 = vadd.f32 %v1436, %v1452
    %v1470 = vadd.f32 %v1437, %v1453
    %v1471 = vadd.f32 %v1438, %v1454
    %v1472 = vadd.f32 %v1439, %v1455
    %v1473 = vadd.f32 %v1440, %v1456
    %v1474 = vadd.f32 %v1441, %v1457
    %v1475 = vadd.f32 %v1442, %v1458
    %v1476 = vadd.f32 %v1443, %v1459
    %v1477 = vadd.f32 %v1444, %v1460
    %v1478 = vld [vmem:[#allocation3 + $0x1590] sm:$0xff]
    %v1479 = vld [vmem:[#allocation3 + $0x1598] sm:$0xff]
    %v1480 = vld [vmem:[#allocation3 + $0x15a0] sm:$0xff]
    %v1481 = vld [vmem:[#allocation3 + $0x15a8] sm:$0xff]
    %v1482 = vld [vmem:[#allocation3 + $0x15b0] sm:$0xff]
    %v1483 = vld [vmem:[#allocation3 + $0x15b8] sm:$0xff]
    %v1484 = vld [vmem:[#allocation3 + $0x15c0] sm:$0xff]
    %v1485 = vld [vmem:[#allocation3 + $0x15c8] sm:$0xff]
    %v1486 = vld [vmem:[#allocation3 + $0x15d0] sm:$0xff]
    %v1487 = vld [vmem:[#allocation3 + $0x15d8] sm:$0xff]
    %v1488 = vld [vmem:[#allocation3 + $0x15e0] sm:$0xff]
    %v1489 = vld [vmem:[#allocation3 + $0x15e8] sm:$0xff]
    %v1490 = vld [vmem:[#allocation3 + $0x15f0] sm:$0xff]
    %v1491 = vld [vmem:[#allocation3 + $0x15f8] sm:$0xff]
    %v1492 = vld [vmem:[#allocation3 + $0x1600] sm:$0xff]
    %v1493 = vld [vmem:[#allocation3 + $0x1608] sm:$0xff]
    %v1494 = vadd.f32 %v1461, %v1460
    %v1495 = vadd.f32 %v1462, %v1478
    %v1496 = vadd.f32 %v1463, %v1479
    %v1497 = vadd.f32 %v1464, %v1480
    %v1498 = vadd.f32 %v1465, %v1481
    %v1499 = vadd.f32 %v1466, %v1482
    %v1500 = vadd.f32 %v1467, %v1483
    %v1501 = vadd.f32 %v1468, %v1484
    %v1502 = vadd.f32 %v1469, %v1485
    %v1503 = vadd.f32 %v1470, %v1486
    %v1504 = vadd.f32 %v1471, %v1487
    %v1505 = vadd.f32 %v1472, %v1488
    %v1506 = vadd.f32 %v1473, %v1489
    %v1507 = vadd.f32 %v1474, %v1490
    %v1508 = vadd.f32 %v1475, %v1491
    %v1509 = vadd.f32 %v1476, %v1492
    %v1510 = vadd.f32 %v1477, %v1493
    %v1511 = vld [vmem:[#allocation3 + $0x1610] sm:$0xff]
    %v1512 = vld [vmem:[#allocation3 + $0x1618] sm:$0xff]
    %v1513 = vld [vmem:[#allocation3 + $0x1620] sm:$0xff]
    %v1514 = vld [vmem:[#allocation3 + $0x1628] sm:$0xff]
    %v1515 = vld [vmem:[#allocation3 + $0x1630] sm:$0xff]
    %v1516 = vld [vmem:[#allocation3 + $0x1638] sm:$0xff]
    %v1517 = vld [vmem:[#allocation3 + $0x1640] sm:$0xff]
    %v1518 = vld [vmem:[#allocation3 + $0x1648] sm:$0xff]
    %v1519 = vld [vmem:[#allocation3 + $0x1650] sm:$0xff]
    %v1520 = vld [vmem:[#allocation3 + $0x1658] sm:$0xff]
    %v1521 = vld [vmem:[#allocation3 + $0x1660] sm:$0xff]
    %v1522 = vld [vmem:[#allocation3 + $0x1668] sm:$0xff]
    %v1523 = vld [vmem:[#allocation3 + $0x1670] sm:$0xff]
    %v1524 = vld [vmem:[#allocation3 + $0x1678] sm:$0xff]
    %v1525 = vld [vmem:[#allocation3 + $0x1680] sm:$0xff]
    %v1526 = vld [vmem:[#allocation3 + $0x1688] sm:$0xff]
    %v1527 = vadd.f32 %v1494, %v1493
    %v1528 = vadd.f32 %v1495, %v1511
    %v1529 = vadd.f32 %v1496, %v1512
    %v1530 = vadd.f32 %v1497, %v1513
    %v1531 = vadd.f32 %v1498, %v1514
    %v1532 = vadd.f32 %v1499, %v1515
    %v1533 = vadd.f32 %v1500, %v1516
    %v1534 = vadd.f32 %v1501, %v1517
    %v1535 = vadd.f32 %v1502, %v1518
    %v1536 = vadd.f32 %v1503, %v1519
    %v1537 = vadd.f32 %v1504, %v1520
    %v1538 = vadd.f32 %v1505, %v1521
    %v1539 = vadd.f32 %v1506, %v1522
    %v1540 = vadd.f32 %v1507, %v1523
    %v1541 = vadd.f32 %v1508, %v1524
    %v1542 = vadd.f32 %v1509, %v1525
    %v1543 = vadd.f32 %v1510, %v1526
    %v1544 = vld [vmem:[#allocation3 + $0x1690] sm:$0xff]
    %v1545 = vld [vmem:[#allocation3 + $0x1698] sm:$0xff]
    %v1546 = vld [vmem:[#allocation3 + $0x16a0] sm:$0xff]
    %v1547 = vld [vmem:[#allocation3 + $0x16a8] sm:$0xff]
    %v1548 = vld [vmem:[#allocation3 + $0x16b0] sm:$0xff]
    %v1549 = vld [vmem:[#allocation3 + $0x16b8] sm:$0xff]
    %v1550 = vld [vmem:[#allocation3 + $0x16c0] sm:$0xff]
    %v1551 = vld [vmem:[#allocation3 + $0x16c8] sm:$0xff]
    %v1552 = vld [vmem:[#allocation3 + $0x16d0] sm:$0xff]
    %v1553 = vld [vmem:[#allocation3 + $0x16d8] sm:$0xff]
    %v1554 = vld [vmem:[#allocation3 + $0x16e0] sm:$0xff]
    %v1555 = vld [vmem:[#allocation3 + $0x16e8] sm:$0xff]
    %v1556 = vld [vmem:[#allocation3 + $0x16f0] sm:$0xff]
    %v1557 = vld [vmem:[#allocation3 + $0x16f8] sm:$0xff]
    %v1558 = vld [vmem:[#allocation3 + $0x1700] sm:$0xff]
    %v1559 = vld [vmem:[#allocation3 + $0x1708] sm:$0xff]
    %v1560 = vadd.f32 %v1527, %v1526
    %v1561 = vadd.f32 %v1528, %v1544
    %v1562 = vadd.f32 %v1529, %v1545
    %v1563 = vadd.f32 %v1530, %v1546
    %v1564 = vadd.f32 %v1531, %v1547
    %v1565 = vadd.f32 %v1532, %v1548
    %v1566 = vadd.f32 %v1533, %v1549
    %v1567 = vadd.f32 %v1534, %v1550
    %v1568 = vadd.f32 %v1535, %v1551
    %v1569 = vadd.f32 %v1536, %v1552
    %v1570 = vadd.f32 %v1537, %v1553
    %v1571 = vadd.f32 %v1538, %v1554
    %v1572 = vadd.f32 %v1539, %v1555
    %v1573 = vadd.f32 %v1540, %v1556
    %v1574 = vadd.f32 %v1541, %v1557
    %v1575 = vadd.f32 %v1542, %v1558
    %v1576 = vadd.f32 %v1543, %v1559
    %v1577 = vld [vmem:[#allocation3 + $0x1710] sm:$0xff]
    %v1578 = vld [vmem:[#allocation3 + $0x1718] sm:$0xff]
    %v1579 = vld [vmem:[#allocation3 + $0x1720] sm:$0xff]
    %v1580 = vld [vmem:[#allocation3 + $0x1728] sm:$0xff]
    %v1581 = vld [vmem:[#allocation3 + $0x1730] sm:$0xff]
    %v1582 = vld [vmem:[#allocation3 + $0x1738] sm:$0xff]
    %v1583 = vld [vmem:[#allocation3 + $0x1740] sm:$0xff]
    %v1584 = vld [vmem:[#allocation3 + $0x1748] sm:$0xff]
    %v1585 = vld [vmem:[#allocation3 + $0x1750] sm:$0xff]
    %v1586 = vld [vmem:[#allocation3 + $0x1758] sm:$0xff]
    %v1587 = vld [vmem:[#allocation3 + $0x1760] sm:$0xff]
    %v1588 = vld [vmem:[#allocation3 + $0x1768] sm:$0xff]
    %v1589 = vld [vmem:[#allocation3 + $0x1770] sm:$0xff]
    %v1590 = vld [vmem:[#allocation3 + $0x1778] sm:$0xff]
    %v1591 = vld [vmem:[#allocation3 + $0x1780] sm:$0xff]
    %v1592 = vld [vmem:[#allocation3 + $0x1788] sm:$0xff]
    %v1593 = vadd.f32 %v1560, %v1559
    %v1594 = vadd.f32 %v1561, %v1577
    %v1595 = vadd.f32 %v1562, %v1578
    %v1596 = vadd.f32 %v1563, %v1579
    %v1597 = vadd.f32 %v1564, %v1580
    %v1598 = vadd.f32 %v1565, %v1581
    %v1599 = vadd.f32 %v1566, %v1582
    %v1600 = vadd.f32 %v1567, %v1583
    %v1601 = vadd.f32 %v1568, %v1584
    %v1602 = vadd.f32 %v1569, %v1585
    %v1603 = vadd.f32 %v1570, %v1586
    %v1604 = vadd.f32 %v1571, %v1587
    %v1605 = vadd.f32 %v1572, %v1588
    %v1606 = vadd.f32 %v1573, %v1589
    %v1607 = vadd.f32 %v1574, %v1590
    %v1608 = vadd.f32 %v1575, %v1591
    %v1609 = vadd.f32 %v1576, %v1592
    %v1610 = vld [vmem:[#allocation3 + $0x1790] sm:$0xff]
    %v1611 = vld [vmem:[#allocation3 + $0x1798] sm:$0xff]
    %v1612 = vld [vmem:[#allocation3 + $0x17a0] sm:$0xff]
    %v1613 = vld [vmem:[#allocation3 + $0x17a8] sm:$0xff]
    %v1614 = vld [vmem:[#allocation3 + $0x17b0] sm:$0xff]
    %v1615 = vld [vmem:[#allocation3 + $0x17b8] sm:$0xff]
    %v1616 = vld [vmem:[#allocation3 + $0x17c0] sm:$0xff]
    %v1617 = vld [vmem:[#allocation3 + $0x17c8] sm:$0xff]
    %v1618 = vld [vmem:[#allocation3 + $0x17d0] sm:$0xff]
    %v1619 = vld [vmem:[#allocation3 + $0x17d8] sm:$0xff]
    %v1620 = vld [vmem:[#allocation3 + $0x17e0] sm:$0xff]
    %v1621 = vld [vmem:[#allocation3 + $0x17e8] sm:$0xff]
    %v1622 = vld [vmem:[#allocation3 + $0x17f0] sm:$0xff]
    %v1623 = vld [vmem:[#allocation3 + $0x17f8] sm:$0xff]
    %v1624 = vld [vmem:[#allocation3 + $0x1800] sm:$0xff]
    %v1625 = vld [vmem:[#allocation3 + $0x1808] sm:$0xff]
    %v1626 = vadd.f32 %v1593, %v1592
    %v1627 = vadd.f32 %v1594, %v1610
    %v1628 = vadd.f32 %v1595, %v1611
    %v1629 = vadd.f32 %v1596, %v1612
    %v1630 = vadd.f32 %v1597, %v1613
    %v1631 = vadd.f32 %v1598, %v1614
    %v1632 = vadd.f32 %v1599, %v1615
    %v1633 = vadd.f32 %v1600, %v1616
    %v1634 = vadd.f32 %v1601, %v1617
    %v1635 = vadd.f32 %v1602, %v1618
    %v1636 = vadd.f32 %v1603, %v1619
    %v1637 = vadd.f32 %v1604, %v1620
    %v1638 = vadd.f32 %v1605, %v1621
    %v1639 = vadd.f32 %v1606, %v1622
    %v1640 = vadd.f32 %v1607, %v1623
    %v1641 = vadd.f32 %v1608, %v1624
    %v1642 = vadd.f32 %v1609, %v1625
    %v1643 = vld [vmem:[#allocation3 + $0x1810] sm:$0xff]
    %v1644 = vld [vmem:[#allocation3 + $0x1818] sm:$0xff]
    %v1645 = vld [vmem:[#allocation3 + $0x1820] sm:$0xff]
    %v1646 = vld [vmem:[#allocation3 + $0x1828] sm:$0xff]
    %v1647 = vld [vmem:[#allocation3 + $0x1830] sm:$0xff]
    %v1648 = vld [vmem:[#allocation3 + $0x1838] sm:$0xff]
    %v1649 = vld [vmem:[#allocation3 + $0x1840] sm:$0xff]
    %v1650 = vld [vmem:[#allocation3 + $0x1848] sm:$0xff]
    %v1651 = vld [vmem:[#allocation3 + $0x1850] sm:$0xff]
    %v1652 = vld [vmem:[#allocation3 + $0x1858] sm:$0xff]
    %v1653 = vld [vmem:[#allocation3 + $0x1860] sm:$0xff]
    %v1654 = vld [vmem:[#allocation3 + $0x1868] sm:$0xff]
    %v1655 = vld [vmem:[#allocation3 + $0x1870] sm:$0xff]
    %v1656 = vld [vmem:[#allocation3 + $0x1878] sm:$0xff]
    %v1657 = vld [vmem:[#allocation3 + $0x1880] sm:$0xff]
    %v1658 = vld [vmem:[#allocation3 + $0x1888] sm:$0xff]
    %v1659 = vadd.f32 %v1626, %v1625
    %v1660 = vadd.f32 %v1627, %v1643
    %v1661 = vadd.f32 %v1628, %v1644
    %v1662 = vadd.f32 %v1629, %v1645
    %v1663 = vadd.f32 %v1630, %v1646
    %v1664 = vadd.f32 %v1631, %v1647
    %v1665 = vadd.f32 %v1632, %v1648
    %v1666 = vadd.f32 %v1633, %v1649
    %v1667 = vadd.f32 %v1634, %v1650
    %v1668 = vadd.f32 %v1635, %v1651
    %v1669 = vadd.f32 %v1636, %v1652
    %v1670 = vadd.f32 %v1637, %v1653
    %v1671 = vadd.f32 %v1638, %v1654
    %v1672 = vadd.f32 %v1639, %v1655
    %v1673 = vadd.f32 %v1640, %v1656
    %v1674 = vadd.f32 %v1641, %v1657
    %v1675 = vadd.f32 %v1642, %v1658
    %v1676 = vld [vmem:[%s1] sm:$0xff]
    %v1677 = vld [vmem:[%s1 + $0x8] sm:$0xff]
    %v1678 = vld [vmem:[%s1 + $0x10] sm:$0xff]
    %v1679 = vld [vmem:[%s1 + $0x18] sm:$0xff]
    %v1680 = vld [vmem:[%s1 + $0x20] sm:$0xff]
    %v1681 = vld [vmem:[%s1 + $0x28] sm:$0xff]
    %v1682 = vld [vmem:[%s1 + $0x30] sm:$0xff]
    %v1683 = vld [vmem:[%s1 + $0x38] sm:$0xff]
    %v1684 = vld [vmem:[%s1 + $0x40] sm:$0xff]
    %v1685 = vld [vmem:[%s1 + $0x48] sm:$0xff]
    %v1686 = vld [vmem:[%s1 + $0x50] sm:$0xff]
    %v1687 = vld [vmem:[%s1 + $0x58] sm:$0xff]
    %v1688 = vld [vmem:[%s1 + $0x60] sm:$0xff]
    %v1689 = vld [vmem:[%s1 + $0x68] sm:$0xff]
    %v1690 = vld [vmem:[%s1 + $0x70] sm:$0xff]
    %v1691 = vld [vmem:[%s1 + $0x78] sm:$0xff]
    %v1692 = vld [vmem:[%s1 + $0x80] sm:$0xff]
    %v1693 = vld [vmem:[%s1 + $0x88] sm:$0xff]
    %v1694 = vld [vmem:[%s1 + $0x90] sm:$0xff]
    %v1695 = vld [vmem:[%s1 + $0x98] sm:$0xff]
    %v1696 = vld [vmem:[%s1 + $0xa0] sm:$0xff]
    %v1697 = vld [vmem:[%s1 + $0xa8] sm:$0xff]
    %v1698 = vld [vmem:[%s1 + $0xb0] sm:$0xff]
    %v1699 = vld [vmem:[%s1 + $0xb8] sm:$0xff]
    %v1700 = vld [vmem:[%s1 + $0xc0] sm:$0xff]
    %v1701 = vld [vmem:[%s1 + $0xc8] sm:$0xff]
    %v1702 = vld [vmem:[%s1 + $0xd0] sm:$0xff]
    %v1703 = vld [vmem:[%s1 + $0xd8] sm:$0xff]
    %v1704 = vld [vmem:[%s1 + $0xe0] sm:$0xff]
    %v1705 = vld [vmem:[%s1 + $0xe8] sm:$0xff]
    %v1706 = vld [vmem:[%s1 + $0xf0] sm:$0xff]
    %v1707 = vld [vmem:[%s1 + $0xf8] sm:$0xff]
    %v1708 = vld [vmem:[%s1 + $0x100] sm:$0xff]
    %v1709 = vld [vmem:[%s1 + $0x108] sm:$0xff]
    %v1710 = vld [vmem:[%s1 + $0x110] sm:$0xff]
    %v1711 = vld [vmem:[%s1 + $0x118] sm:$0xff]
    %v1712 = vld [vmem:[%s1 + $0x120] sm:$0xff]
    %v1713 = vld [vmem:[%s1 + $0x128] sm:$0xff]
    %v1714 = vld [vmem:[%s1 + $0x130] sm:$0xff]
    %v1715 = vld [vmem:[%s1 + $0x138] sm:$0xff]
    %v1716 = vld [vmem:[%s1 + $0x140] sm:$0xff]
    %v1717 = vld [vmem:[%s1 + $0x148] sm:$0xff]
    %v1718 = vld [vmem:[%s1 + $0x150] sm:$0xff]
    %v1719 = vld [vmem:[%s1 + $0x158] sm:$0xff]
    %v1720 = vld [vmem:[%s1 + $0x160] sm:$0xff]
    %v1721 = vld [vmem:[%s1 + $0x168] sm:$0xff]
    %v1722 = vld [vmem:[%s1 + $0x170] sm:$0xff]
    %v1723 = vld [vmem:[%s1 + $0x178] sm:$0xff]
    %v1724 = vld [vmem:[%s1 + $0x180] sm:$0xff]
    %v1725 = vld [vmem:[%s1 + $0x188] sm:$0xff]
    %v1726 = vld [vmem:[%s1 + $0x190] sm:$0xff]
    %v1727 = vld [vmem:[%s1 + $0x198] sm:$0xff]
    %v1728 = vld [vmem:[%s1 + $0x1a0] sm:$0xff]
    %v1729 = vld [vmem:[%s1 + $0x1a8] sm:$0xff]
    %v1730 = vld [vmem:[%s1 + $0x1b0] sm:$0xff]
    %v1731 = vld [vmem:[%s1 + $0x1b8] sm:$0xff]
    %v1732 = vld [vmem:[%s1 + $0x1c0] sm:$0xff]
    %v1733 = vld [vmem:[%s1 + $0x1c8] sm:$0xff]
    %v1734 = vld [vmem:[%s1 + $0x1d0] sm:$0xff]
    %v1735 = vld [vmem:[%s1 + $0x1d8] sm:$0xff]
    %v1736 = vld [vmem:[%s1 + $0x1e0] sm:$0xff]
    %v1737 = vld [vmem:[%s1 + $0x1e8] sm:$0xff]
    %v1738 = vld [vmem:[%s1 + $0x1f0] sm:$0xff]
    %v1739 = vld [vmem:[%s1 + $0x1f8] sm:$0xff]
    %v1740 = vld [vmem:[%s1 + $0x200] sm:$0xff]
    %v1741 = vld [vmem:[%s1 + $0x208] sm:$0xff]
    %v1742 = vld [vmem:[%s1 + $0x210] sm:$0xff]
    %v1743 = vld [vmem:[%s1 + $0x218] sm:$0xff]
    %v1744 = vld [vmem:[%s1 + $0x220] sm:$0xff]
    %v1745 = vld [vmem:[%s1 + $0x228] sm:$0xff]
    %v1746 = vld [vmem:[%s1 + $0x230] sm:$0xff]
    %v1747 = vld [vmem:[%s1 + $0x238] sm:$0xff]
    %v1748 = vld [vmem:[%s1 + $0x240] sm:$0xff]
    %v1749 = vld [vmem:[%s1 + $0x248] sm:$0xff]
    %v1750 = vld [vmem:[%s1 + $0x250] sm:$0xff]
    %v1751 = vld [vmem:[%s1 + $0x258] sm:$0xff]
    %v1752 = vld [vmem:[%s1 + $0x260] sm:$0xff]
    %v1753 = vld [vmem:[%s1 + $0x268] sm:$0xff]
    %v1754 = vld [vmem:[%s1 + $0x270] sm:$0xff]
    %v1755 = vld [vmem:[%s1 + $0x278] sm:$0xff]
    %v1756 = vld [vmem:[%s1 + $0x280] sm:$0xff]
    %v1757 = vld [vmem:[%s1 + $0x288] sm:$0xff]
    %v1758 = vld [vmem:[%s1 + $0x290] sm:$0xff]
    %v1759 = vld [vmem:[%s1 + $0x298] sm:$0xff]
    %v1760 = vld [vmem:[%s1 + $0x2a0] sm:$0xff]
    %v1761 = vld [vmem:[%s1 + $0x2a8] sm:$0xff]
    %v1762 = vld [vmem:[%s1 + $0x2b0] sm:$0xff]
    %v1763 = vld [vmem:[%s1 + $0x2b8] sm:$0xff]
    %v1764 = vld [vmem:[%s1 + $0x2c0] sm:$0xff]
    %v1765 = vld [vmem:[%s1 + $0x2c8] sm:$0xff]
    %v1766 = vld [vmem:[%s1 + $0x2d0] sm:$0xff]
    %v1767 = vld [vmem:[%s1 + $0x2d8] sm:$0xff]
    %v1768 = vld [vmem:[%s1 + $0x2e0] sm:$0xff]
    %v1769 = vld [vmem:[%s1 + $0x2e8] sm:$0xff]
    %v1770 = vld [vmem:[%s1 + $0x2f0] sm:$0xff]
    %v1771 = vld [vmem:[%s1 + $0x2f8] sm:$0xff]
    %v1772 = vld [vmem:[%s1 + $0x300] sm:$0xff]
    %v1773 = vld [vmem:[%s1 + $0x308] sm:$0xff]
    %v1774 = vld [vmem:[%s1 + $0x310] sm:$0xff]
    %v1775 = vld [vmem:[%s1 + $0x318] sm:$0xff]
    %v1776 = vld [vmem:[%s1 + $0x320] sm:$0xff]
    %v1777 = vld [vmem:[%s1 + $0x328] sm:$0xff]
    %v1778 = vld [vmem:[%s1 + $0x330] sm:$0xff]
    %v1779 = vld [vmem:[%s1 + $0x338] sm:$0xff]
    %v1780 = vld [vmem:[%s1 + $0x340] sm:$0xff]
    %v1781 = vld [vmem:[%s1 + $0x348] sm:$0xff]
    %v1782 = vld [vmem:[%s1 + $0x350] sm:$0xff]
    %v1783 = vld [vmem:[%s1 + $0x358] sm:$0xff]
    %v1784 = vld [vmem:[%s1 + $0x360] sm:$0xff]
    %v1785 = vld [vmem:[%s1 + $0x368] sm:$0xff]
    %v1786 = vld [vmem:[%s1 + $0x370] sm:$0xff]
    %v1787 = vld [vmem:[%s1 + $0x378] sm:$0xff]
    %v1788 = vld [vmem:[%s1 + $0x380] sm:$0xff]
    %v1789 = vld [vmem:[%s1 + $0x388] sm:$0xff]
    %v1790 = vld [vmem:[%s1 + $0x390] sm:$0xff]
    %v1791 = vld [vmem:[%s1 + $0x398] sm:$0xff]
    %v1792 = vld [vmem:[%s1 + $0x3a0] sm:$0xff]
    %v1793 = vld [vmem:[%s1 + $0x3a8] sm:$0xff]
    %v1794 = vld [vmem:[%s1 + $0x3b0] sm:$0xff]
    %v1795 = vld [vmem:[%s1 + $0x3b8] sm:$0xff]
    %v1796 = vld [vmem:[%s1 + $0x3c0] sm:$0xff]
    %v1797 = vld [vmem:[%s1 + $0x3c8] sm:$0xff]
    %v1798 = vld [vmem:[%s1 + $0x3d0] sm:$0xff]
    %v1799 = vld [vmem:[%s1 + $0x3d8] sm:$0xff]
    %v1800 = vld [vmem:[%s1 + $0x3e0] sm:$0xff]
    %v1801 = vld [vmem:[%s1 + $0x3e8] sm:$0xff]
    %v1802 = vld [vmem:[%s1 + $0x3f0] sm:$0xff]
    %v1803 = vld [vmem:[%s1 + $0x3f8] sm:$0xff]
    %v1804 = vld [vmem:[%s1 + $0x400] sm:$0xff]
    %v1805 = vld [vmem:[%s1 + $0x408] sm:$0xff]
    %v1806 = vld [vmem:[%s1 + $0x410] sm:$0xff]
    %v1807 = vld [vmem:[%s1 + $0x418] sm:$0xff]
    %v1808 = vld [vmem:[%s1 + $0x420] sm:$0xff]
    %v1809 = vld [vmem:[%s1 + $0x428] sm:$0xff]
    %v1810 = vld [vmem:[%s1 + $0x430] sm:$0xff]
    %v1811 = vld [vmem:[%s1 + $0x438] sm:$0xff]
    %v1812 = vld [vmem:[%s1 + $0x440] sm:$0xff]
    %v1813 = vld [vmem:[%s1 + $0x448] sm:$0xff]
    %v1814 = vld [vmem:[%s1 + $0x450] sm:$0xff]
    %v1815 = vld [vmem:[%s1 + $0x458] sm:$0xff]
    %v1816 = vld [vmem:[%s1 + $0x460] sm:$0xff]
    %v1817 = vld [vmem:[%s1 + $0x468] sm:$0xff]
    %v1818 = vld [vmem:[%s1 + $0x470] sm:$0xff]
    %v1819 = vld [vmem:[%s1 + $0x478] sm:$0xff]
    %v1820 = vld [vmem:[%s1 + $0x480] sm:$0xff]
    %v1821 = vld [vmem:[%s1 + $0x488] sm:$0xff]
    %v1822 = vld [vmem:[%s1 + $0x490] sm:$0xff]
    %v1823 = vld [vmem:[%s1 + $0x498] sm:$0xff]
    %v1824 = vld [vmem:[%s1 + $0x4a0] sm:$0xff]
    %v1825 = vld [vmem:[%s1 + $0x4a8] sm:$0xff]
    %v1826 = vld [vmem:[%s1 + $0x4b0] sm:$0xff]
    %v1827 = vld [vmem:[%s1 + $0x4b8] sm:$0xff]
    %v1828 = vld [vmem:[%s1 + $0x4c0] sm:$0xff]
    %v1829 = vld [vmem:[%s1 + $0x4c8] sm:$0xff]
    %v1830 = vld [vmem:[%s1 + $0x4d0] sm:$0xff]
    %v1831 = vld [vmem:[%s1 + $0x4d8] sm:$0xff]
    %v1832 = vld [vmem:[%s1 + $0x4e0] sm:$0xff]
    %v1833 = vld [vmem:[%s1 + $0x4e8] sm:$0xff]
    %v1834 = vld [vmem:[%s1 + $0x4f0] sm:$0xff]
    %v1835 = vld [vmem:[%s1 + $0x4f8] sm:$0xff]
    %v1836 = vld [vmem:[%s1 + $0x500] sm:$0xff]
    %v1837 = vld [vmem:[%s1 + $0x508] sm:$0xff]
    %v1838 = vld [vmem:[%s1 + $0x510] sm:$0xff]
    %v1839 = vld [vmem:[%s1 + $0x518] sm:$0xff]
    %v1840 = vld [vmem:[%s1 + $0x520] sm:$0xff]
    %v1841 = vld [vmem:[%s1 + $0x528] sm:$0xff]
    %v1842 = vld [vmem:[%s1 + $0x530] sm:$0xff]
    %v1843 = vld [vmem:[%s1 + $0x538] sm:$0xff]
    %v1844 = vld [vmem:[%s1 + $0x540] sm:$0xff]
    %v1845 = vld [vmem:[%s1 + $0x548] sm:$0xff]
    %v1846 = vld [vmem:[%s1 + $0x550] sm:$0xff]
    %v1847 = vld [vmem:[%s1 + $0x558] sm:$0xff]
    %v1848 = vld [vmem:[%s1 + $0x560] sm:$0xff]
    %v1849 = vld [vmem:[%s1 + $0x568] sm:$0xff]
    %v1850 = vld [vmem:[%s1 + $0x570] sm:$0xff]
    %v1851 = vld [vmem:[%s1 + $0x578] sm:$0xff]
    %v1852 = vld [vmem:[%s1 + $0x580] sm:$0xff]
    %v1853 = vld [vmem:[%s1 + $0x588] sm:$0xff]
    %v1854 = vld [vmem:[%s1 + $0x590] sm:$0xff]
    %v1855 = vld [vmem:[%s1 + $0x598] sm:$0xff]
    %v1856 = vld [vmem:[%s1 + $0x5a0] sm:$0xff]
    %v1857 = vld [vmem:[%s1 + $0x5a8] sm:$0xff]
    %v1858 = vld [vmem:[%s1 + $0x5b0] sm:$0xff]
    %v1859 = vld [vmem:[%s1 + $0x5b8] sm:$0xff]
    %v1860 = vld [vmem:[%s1 + $0x5c0] sm:$0xff]
    %v1861 = vld [vmem:[%s1 + $0x5c8] sm:$0xff]
    %v1862 = vld [vmem:[%s1 + $0x5d0] sm:$0xff]
    %v1863 = vld [vmem:[%s1 + $0x5d8] sm:$0xff]
    %v1864 = vld [vmem:[%s1 + $0x5e0] sm:$0xff]
    %v1865 = vld [vmem:[%s1 + $0x5e8] sm:$0xff]
    %v1866 = vld [vmem:[%s1 + $0x5f0] sm:$0xff]
    %v1867 = vld [vmem:[%s1 + $0x5f8] sm:$0xff]
    %v1868 = vld [vmem:[%s1 + $0x600] sm:$0xff]
    %v1869 = vld [vmem:[%s1 + $0x608] sm:$0xff]
    %v1870 = vld [vmem:[%s1 + $0x610] sm:$0xff]
    %v1871 = vld [vmem:[%s1 + $0x618] sm:$0xff]
    %v1872 = vld [vmem:[%s1 + $0x620] sm:$0xff]
    %v1873 = vld [vmem:[%s1 + $0x628] sm:$0xff]
    %v1874 = vld [vmem:[%s1 + $0x630] sm:$0xff]
    %v1875 = vld [vmem:[%s1 + $0x638] sm:$0xff]
    %v1876 = vld [vmem:[%s1 + $0x640] sm:$0xff]
    %v1877 = vld [vmem:[%s1 + $0x648] sm:$0xff]
    %v1878 = vld [vmem:[%s1 + $0x650] sm:$0xff]
    %v1879 = vld [vmem:[%s1 + $0x658] sm:$0xff]
    %v1880 = vld [vmem:[%s1 + $0x660] sm:$0xff]
    %v1881 = vld [vmem:[%s1 + $0x668] sm:$0xff]
    %v1882 = vld [vmem:[%s1 + $0x670] sm:$0xff]
    %v1883 = vld [vmem:[%s1 + $0x678] sm:$0xff]
    %v1884 = vld [vmem:[%s1 + $0x680] sm:$0xff]
    %v1885 = vld [vmem:[%s1 + $0x688] sm:$0xff]
    %v1886 = vld [vmem:[%s1 + $0x690] sm:$0xff]
    %v1887 = vld [vmem:[%s1 + $0x698] sm:$0xff]
    %v1888 = vld [vmem:[%s1 + $0x6a0] sm:$0xff]
    %v1889 = vld [vmem:[%s1 + $0x6a8] sm:$0xff]
    %v1890 = vld [vmem:[%s1 + $0x6b0] sm:$0xff]
    %v1891 = vld [vmem:[%s1 + $0x6b8] sm:$0xff]
    %v1892 = vld [vmem:[%s1 + $0x6c0] sm:$0xff]
    %v1893 = vld [vmem:[%s1 + $0x6c8] sm:$0xff]
    %v1894 = vld [vmem:[%s1 + $0x6d0] sm:$0xff]
    %v1895 = vld [vmem:[%s1 + $0x6d8] sm:$0xff]
    %v1896 = vld [vmem:[%s1 + $0x6e0] sm:$0xff]
    %v1897 = vld [vmem:[%s1 + $0x6e8] sm:$0xff]
    %v1898 = vld [vmem:[%s1 + $0x6f0] sm:$0xff]
    %v1899 = vld [vmem:[%s1 + $0x6f8] sm:$0xff]
    %v1900 = vld [vmem:[%s1 + $0x700] sm:$0xff]
    %v1901 = vld [vmem:[%s1 + $0x708] sm:$0xff]
    %v1902 = vld [vmem:[%s1 + $0x710] sm:$0xff]
    %v1903 = vld [vmem:[%s1 + $0x718] sm:$0xff]
    %v1904 = vld [vmem:[%s1 + $0x720] sm:$0xff]
    %v1905 = vld [vmem:[%s1 + $0x728] sm:$0xff]
    %v1906 = vld [vmem:[%s1 + $0x730] sm:$0xff]
    %v1907 = vld [vmem:[%s1 + $0x738] sm:$0xff]
    %v1908 = vld [vmem:[%s1 + $0x740] sm:$0xff]
    %v1909 = vld [vmem:[%s1 + $0x748] sm:$0xff]
    %v1910 = vld [vmem:[%s1 + $0x750] sm:$0xff]
    %v1911 = vld [vmem:[%s1 + $0x758] sm:$0xff]
    %v1912 = vld [vmem:[%s1 + $0x760] sm:$0xff]
    %v1913 = vld [vmem:[%s1 + $0x768] sm:$0xff]
    %v1914 = vld [vmem:[%s1 + $0x770] sm:$0xff]
    %v1915 = vld [vmem:[%s1 + $0x778] sm:$0xff]
    %v1916 = vld [vmem:[%s1 + $0x780] sm:$0xff]
    %v1917 = vld [vmem:[%s1 + $0x788] sm:$0xff]
    %v1918 = vld [vmem:[%s1 + $0x790] sm:$0xff]
    %v1919 = vld [vmem:[%s1 + $0x798] sm:$0xff]
    %v1920 = vld [vmem:[%s1 + $0x7a0] sm:$0xff]
    %v1921 = vld [vmem:[%s1 + $0x7a8] sm:$0xff]
    %v1922 = vld [vmem:[%s1 + $0x7b0] sm:$0xff]
    %v1923 = vld [vmem:[%s1 + $0x7b8] sm:$0xff]
    %v1924 = vld [vmem:[%s1 + $0x7c0] sm:$0xff]
    %v1925 = vld [vmem:[%s1 + $0x7c8] sm:$0xff]
    %v1926 = vld [vmem:[%s1 + $0x7d0] sm:$0xff]
    %v1927 = vld [vmem:[%s1 + $0x7d8] sm:$0xff]
    %v1928 = vld [vmem:[%s1 + $0x7e0] sm:$0xff]
    %v1929 = vld [vmem:[%s1 + $0x7e8] sm:$0xff]
    %v1930 = vld [vmem:[%s1 + $0x7f0] sm:$0xff]
    %v1931 = vld [vmem:[%s1 + $0x7f8] sm:$0xff]
    %1949 = vrot.lane.b32.xlu0 %v1659, 106
    %v1950 = vpop.permute.xlu0 %1949
    %1951 = vrot.lane.b32.xlu0 %v1660, 106
    %v1952 = vpop.permute.xlu0 %1951
    %1953 = vrot.lane.b32.xlu0 %v1661, 106
    %v1954 = vpop.permute.xlu0 %1953
    %1955 = vrot.lane.b32.xlu0 %v1662, 106
    %v1956 = vpop.permute.xlu0 %1955
    %1957 = vrot.lane.b32.xlu0 %v1663, 106
    %v1958 = vpop.permute.xlu0 %1957
    %1959 = vrot.lane.b32.xlu0 %v1664, 106
    %v1960 = vpop.permute.xlu0 %1959
    %1961 = vrot.lane.b32.xlu0 %v1665, 106
    %v1962 = vpop.permute.xlu0 %1961
    %1963 = vrot.lane.b32.xlu0 %v1666, 106
    %v1964 = vpop.permute.xlu0 %1963
    %1965 = vrot.lane.b32.xlu0 %v1667, 106
    %v1966 = vpop.permute.xlu0 %1965
    %1967 = vrot.lane.b32.xlu0 %v1668, 106
    %v1968 = vpop.permute.xlu0 %1967
    %1969 = vrot.lane.b32.xlu0 %v1669, 106
    %v1970 = vpop.permute.xlu0 %1969
    %1971 = vrot.lane.b32.xlu0 %v1670, 106
    %v1972 = vpop.permute.xlu0 %1971
    %1973 = vrot.lane.b32.xlu0 %v1671, 106
    %v1974 = vpop.permute.xlu0 %1973
    %1975 = vrot.lane.b32.xlu0 %v1672, 106
    %v1976 = vpop.permute.xlu0 %1975
    %1977 = vrot.lane.b32.xlu0 %v1673, 106
    %v1978 = vpop.permute.xlu0 %1977
    %1979 = vrot.lane.b32.xlu0 %v1674, 106
    %v1980 = vpop.permute.xlu0 %1979
    %1981 = vrot.lane.b32.xlu0 %v1675, 106
    %v1982 = vpop.permute.xlu0 %1981
    %vm1983 = vcmask 867328
    %v1984 = vsel %vm1983, %v1950, %v1952
    %v1985 = vsel %vm1983, %v1952, %v1954
    %v1986 = vsel %vm1983, %v1954, %v1956
    %v1987 = vsel %vm1983, %v1956, %v1958
    %v1988 = vsel %vm1983, %v1958, %v1960
    %v1989 = vsel %vm1983, %v1960, %v1962
    %v1990 = vsel %vm1983, %v1962, %v1964
    %v1991 = vsel %vm1983, %v1964, %v1966
    %v1992 = vsel %vm1983, %v1966, %v1968
    %v1993 = vsel %vm1983, %v1968, %v1970
    %v1994 = vsel %vm1983, %v1970, %v1972
    %v1995 = vsel %vm1983, %v1972, %v1974
    %v1996 = vsel %vm1983, %v1974, %v1976
    %v1997 = vsel %vm1983, %v1976, %v1978
    %v1998 = vsel %vm1983, %v1978, %v1980
    %v1999 = vsel %vm1983, %v1980, %v1982
    %2016 = vmatpush.msra.mxu0 %v1691
    %2017 = vmatpush.msra.mxu0 %v1690
    %2018 = vmatpush.msra.mxu0 %v1689
    %2019 = vmatpush.msra.mxu0 %v1688
    %2020 = vmatpush.msra.mxu0 %v1687
    %2021 = vmatpush.msra.mxu0 %v1686
    %2022 = vmatpush.msra.mxu0 %v1685
    %2023 = vmatpush.msra.mxu0 %v1684
    %2024 = vmatpush.msra.mxu0 %v1683
    %2025 = vmatpush.msra.mxu0 %v1682
    %2026 = vmatpush.msra.mxu0 %v1681
    %2027 = vmatpush.msra.mxu0 %v1680
    %2028 = vmatpush.msra.mxu0 %v1679
    %2029 = vmatpush.msra.mxu0 %v1678
    %2030 = vmatpush.msra.mxu0 %v1677
    %2031 = vmatpush.msra.mxu0 %v1676
    %2032 = vmatmul.f32.gmra.mxu0 %v1984
    %v2033 = vpop.f32.mrf.mxu0
    %v2034 = vadd.f32 0.0, %v2033
    %2035 = vdwg.mxu0
    %2036 = vmatpush.msra.mxu0 %v1707
    %2037 = vmatpush.msra.mxu0 %v1706
    %2038 = vmatpush.msra.mxu0 %v1705
    %2039 = vmatpush.msra.mxu0 %v1704
    %2040 = vmatpush.msra.mxu0 %v1703
    %2041 = vmatpush.msra.mxu0 %v1702
    %2042 = vmatpush.msra.mxu0 %v1701
    %2043 = vmatpush.msra.mxu0 %v1700
    %2044 = vmatpush.msra.mxu0 %v1699
    %2045 = vmatpush.msra.mxu0 %v1698
    %2046 = vmatpush.msra.mxu0 %v1697
    %2047 = vmatpush.msra.mxu0 %v1696
    %2048 = vmatpush.msra.mxu0 %v1695
    %2049 = vmatpush.msra.mxu0 %v1694
    %2050 = vmatpush.msra.mxu0 %v1693
    %2051 = vmatpush.msra.mxu0 %v1692
    %2052 = vmatmul.f32.gmra.mxu0 %v1985
    %v2053 = vpop.f32.mrf.mxu0
    %v2054 = vadd.f32 %v2034, %v2053
    %2055 = vdwg.mxu0
    %2056 = vmatpush.msra.mxu0 %v1723
    %2057 = vmatpush.msra.mxu0 %v1722
    %2058 = vmatpush.msra.mxu0 %v1721
    %2059 = vmatpush.msra.mxu0 %v1720
    %2060 = vmatpush.msra.mxu0 %v1719
    %2061 = vmatpush.msra.mxu0 %v1718
    %2062 = vmatpush.msra.mxu0 %v1717
    %2063 = vmatpush.msra.mxu0 %v1716
    %2064 = vmatpush.msra.mxu0 %v1715
    %2065 = vmatpush.msra.mxu0 %v1714
    %2066 = vmatpush.msra.mxu0 %v1713
    %2067 = vmatpush.msra.mxu0 %v1712
    %2068 = vmatpush.msra.mxu0 %v1711
    %2069 = vmatpush.msra.mxu0 %v1710
    %2070 = vmatpush.msra.mxu0 %v1709
    %2071 = vmatpush.msra.mxu0 %v1708
    %2072 = vmatmul.f32.gmra.mxu0 %v1986
    %v2073 = vpop.f32.mrf.mxu0
    %v2074 = vadd.f32 %v2054, %v2073
    %2075 = vdwg.mxu0
    %2076 = vmatpush.msra.mxu0 %v1739
    %2077 = vmatpush.msra.mxu0 %v1738
    %2078 = vmatpush.msra.mxu0 %v1737
    %2079 = vmatpush.msra.mxu0 %v1736
    %2080 = vmatpush.msra.mxu0 %v1735
    %2081 = vmatpush.msra.mxu0 %v1734
    %2082 = vmatpush.msra.mxu0 %v1733
    %2083 = vmatpush.msra.mxu0 %v1732
    %2084 = vmatpush.msra.mxu0 %v1731
    %2085 = vmatpush.msra.mxu0 %v1730
    %2086 = vmatpush.msra.mxu0 %v1729
    %2087 = vmatpush.msra.mxu0 %v1728
    %2088 = vmatpush.msra.mxu0 %v1727
    %2089 = vmatpush.msra.mxu0 %v1726
    %2090 = vmatpush.msra.mxu0 %v1725
    %2091 = vmatpush.msra.mxu0 %v1724
    %2092 = vmatmul.f32.gmra.mxu0 %v1987
    %v2093 = vpop.f32.mrf.mxu0
    %v2094 = vadd.f32 %v2074, %v2093
    %2095 = vdwg.mxu0
    %2096 = vmatpush.msra.mxu0 %v1755
    %2097 = vmatpush.msra.mxu0 %v1754
    %2098 = vmatpush.msra.mxu0 %v1753
    %2099 = vmatpush.msra.mxu0 %v1752
    %2100 = vmatpush.msra.mxu0 %v1751
    %2101 = vmatpush.msra.mxu0 %v1750
    %2102 = vmatpush.msra.mxu0 %v1749
    %2103 = vmatpush.msra.mxu0 %v1748
    %2104 = vmatpush.msra.mxu0 %v1747
    %2105 = vmatpush.msra.mxu0 %v1746
    %2106 = vmatpush.msra.mxu0 %v1745
    %2107 = vmatpush.msra.mxu0 %v1744
    %2108 = vmatpush.msra.mxu0 %v1743
    %2109 = vmatpush.msra.mxu0 %v1742
    %2110 = vmatpush.msra.mxu0 %v1741
    %2111 = vmatpush.msra.mxu0 %v1740
    %2112 = vmatmul.f32.gmra.mxu0 %v1988
    %v2113 = vpop.f32.mrf.mxu0
    %v2114 = vadd.f32 %v2094, %v2113
    %2115 = vdwg.mxu0
    %2116 = vmatpush.msra.mxu0 %v1771
    %2117 = vmatpush.msra.mxu0 %v1770
    %2118 = vmatpush.msra.mxu0 %v1769
    %2119 = vmatpush.msra.mxu0 %v1768
    %2120 = vmatpush.msra.mxu0 %v1767
    %2121 = vmatpush.msra.mxu0 %v1766
    %2122 = vmatpush.msra.mxu0 %v1765
    %2123 = vmatpush.msra.mxu0 %v1764
    %2124 = vmatpush.msra.mxu0 %v1763
    %2125 = vmatpush.msra.mxu0 %v1762
    %2126 = vmatpush.msra.mxu0 %v1761
    %2127 = vmatpush.msra.mxu0 %v1760
    %2128 = vmatpush.msra.mxu0 %v1759
    %2129 = vmatpush.msra.mxu0 %v1758
    %2130 = vmatpush.msra.mxu0 %v1757
    %2131 = vmatpush.msra.mxu0 %v1756
    %2132 = vmatmul.f32.gmra.mxu0 %v1989
    %v2133 = vpop.f32.mrf.mxu0
    %v2134 = vadd.f32 %v2114, %v2133
    %2135 = vdwg.mxu0
    %2136 = vmatpush.msra.mxu0 %v1787
    %2137 = vmatpush.msra.mxu0 %v1786
    %2138 = vmatpush.msra.mxu0 %v1785
    %2139 = vmatpush.msra.mxu0 %v1784
    %2140 = vmatpush.msra.mxu0 %v1783
    %2141 = vmatpush.msra.mxu0 %v1782
    %2142 = vmatpush.msra.mxu0 %v1781
    %2143 = vmatpush.msra.mxu0 %v1780
    %2144 = vmatpush.msra.mxu0 %v1779
    %2145 = vmatpush.msra.mxu0 %v1778
    %2146 = vmatpush.msra.mxu0 %v1777
    %2147 = vmatpush.msra.mxu0 %v1776
    %2148 = vmatpush.msra.mxu0 %v1775
    %2149 = vmatpush.msra.mxu0 %v1774
    %2150 = vmatpush.msra.mxu0 %v1773
    %2151 = vmatpush.msra.mxu0 %v1772
    %2152 = vmatmul.f32.gmra.mxu0 %v1990
    %v2153 = vpop.f32.mrf.mxu0
    %v2154 = vadd.f32 %v2134, %v2153
    %2155 = vdwg.mxu0
    %2156 = vmatpush.msra.mxu0 %v1803
    %2157 = vmatpush.msra.mxu0 %v1802
    %2158 = vmatpush.msra.mxu0 %v1801
    %2159 = vmatpush.msra.mxu0 %v1800
    %2160 = vmatpush.msra.mxu0 %v1799
    %2161 = vmatpush.msra.mxu0 %v1798
    %2162 = vmatpush.msra.mxu0 %v1797
    %2163 = vmatpush.msra.mxu0 %v1796
    %2164 = vmatpush.msra.mxu0 %v1795
    %2165 = vmatpush.msra.mxu0 %v1794
    %2166 = vmatpush.msra.mxu0 %v1793
    %2167 = vmatpush.msra.mxu0 %v1792
    %2168 = vmatpush.msra.mxu0 %v1791
    %2169 = vmatpush.msra.mxu0 %v1790
    %2170 = vmatpush.msra.mxu0 %v1789
    %2171 = vmatpush.msra.mxu0 %v1788
    %2172 = vmatmul.f32.gmra.mxu0 %v1991
    %v2173 = vpop.f32.mrf.mxu0
    %v2174 = vadd.f32 %v2154, %v2173
    %2175 = vdwg.mxu0
    %2176 = vmatpush.msra.mxu0 %v1819
    %2177 = vmatpush.msra.mxu0 %v1818
    %2178 = vmatpush.msra.mxu0 %v1817
    %2179 = vmatpush.msra.mxu0 %v1816
    %2180 = vmatpush.msra.mxu0 %v1815
    %2181 = vmatpush.msra.mxu0 %v1814
    %2182 = vmatpush.msra.mxu0 %v1813
    %2183 = vmatpush.msra.mxu0 %v1812
    %2184 = vmatpush.msra.mxu0 %v1811
    %2185 = vmatpush.msra.mxu0 %v1810
    %2186 = vmatpush.msra.mxu0 %v1809
    %2187 = vmatpush.msra.mxu0 %v1808
    %2188 = vmatpush.msra.mxu0 %v1807
    %2189 = vmatpush.msra.mxu0 %v1806
    %2190 = vmatpush.msra.mxu0 %v1805
    %2191 = vmatpush.msra.mxu0 %v1804
    %2192 = vmatmul.f32.gmra.mxu0 %v1992
    %v2193 = vpop.f32.mrf.mxu0
    %v2194 = vadd.f32 %v2174, %v2193
    %2195 = vdwg.mxu0
    %2196 = vmatpush.msra.mxu0 %v1835
    %2197 = vmatpush.msra.mxu0 %v1834
    %2198 = vmatpush.msra.mxu0 %v1833
    %2199 = vmatpush.msra.mxu0 %v1832
    %2200 = vmatpush.msra.mxu0 %v1831
    %2201 = vmatpush.msra.mxu0 %v1830
    %2202 = vmatpush.msra.mxu0 %v1829
    %2203 = vmatpush.msra.mxu0 %v1828
    %2204 = vmatpush.msra.mxu0 %v1827
    %2205 = vmatpush.msra.mxu0 %v1826
    %2206 = vmatpush.msra.mxu0 %v1825
    %2207 = vmatpush.msra.mxu0 %v1824
    %2208 = vmatpush.msra.mxu0 %v1823
    %2209 = vmatpush.msra.mxu0 %v1822
    %2210 = vmatpush.msra.mxu0 %v1821
    %2211 = vmatpush.msra.mxu0 %v1820
    %2212 = vmatmul.f32.gmra.mxu0 %v1993
    %v2213 = vpop.f32.mrf.mxu0
    %v2214 = vadd.f32 %v2194, %v2213
    %2215 = vdwg.mxu0
    %2216 = vmatpush.msra.mxu0 %v1851
    %2217 = vmatpush.msra.mxu0 %v1850
    %2218 = vmatpush.msra.mxu0 %v1849
    %2219 = vmatpush.msra.mxu0 %v1848
    %2220 = vmatpush.msra.mxu0 %v1847
    %2221 = vmatpush.msra.mxu0 %v1846
    %2222 = vmatpush.msra.mxu0 %v1845
    %2223 = vmatpush.msra.mxu0 %v1844
    %2224 = vmatpush.msra.mxu0 %v1843
    %2225 = vmatpush.msra.mxu0 %v1842
    %2226 = vmatpush.msra.mxu0 %v1841
    %2227 = vmatpush.msra.mxu0 %v1840
    %2228 = vmatpush.msra.mxu0 %v1839
    %2229 = vmatpush.msra.mxu0 %v1838
    %2230 = vmatpush.msra.mxu0 %v1837
    %2231 = vmatpush.msra.mxu0 %v1836
    %2232 = vmatmul.f32.gmra.mxu0 %v1994
    %v2233 = vpop.f32.mrf.mxu0
    %v2234 = vadd.f32 %v2214, %v2233
    %2235 = vdwg.mxu0
    %2236 = vmatpush.msra.mxu0 %v1867
    %2237 = vmatpush.msra.mxu0 %v1866
    %2238 = vmatpush.msra.mxu0 %v1865
    %2239 = vmatpush.msra.mxu0 %v1864
    %2240 = vmatpush.msra.mxu0 %v1863
    %2241 = vmatpush.msra.mxu0 %v1862
    %2242 = vmatpush.msra.mxu0 %v1861
    %2243 = vmatpush.msra.mxu0 %v1860
    %2244 = vmatpush.msra.mxu0 %v1859
    %2245 = vmatpush.msra.mxu0 %v1858
    %2246 = vmatpush.msra.mxu0 %v1857
    %2247 = vmatpush.msra.mxu0 %v1856
    %2248 = vmatpush.msra.mxu0 %v1855
    %2249 = vmatpush.msra.mxu0 %v1854
    %2250 = vmatpush.msra.mxu0 %v1853
    %2251 = vmatpush.msra.mxu0 %v1852
    %2252 = vmatmul.f32.gmra.mxu0 %v1995
    %v2253 = vpop.f32.mrf.mxu0
    %v2254 = vadd.f32 %v2234, %v2253
    %2255 = vdwg.mxu0
    %2256 = vmatpush.msra.mxu0 %v1883
    %2257 = vmatpush.msra.mxu0 %v1882
    %2258 = vmatpush.msra.mxu0 %v1881
    %2259 = vmatpush.msra.mxu0 %v1880
    %2260 = vmatpush.msra.mxu0 %v1879
    %2261 = vmatpush.msra.mxu0 %v1878
    %2262 = vmatpush.msra.mxu0 %v1877
    %2263 = vmatpush.msra.mxu0 %v1876
    %2264 = vmatpush.msra.mxu0 %v1875
    %2265 = vmatpush.msra.mxu0 %v1874
    %2266 = vmatpush.msra.mxu0 %v1873
    %2267 = vmatpush.msra.mxu0 %v1872
    %2268 = vmatpush.msra.mxu0 %v1871
    %2269 = vmatpush.msra.mxu0 %v1870
    %2270 = vmatpush.msra.mxu0 %v1869
    %2271 = vmatpush.msra.mxu0 %v1868
    %2272 = vmatmul.f32.gmra.mxu0 %v1996
    %v2273 = vpop.f32.mrf.mxu0
    %v2274 = vadd.f32 %v2254, %v2273
    %2275 = vdwg.mxu0
    %2276 = vmatpush.msra.mxu0 %v1899
    %2277 = vmatpush.msra.mxu0 %v1898
    %2278 = vmatpush.msra.mxu0 %v1897
    %2279 = vmatpush.msra.mxu0 %v1896
    %2280 = vmatpush.msra.mxu0 %v1895
    %2281 = vmatpush.msra.mxu0 %v1894
    %2282 = vmatpush.msra.mxu0 %v1893
    %2283 = vmatpush.msra.mxu0 %v1892
    %2284 = vmatpush.msra.mxu0 %v1891
    %2285 = vmatpush.msra.mxu0 %v1890
    %2286 = vmatpush.msra.mxu0 %v1889
    %2287 = vmatpush.msra.mxu0 %v1888
    %2288 = vmatpush.msra.mxu0 %v1887
    %2289 = vmatpush.msra.mxu0 %v1886
    %2290 = vmatpush.msra.mxu0 %v1885
    %2291 = vmatpush.msra.mxu0 %v1884
    %2292 = vmatmul.f32.gmra.mxu0 %v1997
    %v2293 = vpop.f32.mrf.mxu0
    %v2294 = vadd.f32 %v2274, %v2293
    %2295 = vdwg.mxu0
    %2296 = vmatpush.msra.mxu0 %v1915
    %2297 = vmatpush.msra.mxu0 %v1914
    %2298 = vmatpush.msra.mxu0 %v1913
    %2299 = vmatpush.msra.mxu0 %v1912
    %2300 = vmatpush.msra.mxu0 %v1911
    %2301 = vmatpush.msra.mxu0 %v1910
    %2302 = vmatpush.msra.mxu0 %v1909
    %2303 = vmatpush.msra.mxu0 %v1908
    %2304 = vmatpush.msra.mxu0 %v1907
    %2305 = vmatpush.msra.mxu0 %v1906
    %2306 = vmatpush.msra.mxu0 %v1905
    %2307 = vmatpush.msra.mxu0 %v1904
    %2308 = vmatpush.msra.mxu0 %v1903
    %2309 = vmatpush.msra.mxu0 %v1902
    %2310 = vmatpush.msra.mxu0 %v1901
    %2311 = vmatpush.msra.mxu0 %v1900
    %2312 = vmatmul.f32.gmra.mxu0 %v1998
    %v2313 = vpop.f32.mrf.mxu0
    %v2314 = vadd.f32 %v2294, %v2313
    %2315 = vdwg.mxu0
    %2316 = vmatpush.msra.mxu0 %v1931
    %2317 = vmatpush.msra.mxu0 %v1930
    %2318 = vmatpush.msra.mxu0 %v1929
    %2319 = vmatpush.msra.mxu0 %v1928
    %2320 = vmatpush.msra.mxu0 %v1927
    %2321 = vmatpush.msra.mxu0 %v1926
    %2322 = vmatpush.msra.mxu0 %v1925
    %2323 = vmatpush.msra.mxu0 %v1924
    %2324 = vmatpush.msra.mxu0 %v1923
    %2325 = vmatpush.msra.mxu0 %v1922
    %2326 = vmatpush.msra.mxu0 %v1921
    %2327 = vmatpush.msra.mxu0 %v1920
    %2328 = vmatpush.msra.mxu0 %v1919
    %2329 = vmatpush.msra.mxu0 %v1918
    %2330 = vmatpush.msra.mxu0 %v1917
    %2331 = vmatpush.msra.mxu0 %v1916
    %2332 = vmatmul.f32.gmra.mxu0 %v1999
    %v2333 = vpop.f32.mrf.mxu0
    %v2334 = vadd.f32 %v2314, %v2333
    %2335 = vdwg.mxu0
    %v2336 = vmul.f32 %v2334, 0.020408163
    %v2337 = vld [vmem:[#allocation5] sm:$0x1]
    %v2339 = vperm.slane %v2337, 0
    %v2341 = vadd.f32 %v2336, %v2339
    %v2342 = vld [vmem:[#allocation3] sm:$0xff]
    %v2343 = vld [vmem:[#allocation3 + $0x8] sm:$0xff]
    %v2344 = vld [vmem:[%s3] sm:$0xff]
    %v2345 = vld [vmem:[%s3 + $0x8] sm:$0xff]
    %v2346 = vld [vmem:[%s3 + $0x10] sm:$0xff]
    %v2347 = vld [vmem:[%s3 + $0x18] sm:$0xff]
    %v2348 = vld [vmem:[%s3 + $0x20] sm:$0xff]
    %v2349 = vld [vmem:[%s3 + $0x28] sm:$0xff]
    %v2350 = vld [vmem:[%s3 + $0x30] sm:$0xff]
    %v2351 = vld [vmem:[%s3 + $0x38] sm:$0xff]
    %v2352 = vld [vmem:[%s3 + $0x40] sm:$0xff]
    %v2353 = vld [vmem:[%s3 + $0x48] sm:$0xff]
    %v2354 = vld [vmem:[%s3 + $0x50] sm:$0xff]
    %v2355 = vld [vmem:[%s3 + $0x58] sm:$0xff]
    %v2356 = vld [vmem:[%s3 + $0x60] sm:$0xff]
    %v2357 = vld [vmem:[%s3 + $0x68] sm:$0xff]
    %v2358 = vld [vmem:[%s3 + $0x70] sm:$0xff]
    %v2359 = vld [vmem:[%s3 + $0x78] sm:$0xff]
    %v2360 = vld [vmem:[%s3 + $0x80] sm:$0xff]
    %v2361 = vld [vmem:[%s3 + $0x88] sm:$0xff]
    %v2362 = vld [vmem:[%s3 + $0x90] sm:$0x3f]
    %v2363 = vld [vmem:[%s4] sm:$0xff]
    %v2364 = vld [vmem:[%s4 + $0x8] sm:$0xff]
    %v2365 = vld [vmem:[%s4 + $0x10] sm:$0xff]
    %v2366 = vld [vmem:[%s4 + $0x18] sm:$0xff]
    %v2367 = vld [vmem:[%s4 + $0x20] sm:$0xff]
    %v2368 = vld [vmem:[%s4 + $0x28] sm:$0xff]
    %v2369 = vld [vmem:[%s4 + $0x30] sm:$0x3]
    %vm2370 = vcmask 408576
    %v2372 = vsel %vm2370, %v2341, 0
    %vm2374 = vcmask 1041408
    %v2376 = vsel %vm2374, %v2369, 0
    %2378 = vmatpush.msra.mxu0 0.0
    %2379 = vmatpush.msra.mxu0 0.0
    %2380 = vmatpush.msra.mxu0 0.0
    %2381 = vmatpush.msra.mxu0 0.0
    %2382 = vmatpush.msra.mxu0 0.0
    %2383 = vmatpush.msra.mxu0 0.0
    %2384 = vmatpush.msra.mxu0 0.0
    %2385 = vmatpush.msra.mxu0 0.0
    %2386 = vmatpush.msra.mxu0 0.0
    %2387 = vmatpush.msra.mxu0 %v2376
    %2388 = vmatpush.msra.mxu0 %v2368
    %2389 = vmatpush.msra.mxu0 %v2367
    %2390 = vmatpush.msra.mxu0 %v2366
    %2391 = vmatpush.msra.mxu0 %v2365
    %2392 = vmatpush.msra.mxu0 %v2364
    %2393 = vmatpush.msra.mxu0 %v2363
    %2394 = vmatmul.f32.gmra.mxu0 %v2372
    %v2395 = vpop.f32.mrf.mxu0
    %v2396 = vadd.f32 0.0, %v2395
    %2397 = vdwg.mxu0
    %vm2398 = vcmask 179200
    %v2400 = vsel %vm2398, %v2343, 0
    %vm2402 = vcmask 1045504
    %v2404 = vsel %vm2402, %v2362, 0
    %2406 = vmatpush.msra.mxu0 %v2359
    %2407 = vmatpush.msra.mxu0 %v2358
    %2408 = vmatpush.msra.mxu0 %v2357
    %2409 = vmatpush.msra.mxu0 %v2356
    %2410 = vmatpush.msra.mxu0 %v2355
    %2411 = vmatpush.msra.mxu0 %v2354
    %2412 = vmatpush.msra.mxu0 %v2353
    %2413 = vmatpush.msra.mxu0 %v2352
    %2414 = vmatpush.msra.mxu0 %v2351
    %2415 = vmatpush.msra.mxu0 %v2350
    %2416 = vmatpush.msra.mxu0 %v2349
    %2417 = vmatpush.msra.mxu0 %v2348
    %2418 = vmatpush.msra.mxu0 %v2347
    %2419 = vmatpush.msra.mxu0 %v2346
    %2420 = vmatpush.msra.mxu0 %v2345
    %2421 = vmatpush.msra.mxu0 %v2344
    %2422 = vmatmul.f32.gmra.mxu0 %v2342
    %v2423 = vpop.f32.mrf.mxu0
    %v2424 = vadd.f32 %v2396, %v2423
    %2425 = vdwg.mxu0
    %2426 = vmatpush.msra.mxu0 0.0
    %2427 = vmatpush.msra.mxu0 0.0
    %2428 = vmatpush.msra.mxu0 0.0
    %2429 = vmatpush.msra.mxu0 0.0
    %2430 = vmatpush.msra.mxu0 0.0
    %2431 = vmatpush.msra.mxu0 0.0
    %2432 = vmatpush.msra.mxu0 0.0
    %2433 = vmatpush.msra.mxu0 0.0
    %2434 = vmatpush.msra.mxu0 0.0
    %2435 = vmatpush.msra.mxu0 0.0
    %2436 = vmatpush.msra.mxu0 0.0
    %2437 = vmatpush.msra.mxu0 0.0
    %2438 = vmatpush.msra.mxu0 0.0
    %2439 = vmatpush.msra.mxu0 %v2404
    %2440 = vmatpush.msra.mxu0 %v2361
    %2441 = vmatpush.msra.mxu0 %v2360
    %2442 = vmatmul.f32.gmra.mxu0 %v2400
    %v2443 = vpop.f32.mrf.mxu0
    %v2444 = vadd.f32 %v2424, %v2443
    %2445 = vdwg.mxu0
    %v2446 = vld [vmem:[%s5] sm:$0xff]
    %v2447 = vld [vmem:[%s5 + $0x8] sm:$0xff]
    %v2448 = vld [vmem:[%s5 + $0x10] sm:$0xff]
    %v2449 = vld [vmem:[%s5 + $0x18] sm:$0xff]
    %v2450 = vld [vmem:[%s5 + $0x20] sm:$0xff]
    %v2451 = vld [vmem:[%s5 + $0x28] sm:$0xff]
    %v2452 = vld [vmem:[%s5 + $0x30] sm:$0xff]
    %2454 = vrot.lane.b32.xlu0 %v1658, 106
    %v2455 = vpop.permute.xlu0 %2454
    %vm2456 = vcmask 457728
    %v2457 = vsel %vm2456, %v2455, 0
    %2459 = vmatpush.msra.mxu0 0.0
    %2460 = vmatpush.msra.mxu0 0.0
    %2461 = vmatpush.msra.mxu0 0.0
    %2462 = vmatpush.msra.mxu0 0.0
    %2463 = vmatpush.msra.mxu0 0.0
    %2464 = vmatpush.msra.mxu0 0.0
    %2465 = vmatpush.msra.mxu0 0.0
    %2466 = vmatpush.msra.mxu0 0.0
    %2467 = vmatpush.msra.mxu0 0.0
    %2468 = vmatpush.msra.mxu0 %v2452
    %2469 = vmatpush.msra.mxu0 %v2451
    %2470 = vmatpush.msra.mxu0 %v2450
    %2471 = vmatpush.msra.mxu0 %v2449
    %2472 = vmatpush.msra.mxu0 %v2448
    %2473 = vmatpush.msra.mxu0 %v2447
    %2474 = vmatpush.msra.mxu0 %v2446
    %2475 = vmatmul.f32.gmra.mxu0 %v2457
    %v2476 = vpop.f32.mrf.mxu0
    %v2477 = vadd.f32 0.0, %v2476
    %2478 = vdwg.mxu0
    %v2479 = vadd.f32 %v2444, %v2477
    %v2480 = vld [vmem:[#allocation7] sm:$0x1]
    %v2482 = vperm.slane %v2480, 0
    %v2484 = vadd.f32 %v2479, %v2482
    %v2485 = vmax.f32 %v2484, 0.0
    %v2486 = vld [vmem:[%s7] sm:$0xff]
    %v2487 = vld [vmem:[%s7 + $0x8] sm:$0xff]
    %v2488 = vld [vmem:[%s7 + $0x10] sm:$0xff]
    %v2489 = vld [vmem:[%s7 + $0x18] sm:$0xff]
    %v2490 = vld [vmem:[#allocation2] sm:$0x1]
    %v2492 = vperm.slane %v2490, 0
    %vm2494 = vcmask 261120
    %v2496 = vsel %vm2494, %v2485, 0
    %2498 = vmatpush.msra.mxu0 0.0
    %2499 = vmatpush.msra.mxu0 0.0
    %2500 = vmatpush.msra.mxu0 0.0
    %2501 = vmatpush.msra.mxu0 0.0
    %2502 = vmatpush.msra.mxu0 0.0
    %2503 = vmatpush.msra.mxu0 0.0
    %2504 = vmatpush.msra.mxu0 0.0
    %2505 = vmatpush.msra.mxu0 0.0
    %2506 = vmatpush.msra.mxu0 0.0
    %2507 = vmatpush.msra.mxu0 0.0
    %2508 = vmatpush.msra.mxu0 0.0
    %2509 = vmatpush.msra.mxu0 0.0
    %2510 = vmatpush.msra.mxu0 %v2489
    %2511 = vmatpush.msra.mxu0 %v2488
    %2512 = vmatpush.msra.mxu0 %v2487
    %2513 = vmatpush.msra.mxu0 %v2486
    %2514 = vmatmul.f32.gmra.mxu0 %v2496
    %v2515 = vpop.f32.mrf.mxu0
    %v2516 = vadd.f32 %v2492, %v2515
    %2517 = vdwg.mxu0
    %vm2518 = vcmask 7168
    %2519 = vst.msk [vmem:[%s9] sm:$0xff] %vm2518, %v2516
    // Predicated region
    $region50: #{tpu_custom_call.1} parent=1 // pred_check
      _
    $region51: #{tpu_custom_call.1} parent=1 // pred_check_branch
      %2521 = sbr.rel (0) target = $region53
    $region52: #{tpu_custom_call.1} parent=1 // pred_region
      _
    $region53: #{tpu_custom_call.1} parent=1 // pred_fallthru
      _
    // Predicated region
    $region54: #{tpu_custom_call.1} parent=1 // pred_check
      _
    $region55: #{tpu_custom_call.1} parent=1 // pred_check_branch
      %2523 = sbr.rel (0) target = $region57
    $region56: #{tpu_custom_call.1} parent=1 // pred_region
      _
    $region57: #{tpu_custom_call.1} parent=1 // pred_fallthru
      _
    %2524 = vsyncpa [#allocation4], 1
    %2525 = vsyncpa [#allocation6], 1

</llo_original>
